<compile_context>
chip_gen: v7x
topology: tpu7x:2x2x1
jax: 0.10.0
libtpu: 0.0.40
codegen_flags: <defaults>
</compile_context>

<pallas_src>
import functools

import jax
import jax.numpy as jnp
from jax.experimental import pallas as pl
from jax.experimental.pallas import tpu as pltpu


def fused_kernel(x_ref, a1_ref, b1_ref, w1_ref, a2_ref, b2_ref, w2_ref,
                 out_ref, p_ref, cat_ref, *, H, Hp, W, C, M, LEAD):
    # x_ref  : (1, M, W*C)   f32   lane-dense input (M = D*Hp rows, h-pads = 0)
    # a*/b*  : (1, W*C)      f32   PReLU slope / conv bias, tiled over W
    # w*_ref : (9*W*C, W*C)  bf16  banded conv weights, 9 (kd,kh) taps along K
    # out_ref: (1, M, W*C)   f32   padded output slab (h-pad rows sliced outside)
    # p_ref  : (NR, W*C)     f32   zero-padded activation scratch
    # cat_ref: (M, 9*W*C)    bf16  lane-concatenated conv LHS staging
    WC = W * C
    NR = p_ref.shape[0]
    BASE = LEAD + Hp                      # first interior row of the padded scratch

    # Zero only the boundary pad regions (lead + d=-1 slab, d=D slab + tail);
    # the interior [BASE, BASE+M) is fully overwritten below on every pass.
    p_ref[0:BASE, :] = jnp.zeros((BASE, WC), jnp.float32)
    p_ref[BASE + M:NR, :] = jnp.zeros((NR - BASE - M, WC), jnp.float32)

    def conv_pass(w_ref):
        # Gather the 9 (kd, kh) tap windows into one lane-concatenated bf16
        # LHS and do a single K = 9*W*C matmul, so the tap accumulation stays
        # inside the MXU (no per-tap VALU / VMEM read-modify-write passes).
        for t in range(9):
            kd, kh = divmod(t, 3)
            start = LEAD + kd * Hp + kh - 1           # static row shift
            cat_ref[:, t * WC:(t + 1) * WC] = (
                p_ref[start:start + M, :].astype(jnp.bfloat16))
        return jnp.dot(cat_ref[...], w_ref[...],
                       preferred_element_type=jnp.float32)

    # Row mask: 1 on real h rows, 0 on the h-padding rows inside each d slab.
    hp_idx = jax.lax.broadcasted_iota(jnp.int32, (M, 1), 0) % Hp
    row_mask = hp_idx < H

    # ---------------- ResBlock 1:  mid = x + conv1(PReLU(x)) ----------------
    x = x_ref[0]                                      # (M, WC) f32, h-pad rows = 0
    y1 = jnp.where(x >= 0, x, a1_ref[...] * x)        # PReLU (pad rows stay 0)
    p_ref[BASE:BASE + M, :] = y1                      # one full, aligned store

    mid = x + conv_pass(w1_ref) + b1_ref[...]         # junk on pad rows (sliced off)
    out_ref[0] = mid                                  # stage mid in the output block

    # ------ ResBlock 2 (the D<->W permute is folded into w2's weights) ------
    y2 = jnp.where(mid >= 0, mid, a2_ref[...] * mid)  # PReLU
    y2 = jnp.where(row_mask, y2, 0.0)                 # keep h-pad rows exactly zero
    p_ref[BASE:BASE + M, :] = y2

    out_ref[0] = out_ref[0] + conv_pass(w2_ref) + b2_ref[...]


def _band_weights(w_taps, W):
    """(3,3,3,Cin,Cout) taps -> (9*W*Cin, W*Cout) bf16 banded weight matrix.

    Row block t = kd*3 + kh; inside it
      band[wi*Cin+ci, wo*Cout+co] = w_taps[kd, kh, wi-wo+1, ci, co] for |wi-wo|<=1
    i.e. the kw taps and the 'same' zero-padding along W are folded into the
    matmul weights, matching the lane-concatenated (kd, kh) windows of the LHS.
    """
    Cin, Cout = w_taps.shape[3], w_taps.shape[4]
    blocks = []
    for kd in range(3):
        for kh in range(3):
            blk = jnp.zeros((W, Cin, W, Cout), w_taps.dtype)
            for kw in range(3):
                shift = jnp.eye(W, W, k=1 - kw, dtype=w_taps.dtype)
                blk = blk + jnp.einsum("ab,ij->aibj", shift, w_taps[kd, kh, kw])
            blocks.append(blk.reshape(W * Cin, W * Cout))
    return jnp.concatenate(blocks, axis=0).astype(jnp.bfloat16)


def ve_conv_h_pallas(x_ncdhw, params):
    """Forward of VE_conv_H.  x_ncdhw: (N, C, D, H, W) like the torch module."""
    a1, w1, b1, a2, w2, b2 = params
    N, C, D, H, W = x_ncdhw.shape
    WC = W * C

    LEAD = 8                                   # lead zeros so all tap shifts are >= 0
    Hp = pl.cdiv(H + 2, 8) * 8                 # h-padded slab height, sublane aligned
    M = D * Hp                                 # matmul rows / padded output rows
    NR = pl.cdiv(M + LEAD + 2 * Hp + 2, 8) * 8  # padded activation scratch rows

    # NCDHW -> channels-last; zero-pad H -> Hp (fused by XLA into the same
    # relayout copy); fold (W, C) into one lane-dense axis of width W*C.
    xt = jnp.transpose(x_ncdhw, (0, 2, 3, 4, 1))             # (N, D, H, W, C)
    xt = jnp.pad(xt, ((0, 0), (0, 0), (0, Hp - H), (0, 0), (0, 0)))
    x_slab = xt.reshape(N, M, WC)
    # TODO(synk): keep activations in this padded channels-last layout across
    # the surrounding network so these boundary transposes disappear.

    # torch weight (Cout, Cin, kd, kh, kw) -> tap layout (kd, kh, kw, Cin, Cout).
    w1_taps = jnp.transpose(w1, (2, 3, 4, 1, 0))
    # permute(0,1,4,3,2) before/after the second ResBlock == running it
    # un-permuted with the conv kernel's kd and kw axes swapped.
    w2_taps = jnp.transpose(w2, (4, 3, 2, 1, 0))
    band1 = _band_weights(w1_taps, W)                        # (9*WC, WC) bf16
    band2 = _band_weights(w2_taps, W)

    a1_row = jnp.tile(a1, W).reshape(1, WC).astype(jnp.float32)
    b1_row = jnp.tile(b1, W).reshape(1, WC).astype(jnp.float32)
    a2_row = jnp.tile(a2, W).reshape(1, WC).astype(jnp.float32)
    b2_row = jnp.tile(b2, W).reshape(1, WC).astype(jnp.float32)

    kern = functools.partial(fused_kernel, H=H, Hp=Hp, W=W, C=C, M=M, LEAD=LEAD)

    out_slab = pl.pallas_call(
        kern,
        out_shape=jax.ShapeDtypeStruct((N, M, WC), x_slab.dtype),
        grid=(N,),
        in_specs=[
            pl.BlockSpec((1, M, WC), lambda n: (n, 0, 0)),
            pl.BlockSpec((1, WC), lambda n: (0, 0)),
            pl.BlockSpec((1, WC), lambda n: (0, 0)),
            pl.BlockSpec((9 * WC, WC), lambda n: (0, 0)),
            pl.BlockSpec((1, WC), lambda n: (0, 0)),
            pl.BlockSpec((1, WC), lambda n: (0, 0)),
            pl.BlockSpec((9 * WC, WC), lambda n: (0, 0)),
        ],
        out_specs=pl.BlockSpec((1, M, WC), lambda n: (n, 0, 0)),
        scratch_shapes=[
            pltpu.VMEM((NR, WC), jnp.float32),        # zero-padded activations
            pltpu.VMEM((M, 9 * WC), jnp.bfloat16),    # lane-concatenated conv LHS
        ],
        compiler_params=pltpu.CompilerParams(
            dimension_semantics=("parallel",),        # N=2 -> both v7x TCs busy
            vmem_limit_bytes=32 * 1024 * 1024),
    )(x_slab, a1_row, b1_row, band1, a2_row, b2_row, band2)

    # Drop the h-padding rows and go back to NCDHW (fused into one XLA copy).
    out = out_slab.reshape(N, D, Hp, W, C)[:, :, :H]
    return jnp.transpose(out, (0, 4, 1, 2, 3))


# ---------------- pure-JAX references (verification only) ----------------
def _prelu_ref(x, a):
    return jnp.where(x >= 0, x, a.reshape(1, -1, 1, 1, 1) * x)


def _conv3d_ref(x, w, b, mm_dtype):
    out = jax.lax.conv_general_dilated(
        x.astype(mm_dtype), w.astype(mm_dtype),
        window_strides=(1, 1, 1),
        padding=((1, 1), (1, 1), (1, 1)),
        dimension_numbers=("NCDHW", "OIDHW", "NCDHW"),
        preferred_element_type=jnp.float32)
    return out + b.reshape(1, -1, 1, 1, 1)


def ve_conv_h_ref(x, params, mm_dtype=jnp.float32):
    a1, w1, b1, a2, w2, b2 = params
    mid = _conv3d_ref(_prelu_ref(x, a1), w1, b1, mm_dtype) + x
    mid = jnp.transpose(mid, (0, 1, 4, 3, 2))
    mid = _conv3d_ref(_prelu_ref(mid, a2), w2, b2, mm_dtype) + mid
    return jnp.transpose(mid, (0, 1, 4, 3, 2))


if __name__ == "__main__":
    n_feat = 32
    N, C, D, H, W = 2, n_feat, 4, 6, 8

    key = jax.random.PRNGKey(0)
    ks = jax.random.split(key, 6)
    x = jax.random.normal(ks[0], (N, C, D, H, W), jnp.float32)

    # Deterministic parameters (PReLU slopes, Conv3d weights/biases).
    a1 = jnp.full((n_feat,), 0.25, jnp.float32)          # torch PReLU default
    w1 = 0.05 * jax.random.normal(ks[1], (n_feat, n_feat, 3, 3, 3), jnp.float32)
    b1 = 0.01 * jax.random.normal(ks[2], (n_feat,), jnp.float32)
    a2 = 0.25 + 0.01 * jax.random.normal(ks[3], (n_feat,), jnp.float32)
    w2 = 0.05 * jax.random.normal(ks[4], (n_feat, n_feat, 3, 3, 3), jnp.float32)
    b2 = 0.01 * jax.random.normal(ks[5], (n_feat,), jnp.float32)
    params = (a1, w1, b1, a2, w2, b2)

    out = jax.block_until_ready(jax.jit(ve_conv_h_pallas)(x, params))
    assert out.shape == (N, C, D, H, W)

    ref32 = jax.block_until_ready(ve_conv_h_ref(x, params, jnp.float32))
    ref16 = jax.block_until_ready(ve_conv_h_ref(x, params, jnp.bfloat16))
    # vs f32 reference: error bounded by bf16 MXU operand rounding.
    assert jnp.allclose(out, ref32, atol=5e-2, rtol=5e-2), \
        float(jnp.max(jnp.abs(out - ref32)))
    # vs matched-precision reference (bf16 matmul operands, f32 accumulation).
    assert jnp.allclose(out, ref16, atol=1e-2, rtol=1e-2), \
        float(jnp.max(jnp.abs(out - ref16)))

    print("KERNEL_OK")
</pallas_src>

<mosaic_0001>
module attributes {stable_mosaic.version = 11 : i64} {
  func.func @fused_kernel(%arg0: i32, %arg1: memref<1x32x256xf32, #tpu.memory_space<vmem>>, %arg2: memref<1x256xf32, #tpu.memory_space<vmem>>, %arg3: memref<1x256xf32, #tpu.memory_space<vmem>>, %arg4: memref<2304x256xbf16, #tpu.memory_space<vmem>>, %arg5: memref<1x256xf32, #tpu.memory_space<vmem>>, %arg6: memref<1x256xf32, #tpu.memory_space<vmem>>, %arg7: memref<2304x256xbf16, #tpu.memory_space<vmem>>, %arg8: memref<1x32x256xf32, #tpu.memory_space<vmem>>, %arg9: memref<64x256xf32, #tpu.memory_space<vmem>>, %arg10: memref<32x2304xbf16, #tpu.memory_space<vmem>>) attributes {dimension_semantics = [#tpu.dimension_semantics<parallel>], iteration_bounds = array<i64: 2>, scalar_prefetch = 0 : i64, scratch_operands = 2 : i64, tpu.core_type = #tpu.core_type<tc>, window_params = [{transform_indices = @transform_0, window_bounds = array<i64: 1, 32, 256>}, {pipeline_mode = #tpu.pipeline_mode<synchronous>, transform_indices = @transform_1, window_bounds = array<i64: 1, 256>}, {pipeline_mode = #tpu.pipeline_mode<synchronous>, transform_indices = @transform_2, window_bounds = array<i64: 1, 256>}, {pipeline_mode = #tpu.pipeline_mode<synchronous>, transform_indices = @transform_3, window_bounds = array<i64: 2304, 256>}, {pipeline_mode = #tpu.pipeline_mode<synchronous>, transform_indices = @transform_4, window_bounds = array<i64: 1, 256>}, {pipeline_mode = #tpu.pipeline_mode<synchronous>, transform_indices = @transform_5, window_bounds = array<i64: 1, 256>}, {pipeline_mode = #tpu.pipeline_mode<synchronous>, transform_indices = @transform_6, window_bounds = array<i64: 2304, 256>}, {transform_indices = @transform_7, window_bounds = array<i64: 1, 32, 256>}]} {
    %cst = arith.constant 0.000000e+00 : f32
    %0 = vector.broadcast %cst : f32 to vector<16x256xf32>
    %c0 = arith.constant 0 : index
    %c0_0 = arith.constant 0 : index
    %1 = vector.load %arg9[%c0, %c0_0] : memref<64x256xf32, #tpu.memory_space<vmem>>, vector<16x256xf32>
    tpu.vector_store %arg9[%c0, %c0_0], %0 {strides = array<i32>} : memref<64x256xf32, #tpu.memory_space<vmem>>, vector<16x256xf32>,
    %cst_1 = arith.constant 0.000000e+00 : f32
    %2 = vector.broadcast %cst_1 : f32 to vector<16x256xf32>
    %c48 = arith.constant 48 : index
    %c0_2 = arith.constant 0 : index
    %3 = vector.load %arg9[%c48, %c0_2] : memref<64x256xf32, #tpu.memory_space<vmem>>, vector<16x256xf32>
    tpu.vector_store %arg9[%c48, %c0_2], %2 {strides = array<i32>} : memref<64x256xf32, #tpu.memory_space<vmem>>, vector<16x256xf32>,
    %4 = tpu.iota {dimensions = array<i32: 0>} : vector<32x1xi32>
    %c8_i32 = arith.constant 8 : i32
    %c0_i32 = arith.constant 0 : i32
    %5 = arith.cmpi eq, %c8_i32, %c0_i32 : i32
    %c1_i32 = arith.constant 1 : i32
    %6 = arith.select %5, %c1_i32, %c8_i32 : i32
    %7 = vector.broadcast %6 : i32 to vector<32x1xi32>
    %8 = arith.remsi %4, %7 : vector<32x1xi32>
    %c0_i32_3 = arith.constant 0 : i32
    %9 = vector.broadcast %c0_i32_3 : i32 to vector<32x1xi32>
    %10 = arith.cmpi ne, %8, %9 : vector<32x1xi32>
    %c0_i32_4 = arith.constant 0 : i32
    %11 = vector.broadcast %c0_i32_4 : i32 to vector<32x1xi32>
    %12 = arith.cmpi slt, %8, %11 : vector<32x1xi32>
    %c0_i32_5 = arith.constant 0 : i32
    %13 = arith.cmpi slt, %6, %c0_i32_5 : i32
    %14 = vector.broadcast %13 : i1 to vector<32x1xi1>
    %15 = vector.broadcast %14 : vector<32x1xi1> to vector<32x1xi1>
    %16 = arith.xori %12, %15 : vector<32x1xi1>
    %17 = arith.andi %16, %10 : vector<32x1xi1>
    %18 = vector.broadcast %6 : i32 to vector<32x1xi32>
    %19 = arith.addi %8, %18 : vector<32x1xi32>
    %20 = arith.select %17, %19, %8 : vector<32x1xi1>, vector<32x1xi32>
    %c6_i32 = arith.constant 6 : i32
    %21 = vector.broadcast %c6_i32 : i32 to vector<32x1xi32>
    %22 = arith.cmpi slt, %20, %21 : vector<32x1xi32>
    %c0_6 = arith.constant 0 : index
    %c0_7 = arith.constant 0 : index
    %c0_8 = arith.constant 0 : index
    %23 = vector.load %arg1[%c0_6, %c0_7, %c0_8] : memref<1x32x256xf32, #tpu.memory_space<vmem>>, vector<1x32x256xf32>
    %24 = vector.shape_cast %23 : vector<1x32x256xf32> to vector<32x256xf32>
    %cst_9 = arith.constant 0.000000e+00 : f32
    %25 = vector.broadcast %cst_9 : f32 to vector<32x256xf32>
    %26 = arith.cmpf oge, %24, %25 : vector<32x256xf32>
    %c0_10 = arith.constant 0 : index
    %c0_11 = arith.constant 0 : index
    %27 = vector.load %arg2[%c0_10, %c0_11] : memref<1x256xf32, #tpu.memory_space<vmem>>, vector<1x256xf32>
    %28 = vector.broadcast %27 : vector<1x256xf32> to vector<32x256xf32>
    %29 = arith.mulf %28, %24 : vector<32x256xf32>
    %30 = arith.select %26, %24, %29 : vector<32x256xi1>, vector<32x256xf32>
    %c16 = arith.constant 16 : index
    %c0_12 = arith.constant 0 : index
    %31 = vector.load %arg9[%c16, %c0_12] : memref<64x256xf32, #tpu.memory_space<vmem>>, vector<32x256xf32>
    tpu.vector_store %arg9[%c16, %c0_12], %30 {strides = array<i32>} : memref<64x256xf32, #tpu.memory_space<vmem>>, vector<32x256xf32>,
    %c7 = arith.constant 7 : index
    %c0_13 = arith.constant 0 : index
    %32 = vector.load %arg9[%c7, %c0_13] : memref<64x256xf32, #tpu.memory_space<vmem>>, vector<32x256xf32>
    %33 = arith.truncf %32 : vector<32x256xf32> to vector<32x256xbf16>
    %c0_14 = arith.constant 0 : index
    %c0_15 = arith.constant 0 : index
    %34 = vector.load %arg10[%c0_14, %c0_15] : memref<32x2304xbf16, #tpu.memory_space<vmem>>, vector<32x256xbf16>
    tpu.vector_store %arg10[%c0_14, %c0_15], %33 {strides = array<i32>} : memref<32x2304xbf16, #tpu.memory_space<vmem>>, vector<32x256xbf16>,
    %c8 = arith.constant 8 : index
    %c0_16 = arith.constant 0 : index
    %35 = vector.load %arg9[%c8, %c0_16] : memref<64x256xf32, #tpu.memory_space<vmem>>, vector<32x256xf32>
    %36 = arith.truncf %35 : vector<32x256xf32> to vector<32x256xbf16>
    %c0_17 = arith.constant 0 : index
    %c256 = arith.constant 256 : index
    %37 = vector.load %arg10[%c0_17, %c256] : memref<32x2304xbf16, #tpu.memory_space<vmem>>, vector<32x256xbf16>
    tpu.vector_store %arg10[%c0_17, %c256], %36 {strides = array<i32>} : memref<32x2304xbf16, #tpu.memory_space<vmem>>, vector<32x256xbf16>,
    %c9 = arith.constant 9 : index
    %c0_18 = arith.constant 0 : index
    %38 = vector.load %arg9[%c9, %c0_18] : memref<64x256xf32, #tpu.memory_space<vmem>>, vector<32x256xf32>
    %39 = arith.truncf %38 : vector<32x256xf32> to vector<32x256xbf16>
    %c0_19 = arith.constant 0 : index
    %c512 = arith.constant 512 : index
    %40 = vector.load %arg10[%c0_19, %c512] : memref<32x2304xbf16, #tpu.memory_space<vmem>>, vector<32x256xbf16>
    tpu.vector_store %arg10[%c0_19, %c512], %39 {strides = array<i32>} : memref<32x2304xbf16, #tpu.memory_space<vmem>>, vector<32x256xbf16>,
    %c15 = arith.constant 15 : index
    %c0_20 = arith.constant 0 : index
    %41 = vector.load %arg9[%c15, %c0_20] : memref<64x256xf32, #tpu.memory_space<vmem>>, vector<32x256xf32>
    %42 = arith.truncf %41 : vector<32x256xf32> to vector<32x256xbf16>
    %c0_21 = arith.constant 0 : index
    %c768 = arith.constant 768 : index
    %43 = vector.load %arg10[%c0_21, %c768] : memref<32x2304xbf16, #tpu.memory_space<vmem>>, vector<32x256xbf16>
    tpu.vector_store %arg10[%c0_21, %c768], %42 {strides = array<i32>} : memref<32x2304xbf16, #tpu.memory_space<vmem>>, vector<32x256xbf16>,
    %c16_22 = arith.constant 16 : index
    %c0_23 = arith.constant 0 : index
    %44 = vector.load %arg9[%c16_22, %c0_23] : memref<64x256xf32, #tpu.memory_space<vmem>>, vector<32x256xf32>
    %45 = arith.truncf %44 : vector<32x256xf32> to vector<32x256xbf16>
    %c0_24 = arith.constant 0 : index
    %c1024 = arith.constant 1024 : index
    %46 = vector.load %arg10[%c0_24, %c1024] : memref<32x2304xbf16, #tpu.memory_space<vmem>>, vector<32x256xbf16>
    tpu.vector_store %arg10[%c0_24, %c1024], %45 {strides = array<i32>} : memref<32x2304xbf16, #tpu.memory_space<vmem>>, vector<32x256xbf16>,
    %c17 = arith.constant 17 : index
    %c0_25 = arith.constant 0 : index
    %47 = vector.load %arg9[%c17, %c0_25] : memref<64x256xf32, #tpu.memory_space<vmem>>, vector<32x256xf32>
    %48 = arith.truncf %47 : vector<32x256xf32> to vector<32x256xbf16>
    %c0_26 = arith.constant 0 : index
    %c1280 = arith.constant 1280 : index
    %49 = vector.load %arg10[%c0_26, %c1280] : memref<32x2304xbf16, #tpu.memory_space<vmem>>, vector<32x256xbf16>
    tpu.vector_store %arg10[%c0_26, %c1280], %48 {strides = array<i32>} : memref<32x2304xbf16, #tpu.memory_space<vmem>>, vector<32x256xbf16>,
    %c23 = arith.constant 23 : index
    %c0_27 = arith.constant 0 : index
    %50 = vector.load %arg9[%c23, %c0_27] : memref<64x256xf32, #tpu.memory_space<vmem>>, vector<32x256xf32>
    %51 = arith.truncf %50 : vector<32x256xf32> to vector<32x256xbf16>
    %c0_28 = arith.constant 0 : index
    %c1536 = arith.constant 1536 : index
    %52 = vector.load %arg10[%c0_28, %c1536] : memref<32x2304xbf16, #tpu.memory_space<vmem>>, vector<32x256xbf16>
    tpu.vector_store %arg10[%c0_28, %c1536], %51 {strides = array<i32>} : memref<32x2304xbf16, #tpu.memory_space<vmem>>, vector<32x256xbf16>,
    %c24 = arith.constant 24 : index
    %c0_29 = arith.constant 0 : index
    %53 = vector.load %arg9[%c24, %c0_29] : memref<64x256xf32, #tpu.memory_space<vmem>>, vector<32x256xf32>
    %54 = arith.truncf %53 : vector<32x256xf32> to vector<32x256xbf16>
    %c0_30 = arith.constant 0 : index
    %c1792 = arith.constant 1792 : index
    %55 = vector.load %arg10[%c0_30, %c1792] : memref<32x2304xbf16, #tpu.memory_space<vmem>>, vector<32x256xbf16>
    tpu.vector_store %arg10[%c0_30, %c1792], %54 {strides = array<i32>} : memref<32x2304xbf16, #tpu.memory_space<vmem>>, vector<32x256xbf16>,
    %c25 = arith.constant 25 : index
    %c0_31 = arith.constant 0 : index
    %56 = vector.load %arg9[%c25, %c0_31] : memref<64x256xf32, #tpu.memory_space<vmem>>, vector<32x256xf32>
    %57 = arith.truncf %56 : vector<32x256xf32> to vector<32x256xbf16>
    %c0_32 = arith.constant 0 : index
    %c2048 = arith.constant 2048 : index
    %58 = vector.load %arg10[%c0_32, %c2048] : memref<32x2304xbf16, #tpu.memory_space<vmem>>, vector<32x256xbf16>
    tpu.vector_store %arg10[%c0_32, %c2048], %57 {strides = array<i32>} : memref<32x2304xbf16, #tpu.memory_space<vmem>>, vector<32x256xbf16>,
    %c0_33 = arith.constant 0 : index
    %c0_34 = arith.constant 0 : index
    %59 = vector.load %arg10[%c0_33, %c0_34] : memref<32x2304xbf16, #tpu.memory_space<vmem>>, vector<32x2304xbf16>
    %c0_35 = arith.constant 0 : index
    %c0_36 = arith.constant 0 : index
    %60 = vector.load %arg4[%c0_35, %c0_36] : memref<2304x256xbf16, #tpu.memory_space<vmem>>, vector<2304x256xbf16>
    %cst_37 = arith.constant dense<0.000000e+00> : vector<32x256xf32>
    %61 = tpu.matmul %59, %60, %cst_37 {dimension_numbers = #tpu.dot_dimension_numbers<[1], [0], [0], [1], [0, 0, 1, 1], [], []>} : vector<32x2304xbf16>, vector<2304x256xbf16>, vector<32x256xf32> -> vector<32x256xf32>
    %62 = arith.addf %24, %61 : vector<32x256xf32>
    %c0_38 = arith.constant 0 : index
    %c0_39 = arith.constant 0 : index
    %63 = vector.load %arg3[%c0_38, %c0_39] : memref<1x256xf32, #tpu.memory_space<vmem>>, vector<1x256xf32>
    %64 = vector.broadcast %63 : vector<1x256xf32> to vector<32x256xf32>
    %65 = arith.addf %62, %64 : vector<32x256xf32>
    %c0_40 = arith.constant 0 : index
    %c0_41 = arith.constant 0 : index
    %c0_42 = arith.constant 0 : index
    %66 = vector.load %arg8[%c0_40, %c0_41, %c0_42] : memref<1x32x256xf32, #tpu.memory_space<vmem>>, vector<1x32x256xf32>
    %67 = vector.shape_cast %66 : vector<1x32x256xf32> to vector<32x256xf32>
    %68 = vector.shape_cast %65 : vector<32x256xf32> to vector<1x32x256xf32>
    tpu.vector_store %arg8[%c0_40, %c0_41, %c0_42], %68 {strides = array<i32>} : memref<1x32x256xf32, #tpu.memory_space<vmem>>, vector<1x32x256xf32>,
    %cst_43 = arith.constant 0.000000e+00 : f32
    %69 = vector.broadcast %cst_43 : f32 to vector<32x256xf32>
    %70 = arith.cmpf oge, %65, %69 : vector<32x256xf32>
    %c0_44 = arith.constant 0 : index
    %c0_45 = arith.constant 0 : index
    %71 = vector.load %arg5[%c0_44, %c0_45] : memref<1x256xf32, #tpu.memory_space<vmem>>, vector<1x256xf32>
    %72 = vector.broadcast %71 : vector<1x256xf32> to vector<32x256xf32>
    %73 = arith.mulf %72, %65 : vector<32x256xf32>
    %74 = arith.select %70, %65, %73 : vector<32x256xi1>, vector<32x256xf32>
    %cst_46 = arith.constant 0.000000e+00 : f32
    %75 = vector.shape_cast %22 : vector<32x1xi1> to vector<32x1xi1>
    %76 = vector.broadcast %75 : vector<32x1xi1> to vector<32x256xi1>
    %77 = vector.broadcast %cst_46 : f32 to vector<32x256xf32>
    %78 = arith.select %76, %74, %77 : vector<32x256xi1>, vector<32x256xf32>
    %c16_47 = arith.constant 16 : index
    %c0_48 = arith.constant 0 : index
    %79 = vector.load %arg9[%c16_47, %c0_48] : memref<64x256xf32, #tpu.memory_space<vmem>>, vector<32x256xf32>
    tpu.vector_store %arg9[%c16_47, %c0_48], %78 {strides = array<i32>} : memref<64x256xf32, #tpu.memory_space<vmem>>, vector<32x256xf32>,
    %c0_49 = arith.constant 0 : index
    %c0_50 = arith.constant 0 : index
    %c0_51 = arith.constant 0 : index
    %80 = vector.load %arg8[%c0_49, %c0_50, %c0_51] : memref<1x32x256xf32, #tpu.memory_space<vmem>>, vector<1x32x256xf32>
    %81 = vector.shape_cast %80 : vector<1x32x256xf32> to vector<32x256xf32>
    %c7_52 = arith.constant 7 : index
    %c0_53 = arith.constant 0 : index
    %82 = vector.load %arg9[%c7_52, %c0_53] : memref<64x256xf32, #tpu.memory_space<vmem>>, vector<32x256xf32>
    %83 = arith.truncf %82 : vector<32x256xf32> to vector<32x256xbf16>
    %c0_54 = arith.constant 0 : index
    %c0_55 = arith.constant 0 : index
    %84 = vector.load %arg10[%c0_54, %c0_55] : memref<32x2304xbf16, #tpu.memory_space<vmem>>, vector<32x256xbf16>
    tpu.vector_store %arg10[%c0_54, %c0_55], %83 {strides = array<i32>} : memref<32x2304xbf16, #tpu.memory_space<vmem>>, vector<32x256xbf16>,
    %c8_56 = arith.constant 8 : index
    %c0_57 = arith.constant 0 : index
    %85 = vector.load %arg9[%c8_56, %c0_57] : memref<64x256xf32, #tpu.memory_space<vmem>>, vector<32x256xf32>
    %86 = arith.truncf %85 : vector<32x256xf32> to vector<32x256xbf16>
    %c0_58 = arith.constant 0 : index
    %c256_59 = arith.constant 256 : index
    %87 = vector.load %arg10[%c0_58, %c256_59] : memref<32x2304xbf16, #tpu.memory_space<vmem>>, vector<32x256xbf16>
    tpu.vector_store %arg10[%c0_58, %c256_59], %86 {strides = array<i32>} : memref<32x2304xbf16, #tpu.memory_space<vmem>>, vector<32x256xbf16>,
    %c9_60 = arith.constant 9 : index
    %c0_61 = arith.constant 0 : index
    %88 = vector.load %arg9[%c9_60, %c0_61] : memref<64x256xf32, #tpu.memory_space<vmem>>, vector<32x256xf32>
    %89 = arith.truncf %88 : vector<32x256xf32> to vector<32x256xbf16>
    %c0_62 = arith.constant 0 : index
    %c512_63 = arith.constant 512 : index
    %90 = vector.load %arg10[%c0_62, %c512_63] : memref<32x2304xbf16, #tpu.memory_space<vmem>>, vector<32x256xbf16>
    tpu.vector_store %arg10[%c0_62, %c512_63], %89 {strides = array<i32>} : memref<32x2304xbf16, #tpu.memory_space<vmem>>, vector<32x256xbf16>,
    %c15_64 = arith.constant 15 : index
    %c0_65 = arith.constant 0 : index
    %91 = vector.load %arg9[%c15_64, %c0_65] : memref<64x256xf32, #tpu.memory_space<vmem>>, vector<32x256xf32>
    %92 = arith.truncf %91 : vector<32x256xf32> to vector<32x256xbf16>
    %c0_66 = arith.constant 0 : index
    %c768_67 = arith.constant 768 : index
    %93 = vector.load %arg10[%c0_66, %c768_67] : memref<32x2304xbf16, #tpu.memory_space<vmem>>, vector<32x256xbf16>
    tpu.vector_store %arg10[%c0_66, %c768_67], %92 {strides = array<i32>} : memref<32x2304xbf16, #tpu.memory_space<vmem>>, vector<32x256xbf16>,
    %c16_68 = arith.constant 16 : index
    %c0_69 = arith.constant 0 : index
    %94 = vector.load %arg9[%c16_68, %c0_69] : memref<64x256xf32, #tpu.memory_space<vmem>>, vector<32x256xf32>
    %95 = arith.truncf %94 : vector<32x256xf32> to vector<32x256xbf16>
    %c0_70 = arith.constant 0 : index
    %c1024_71 = arith.constant 1024 : index
    %96 = vector.load %arg10[%c0_70, %c1024_71] : memref<32x2304xbf16, #tpu.memory_space<vmem>>, vector<32x256xbf16>
    tpu.vector_store %arg10[%c0_70, %c1024_71], %95 {strides = array<i32>} : memref<32x2304xbf16, #tpu.memory_space<vmem>>, vector<32x256xbf16>,
    %c17_72 = arith.constant 17 : index
    %c0_73 = arith.constant 0 : index
    %97 = vector.load %arg9[%c17_72, %c0_73] : memref<64x256xf32, #tpu.memory_space<vmem>>, vector<32x256xf32>
    %98 = arith.truncf %97 : vector<32x256xf32> to vector<32x256xbf16>
    %c0_74 = arith.constant 0 : index
    %c1280_75 = arith.constant 1280 : index
    %99 = vector.load %arg10[%c0_74, %c1280_75] : memref<32x2304xbf16, #tpu.memory_space<vmem>>, vector<32x256xbf16>
    tpu.vector_store %arg10[%c0_74, %c1280_75], %98 {strides = array<i32>} : memref<32x2304xbf16, #tpu.memory_space<vmem>>, vector<32x256xbf16>,
    %c23_76 = arith.constant 23 : index
    %c0_77 = arith.constant 0 : index
    %100 = vector.load %arg9[%c23_76, %c0_77] : memref<64x256xf32, #tpu.memory_space<vmem>>, vector<32x256xf32>
    %101 = arith.truncf %100 : vector<32x256xf32> to vector<32x256xbf16>
    %c0_78 = arith.constant 0 : index
    %c1536_79 = arith.constant 1536 : index
    %102 = vector.load %arg10[%c0_78, %c1536_79] : memref<32x2304xbf16, #tpu.memory_space<vmem>>, vector<32x256xbf16>
    tpu.vector_store %arg10[%c0_78, %c1536_79], %101 {strides = array<i32>} : memref<32x2304xbf16, #tpu.memory_space<vmem>>, vector<32x256xbf16>,
    %c24_80 = arith.constant 24 : index
    %c0_81 = arith.constant 0 : index
    %103 = vector.load %arg9[%c24_80, %c0_81] : memref<64x256xf32, #tpu.memory_space<vmem>>, vector<32x256xf32>
    %104 = arith.truncf %103 : vector<32x256xf32> to vector<32x256xbf16>
    %c0_82 = arith.constant 0 : index
    %c1792_83 = arith.constant 1792 : index
    %105 = vector.load %arg10[%c0_82, %c1792_83] : memref<32x2304xbf16, #tpu.memory_space<vmem>>, vector<32x256xbf16>
    tpu.vector_store %arg10[%c0_82, %c1792_83], %104 {strides = array<i32>} : memref<32x2304xbf16, #tpu.memory_space<vmem>>, vector<32x256xbf16>,
    %c25_84 = arith.constant 25 : index
    %c0_85 = arith.constant 0 : index
    %106 = vector.load %arg9[%c25_84, %c0_85] : memref<64x256xf32, #tpu.memory_space<vmem>>, vector<32x256xf32>
    %107 = arith.truncf %106 : vector<32x256xf32> to vector<32x256xbf16>
    %c0_86 = arith.constant 0 : index
    %c2048_87 = arith.constant 2048 : index
    %108 = vector.load %arg10[%c0_86, %c2048_87] : memref<32x2304xbf16, #tpu.memory_space<vmem>>, vector<32x256xbf16>
    tpu.vector_store %arg10[%c0_86, %c2048_87], %107 {strides = array<i32>} : memref<32x2304xbf16, #tpu.memory_space<vmem>>, vector<32x256xbf16>,
    %c0_88 = arith.constant 0 : index
    %c0_89 = arith.constant 0 : index
    %109 = vector.load %arg10[%c0_88, %c0_89] : memref<32x2304xbf16, #tpu.memory_space<vmem>>, vector<32x2304xbf16>
    %c0_90 = arith.constant 0 : index
    %c0_91 = arith.constant 0 : index
    %110 = vector.load %arg7[%c0_90, %c0_91] : memref<2304x256xbf16, #tpu.memory_space<vmem>>, vector<2304x256xbf16>
    %cst_92 = arith.constant dense<0.000000e+00> : vector<32x256xf32>
    %111 = tpu.matmul %109, %110, %cst_92 {dimension_numbers = #tpu.dot_dimension_numbers<[1], [0], [0], [1], [0, 0, 1, 1], [], []>} : vector<32x2304xbf16>, vector<2304x256xbf16>, vector<32x256xf32> -> vector<32x256xf32>
    %112 = arith.addf %81, %111 : vector<32x256xf32>
    %c0_93 = arith.constant 0 : index
    %c0_94 = arith.constant 0 : index
    %113 = vector.load %arg6[%c0_93, %c0_94] : memref<1x256xf32, #tpu.memory_space<vmem>>, vector<1x256xf32>
    %114 = vector.broadcast %113 : vector<1x256xf32> to vector<32x256xf32>
    %115 = arith.addf %112, %114 : vector<32x256xf32>
    %c0_95 = arith.constant 0 : index
    %c0_96 = arith.constant 0 : index
    %c0_97 = arith.constant 0 : index
    %116 = vector.load %arg8[%c0_95, %c0_96, %c0_97] : memref<1x32x256xf32, #tpu.memory_space<vmem>>, vector<1x32x256xf32>
    %117 = vector.shape_cast %116 : vector<1x32x256xf32> to vector<32x256xf32>
    %118 = vector.shape_cast %115 : vector<32x256xf32> to vector<1x32x256xf32>
    tpu.vector_store %arg8[%c0_95, %c0_96, %c0_97], %118 {strides = array<i32>} : memref<1x32x256xf32, #tpu.memory_space<vmem>>, vector<1x32x256xf32>,
    return
  }
  func.func @transform_0(%arg0: i32) -> (i32, i32, i32) {
    %c0_i32 = arith.constant 0 : i32
    %c0_i32_0 = arith.constant 0 : i32
    %c0_i32_1 = arith.constant 0 : i32
    return %arg0, %c0_i32, %c0_i32_0 : i32, i32, i32
  }
  func.func @transform_1(%arg0: i32) -> (i32, i32) {
    %c0_i32 = arith.constant 0 : i32
    %c0_i32_0 = arith.constant 0 : i32
    %c0_i32_1 = arith.constant 0 : i32
    return %c0_i32, %c0_i32_0 : i32, i32
  }
  func.func @transform_2(%arg0: i32) -> (i32, i32) {
    %c0_i32 = arith.constant 0 : i32
    %c0_i32_0 = arith.constant 0 : i32
    %c0_i32_1 = arith.constant 0 : i32
    return %c0_i32, %c0_i32_0 : i32, i32
  }
  func.func @transform_3(%arg0: i32) -> (i32, i32) {
    %c0_i32 = arith.constant 0 : i32
    %c0_i32_0 = arith.constant 0 : i32
    %c0_i32_1 = arith.constant 0 : i32
    return %c0_i32, %c0_i32_0 : i32, i32
  }
  func.func @transform_4(%arg0: i32) -> (i32, i32) {
    %c0_i32 = arith.constant 0 : i32
    %c0_i32_0 = arith.constant 0 : i32
    %c0_i32_1 = arith.constant 0 : i32
    return %c0_i32, %c0_i32_0 : i32, i32
  }
  func.func @transform_5(%arg0: i32) -> (i32, i32) {
    %c0_i32 = arith.constant 0 : i32
    %c0_i32_0 = arith.constant 0 : i32
    %c0_i32_1 = arith.constant 0 : i32
    return %c0_i32, %c0_i32_0 : i32, i32
  }
  func.func @transform_6(%arg0: i32) -> (i32, i32) {
    %c0_i32 = arith.constant 0 : i32
    %c0_i32_0 = arith.constant 0 : i32
    %c0_i32_1 = arith.constant 0 : i32
    return %c0_i32, %c0_i32_0 : i32, i32
  }
  func.func @transform_7(%arg0: i32) -> (i32, i32, i32) {
    %c0_i32 = arith.constant 0 : i32
    %c0_i32_0 = arith.constant 0 : i32
    %c0_i32_1 = arith.constant 0 : i32
    return %arg0, %c0_i32, %c0_i32_0 : i32, i32, i32
  }
}

</mosaic_0001>

<llo_original>
// kernel: tile.23
$region0: #{tile.23}
  #allocation2 [shape = 's32[1]{0}', space=sflag, size = 0x4, scoped, tag = 'scoped memory for tile.23']
  %s0 = inlined_call_operand.hbm [shape: f32[32], index: 0, kind: input, shape index: {}]
  %s1 = inlined_call_operand.vmem [shape: f32[8,32], index: 1, kind: output, shape index: {}]
  $region1: #{tile.23} parent=0
    #allocation0 [shape = 'u8[512]{0}', space=vmem, size = 0x400, scoped, tag = 'operand span for operand 0']
    #allocation1 [shape = 's32[1]{0}', space=sflag, size = 0x4, scoped, tag = 'scoped memory for tile.23']
    %2 = vsyncpa [#allocation1], 0
    // Predicated region
    $region2: #{tile.23} parent=1 // pred_check
      _
    $region3: #{tile.23} parent=1 // pred_check_branch
      %4 = sbr.rel (0) target = $region5
    $region4: #{tile.23} parent=1 // pred_region
      %s6 = ssub.s32 16, 16
      %7 = vsyncadd [#allocation1], %s6
      %s9 = sshll.u32 [#allocation0], 4
      %s10 = int_to_ptr.vmem [resolvable:$true] %s9
      %12 = dma.hbm_to_vmem [thread:$0]  %s0, 16, %s10, [#allocation1]
    $region5: #{tile.23} parent=1 // pred_fallthru
      _
    // Predicated region
    $region6: #{tile.23} parent=1 // pred_check
      _
    $region7: #{tile.23} parent=1 // pred_check_branch
      %14 = sbr.rel (0) target = $region9
    $region8: #{tile.23} parent=1 // pred_region
      %15 = dma.done [#allocation1], 16
    $region9: #{tile.23} parent=1 // pred_fallthru
      _
    %v16 = vld [vmem:[#allocation0] ss:$0 sm:$0xff]
    %17 = vst [vmem:[%s1] sm:$0xff] %v16
    %18 = vsyncpa [#allocation1], 1

// kernel: tile.24
$region0: #{tile.24}
  %s0 = inlined_call_operand.vmem [shape: f32[8,32], index: 0, kind: input, shape index: {}]
  %s1 = inlined_call_operand.vmem [shape: f32[1,256], index: 1, kind: output, shape index: {}]
  $region1: #{tile.24} parent=0
    #allocation0 [shape = 'u8[8192]{0}', space=vmem, size = 0x2000, scoped, tag = 'scoped mem for output reshape']
    %s2 = smov 3
    %v3 = vld [vmem:[%s0] ss:$4 sm:%s2]
    %vm4 = vcmask 261120
    %5 = vst.msk [vmem:[#allocation0] ss:$8 sm:$0x3] %vm4, %v3
    %s6 = scalar_lea.vmem %s0, 3
    %s7 = smov 3
    %v8 = vld [vmem:[%s6] ss:$4 sm:%s7]
    %9 = vrot.lane.b32.xlu0 %v8, 96
    %v10 = vpop.permute.xlu0 %9
    %vm11 = vcmask 1048320
    %12 = vst.msk [vmem:[#allocation0] ss:$8 sm:$0x3] %vm11, %v10
    %s13 = scalar_lea.vmem %s0, 2
    %s14 = smov 3
    %v15 = vld [vmem:[%s13] ss:$4 sm:%s14]
    %16 = vrot.lane.b32.xlu0 %v15, 64
    %v17 = vpop.permute.xlu0 %16
    %vm18 = vcmask 785920
    %19 = vst.msk [vmem:[#allocation0] ss:$8 sm:$0x3] %vm18, %v17
    %s20 = scalar_lea.vmem %s0, 1
    %s21 = smov 3
    %v22 = vld [vmem:[%s20] ss:$4 sm:%s21]
    %23 = vrot.lane.b32.xlu0 %v22, 32
    %v24 = vpop.permute.xlu0 %23
    %vm25 = vcmask 523520
    %26 = vst.msk [vmem:[#allocation0] ss:$8 sm:$0x3] %vm25, %v24
    %s28 = sshllo.u32 0, 1
    %v30 = vld [vmem:[#allocation0] sm:%s28]
    %s31 = sshllo.u32 0, 1
    %32 = vst [vmem:[%s1] sm:%s31] %v30
    %s33 = scalar_lea.vmem [#allocation0], 8
    %v34 = vld [vmem:[%s33] sm:%s28]
    %s35 = sshllo.u32 0, 1
    %s36 = scalar_lea.vmem %s1, 1
    %37 = vst [vmem:[%s36] sm:%s35] %v34

// kernel: ve_conv_h_pallas.1
$region0: #{ve_conv_h_pallas.1}
  #allocation0 [shape = 'u32[]', space=smem, size = 0x4, offset = 0x4, fixed_abs, tag = 'smem constant byte address 0x4 - core index']
  #allocation1 [shape = 'u32[144,128]{1,0:T(1,128)}', space=vmem, size = 0x12000, scoped, tag = 'internal scratch']
  #allocation2 [shape = 'f32[64,256]{1,0:T(8,128)}', space=vmem, size = 0x10000, scoped, tag = 'scratch operand']
  #allocation3 [shape = 'bf16[32,2304]{1,0:T(16,128)(2,1)}', space=vmem, size = 0x24000, scoped, tag = 'scratch operand']
  %s0 = inlined_call_operand.vmem [shape: f32[2,32,256], index: 0, kind: input, shape index: {}]
  %s1 = inlined_call_operand.vmem [shape: f32[1,256], index: 1, kind: input, shape index: {}]
  %s2 = inlined_call_operand.vmem [shape: f32[1,256], index: 2, kind: input, shape index: {}]
  %s3 = inlined_call_operand.vmem [shape: bf16[2304,256], index: 3, kind: input, shape index: {}]
  %s4 = inlined_call_operand.vmem [shape: f32[1,256], index: 4, kind: input, shape index: {}]
  %s5 = inlined_call_operand.vmem [shape: f32[1,256], index: 5, kind: input, shape index: {}]
  %s6 = inlined_call_operand.vmem [shape: bf16[2304,256], index: 6, kind: input, shape index: {}]
  %s7 = inlined_call_operand.vmem [shape: f32[2,32,256], index: 7, kind: output, shape index: {}]
  %s8 = sld [smem:[#allocation0]]
  $region61: #{ve_conv_h_pallas.1} parent=0
    _
  %s10 = ssub.s32 1, %s8
  %s11 = scalar_select 0, %s10, %s8
  loop: start=0, step=1, limit=4
  $region2: #{ve_conv_h_pallas.1} parent=0 // loop_pre_header
    _
  $region3: #{ve_conv_h_pallas.1} parent=0 // loop_header
    %s13 = sphi 0, %s17
    %p14 = scmp.ge.s32.totalorder %s13, 4
    %s23 = sphi 0, %s25
    %s26 = sphi 0, %s23
    %s27 = sphi 0, %s26
    %s43 = sphi 0, %s27
    %s47 = sphi 0, %s47
    %s49 = sphi 0, %s47
    %s50 = sphi 0, %s49
    %s64 = sphi 0, %s50
    %s68 = sphi 0, %s68
    %s70 = sphi 0, %s68
    %s71 = sphi 0, %s70
    %s85 = sphi 0, %s71
    %s89 = sphi 0, %s89
    %s91 = sphi 0, %s89
    %s92 = sphi 0, %s91
    %s106 = sphi 0, %s92
    %s110 = sphi 0, %s110
    %s112 = sphi 0, %s110
    %s113 = sphi 0, %s112
    %s127 = sphi 0, %s113
    %s131 = sphi 0, %s131
    %s133 = sphi 0, %s131
    %s134 = sphi 0, %s133
    %s148 = sphi 0, %s134
    %s152 = sphi 0, %s152
    %s154 = sphi 0, %s152
    %s155 = sphi 0, %s154
    %s169 = sphi 0, %s155
    %s175 = sphi 0, %s177
    %s178 = sphi 0, %s175
    %s179 = sphi 0, %s178
    %s195 = sphi 0, %s179
  $region4: #{ve_conv_h_pallas.1} parent=0 // loop_header_branch
    %16 = sbr.rel (%p14) target = $region8
  $region5: #{ve_conv_h_pallas.1} parent=0 // loop_body
    %s18 = ssub.s32 %s13, 1
    %s19 = ssub.s32 %s13, 2
    %s20 = sadd.s32 %s13, 1
    %s21 = ssub.s32 %s13, %s20
    %p22 = scmp.eq.s32.totalorder %s21, 0
    %s24 = sadd.s32 %s23, 1
    %s25 = scalar_select %p22, %s23, %s24
    %p28 = pneg %p22
    %p29 = scmp.eq.s32.totalorder %s13, 1
    %p30 = por %p28, %p29
    %p31 = scmp.ne.s32.totalorder %s23, %s26
    %p32 = scmp.eq.s32.totalorder %s13, 0
    %p33 = por %p31, %p32
    %p34 = scmp.ne.s32.totalorder %s23, %s26
    %p35 = scmp.eq.s32.totalorder %s18, 1
    %p36 = por %p34, %p35
    %p37 = scmp.ne.s32.totalorder %s26, %s27
    %p38 = scmp.eq.s32.totalorder %s18, 0
    %p39 = por %p37, %p38
    %p40 = scmp.ne.s32.totalorder %s26, %s27
    %p41 = scmp.eq.s32.totalorder %s19, 1
    %p42 = por %p40, %p41
    %p44 = scmp.ne.s32.totalorder %s27, %s43
    %p45 = scmp.eq.s32.totalorder %s19, 0
    %p46 = por %p44, %p45
    %s48 = sadd.s32 %s47, 1
    %p51 = scmp.eq.s32.totalorder %s13, 1
    %p52 = scmp.ne.s32.totalorder %s47, %s49
    %p53 = scmp.eq.s32.totalorder %s13, 0
    %p54 = por %p52, %p53
    %p55 = scmp.ne.s32.totalorder %s47, %s49
    %p56 = scmp.eq.s32.totalorder %s18, 1
    %p57 = por %p55, %p56
    %p58 = scmp.ne.s32.totalorder %s49, %s50
    %p59 = scmp.eq.s32.totalorder %s18, 0
    %p60 = por %p58, %p59
    %p61 = scmp.ne.s32.totalorder %s49, %s50
    %p62 = scmp.eq.s32.totalorder %s19, 1
    %p63 = por %p61, %p62
    %p65 = scmp.ne.s32.totalorder %s50, %s64
    %p66 = scmp.eq.s32.totalorder %s19, 0
    %p67 = por %p65, %p66
    %s69 = sadd.s32 %s68, 1
    %p72 = scmp.eq.s32.totalorder %s13, 1
    %p73 = scmp.ne.s32.totalorder %s68, %s70
    %p74 = scmp.eq.s32.totalorder %s13, 0
    %p75 = por %p73, %p74
    %p76 = scmp.ne.s32.totalorder %s68, %s70
    %p77 = scmp.eq.s32.totalorder %s18, 1
    %p78 = por %p76, %p77
    %p79 = scmp.ne.s32.totalorder %s70, %s71
    %p80 = scmp.eq.s32.totalorder %s18, 0
    %p81 = por %p79, %p80
    %p82 = scmp.ne.s32.totalorder %s70, %s71
    %p83 = scmp.eq.s32.totalorder %s19, 1
    %p84 = por %p82, %p83
    %p86 = scmp.ne.s32.totalorder %s71, %s85
    %p87 = scmp.eq.s32.totalorder %s19, 0
    %p88 = por %p86, %p87
    %s90 = sadd.s32 %s89, 1
    %p93 = scmp.eq.s32.totalorder %s13, 1
    %p94 = scmp.ne.s32.totalorder %s89, %s91
    %p95 = scmp.eq.s32.totalorder %s13, 0
    %p96 = por %p94, %p95
    %p97 = scmp.ne.s32.totalorder %s89, %s91
    %p98 = scmp.eq.s32.totalorder %s18, 1
    %p99 = por %p97, %p98
    %p100 = scmp.ne.s32.totalorder %s91, %s92
    %p101 = scmp.eq.s32.totalorder %s18, 0
    %p102 = por %p100, %p101
    %p103 = scmp.ne.s32.totalorder %s91, %s92
    %p104 = scmp.eq.s32.totalorder %s19, 1
    %p105 = por %p103, %p104
    %p107 = scmp.ne.s32.totalorder %s92, %s106
    %p108 = scmp.eq.s32.totalorder %s19, 0
    %p109 = por %p107, %p108
    %s111 = sadd.s32 %s110, 1
    %p114 = scmp.eq.s32.totalorder %s13, 1
    %p115 = scmp.ne.s32.totalorder %s110, %s112
    %p116 = scmp.eq.s32.totalorder %s13, 0
    %p117 = por %p115, %p116
    %p118 = scmp.ne.s32.totalorder %s110, %s112
    %p119 = scmp.eq.s32.totalorder %s18, 1
    %p120 = por %p118, %p119
    %p121 = scmp.ne.s32.totalorder %s112, %s113
    %p122 = scmp.eq.s32.totalorder %s18, 0
    %p123 = por %p121, %p122
    %p124 = scmp.ne.s32.totalorder %s112, %s113
    %p125 = scmp.eq.s32.totalorder %s19, 1
    %p126 = por %p124, %p125
    %p128 = scmp.ne.s32.totalorder %s113, %s127
    %p129 = scmp.eq.s32.totalorder %s19, 0
    %p130 = por %p128, %p129
    %s132 = sadd.s32 %s131, 1
    %p135 = scmp.eq.s32.totalorder %s13, 1
    %p136 = scmp.ne.s32.totalorder %s131, %s133
    %p137 = scmp.eq.s32.totalorder %s13, 0
    %p138 = por %p136, %p137
    %p139 = scmp.ne.s32.totalorder %s131, %s133
    %p140 = scmp.eq.s32.totalorder %s18, 1
    %p141 = por %p139, %p140
    %p142 = scmp.ne.s32.totalorder %s133, %s134
    %p143 = scmp.eq.s32.totalorder %s18, 0
    %p144 = por %p142, %p143
    %p145 = scmp.ne.s32.totalorder %s133, %s134
    %p146 = scmp.eq.s32.totalorder %s19, 1
    %p147 = por %p145, %p146
    %p149 = scmp.ne.s32.totalorder %s134, %s148
    %p150 = scmp.eq.s32.totalorder %s19, 0
    %p151 = por %p149, %p150
    %s153 = sadd.s32 %s152, 1
    %p156 = scmp.eq.s32.totalorder %s13, 1
    %p157 = scmp.ne.s32.totalorder %s152, %s154
    %p158 = scmp.eq.s32.totalorder %s13, 0
    %p159 = por %p157, %p158
    %p160 = scmp.ne.s32.totalorder %s152, %s154
    %p161 = scmp.eq.s32.totalorder %s18, 1
    %p162 = por %p160, %p161
    %p163 = scmp.ne.s32.totalorder %s154, %s155
    %p164 = scmp.eq.s32.totalorder %s18, 0
    %p165 = por %p163, %p164
    %p166 = scmp.ne.s32.totalorder %s154, %s155
    %p167 = scmp.eq.s32.totalorder %s19, 1
    %p168 = por %p166, %p167
    %p170 = scmp.ne.s32.totalorder %s155, %s169
    %p171 = scmp.eq.s32.totalorder %s19, 0
    %p172 = por %p170, %p171
    %s173 = ssub.s32 %s13, %s20
    %p174 = scmp.eq.s32.totalorder %s173, 0
    %s176 = sadd.s32 %s175, 1
    %s177 = scalar_select %p174, %s175, %s176
    %p180 = pneg %p174
    %p181 = scmp.eq.s32.totalorder %s13, 1
    %p182 = por %p180, %p181
    %p183 = scmp.ne.s32.totalorder %s175, %s178
    %p184 = scmp.eq.s32.totalorder %s13, 0
    %p185 = por %p183, %p184
    %p186 = scmp.ne.s32.totalorder %s175, %s178
    %p187 = scmp.eq.s32.totalorder %s18, 1
    %p188 = por %p186, %p187
    %p189 = scmp.ne.s32.totalorder %s178, %s179
    %p190 = scmp.eq.s32.totalorder %s18, 0
    %p191 = por %p189, %p190
    %p192 = scmp.ne.s32.totalorder %s178, %s179
    %p193 = scmp.eq.s32.totalorder %s19, 1
    %p194 = por %p192, %p193
    %p196 = scmp.ne.s32.totalorder %s179, %s195
    %p197 = scmp.eq.s32.totalorder %s19, 0
    %p198 = por %p196, %p197
    %p199 = scmp.le.s32.totalorder 1, %s13
    %p200 = scmp.lt.s32.totalorder %s13, 3
    %p201 = pnand %p199, %p200
    %p202 = pneg %p201
    // Predicated region
    $region9: #{ve_conv_h_pallas.1} parent=5 // pred_check
      _
    $region10: #{ve_conv_h_pallas.1} parent=5 // pred_check_branch
      %204 = sbr.rel (%p201) target = $region12
    $region11: #{ve_conv_h_pallas.1} parent=5 // pred_region
      %s205 = ssub.s32 %s13, 1
      // Predicated region
      $region13: #{ve_conv_h_pallas.1} parent=11 // pred_check
        %p206 = pneg %p60
      $region14: #{ve_conv_h_pallas.1} parent=11 // pred_check_branch
        %208 = sbr.rel (%p206) target = $region16
      $region15: #{ve_conv_h_pallas.1} parent=11 // pred_region
        _
      $region16: #{ve_conv_h_pallas.1} parent=11 // pred_fallthru
        _
      // Predicated region
      $region17: #{ve_conv_h_pallas.1} parent=11 // pred_check
        %p209 = pneg %p81
      $region18: #{ve_conv_h_pallas.1} parent=11 // pred_check_branch
        %211 = sbr.rel (%p209) target = $region20
      $region19: #{ve_conv_h_pallas.1} parent=11 // pred_region
        _
      $region20: #{ve_conv_h_pallas.1} parent=11 // pred_fallthru
        _
      // Predicated region
      $region21: #{ve_conv_h_pallas.1} parent=11 // pred_check
        %p212 = pneg %p102
      $region22: #{ve_conv_h_pallas.1} parent=11 // pred_check_branch
        %214 = sbr.rel (%p212) target = $region24
      $region23: #{ve_conv_h_pallas.1} parent=11 // pred_region
        _
      $region24: #{ve_conv_h_pallas.1} parent=11 // pred_fallthru
        _
      // Predicated region
      $region25: #{ve_conv_h_pallas.1} parent=11 // pred_check
        %p215 = pneg %p123
      $region26: #{ve_conv_h_pallas.1} parent=11 // pred_check_branch
        %217 = sbr.rel (%p215) target = $region28
      $region27: #{ve_conv_h_pallas.1} parent=11 // pred_region
        _
      $region28: #{ve_conv_h_pallas.1} parent=11 // pred_fallthru
        _
      // Predicated region
      $region29: #{ve_conv_h_pallas.1} parent=11 // pred_check
        %p218 = pneg %p144
      $region30: #{ve_conv_h_pallas.1} parent=11 // pred_check_branch
        %220 = sbr.rel (%p218) target = $region32
      $region31: #{ve_conv_h_pallas.1} parent=11 // pred_region
        _
      $region32: #{ve_conv_h_pallas.1} parent=11 // pred_fallthru
        _
      // Predicated region
      $region33: #{ve_conv_h_pallas.1} parent=11 // pred_check
        %p221 = pneg %p165
      $region34: #{ve_conv_h_pallas.1} parent=11 // pred_check_branch
        %223 = sbr.rel (%p221) target = $region36
      $region35: #{ve_conv_h_pallas.1} parent=11 // pred_region
        _
      $region36: #{ve_conv_h_pallas.1} parent=11 // pred_fallthru
        _
    $region12: #{ve_conv_h_pallas.1} parent=5 // pred_fallthru
      _
    %p224 = scmp.lt.s32.totalorder %s13, 2
    // Predicated region
    $region37: #{ve_conv_h_pallas.1} parent=5 // pred_check
      %p225 = pneg %p224
    $region38: #{ve_conv_h_pallas.1} parent=5 // pred_check_branch
      %227 = sbr.rel (%p225) target = $region40
    $region39: #{ve_conv_h_pallas.1} parent=5 // pred_region
      // Predicated region
      $region41: #{ve_conv_h_pallas.1} parent=39 // pred_check
        %p228 = pneg %p33
      $region42: #{ve_conv_h_pallas.1} parent=39 // pred_check_branch
        %230 = sbr.rel (%p228) target = $region44
      $region43: #{ve_conv_h_pallas.1} parent=39 // pred_region
        %p231 = scmp.lt.s32.totalorder %s13, 1
        %s232 = scalar_select %p231, %s13, 1
        %s233 = smul.addr %s232, 8
        %s234 = smul.addr %s233, 8
        %s235 = scalar_lea.vmem %s0, %s234
      $region44: #{ve_conv_h_pallas.1} parent=39 // pred_fallthru
        _
    $region40: #{ve_conv_h_pallas.1} parent=5 // pred_fallthru
      _
    %p236 = scmp.le.s32.totalorder 1, %s13
    %p237 = scmp.lt.s32.totalorder %s13, 3
    %p238 = pnand %p236, %p237
    %p239 = pneg %p238
    // Predicated region
    $region45: #{ve_conv_h_pallas.1} parent=5 // pred_check
      _
    $region46: #{ve_conv_h_pallas.1} parent=5 // pred_check_branch
      %241 = sbr.rel (%p238) target = $region48
    $region47: #{ve_conv_h_pallas.1} parent=5 // pred_region
      %s242 = ssub.s32 %s13, 1
      %p243 = scmp.lt.s32.totalorder %s18, 1
      %s244 = scalar_select %p243, %s18, 1
      %s245 = smul.addr %s244, 8
      %s246 = smul.addr %s245, 8
      %s247 = scalar_lea.vmem %s0, %s246
      %p248 = pneg %p39
      %p249 = pneg %p36
      %p250 = pneg %p60
      %p251 = pneg %p57
      %p252 = pneg %p81
      %p253 = pneg %p78
      %p254 = pneg %p102
      %p255 = pneg %p99
      %p256 = pneg %p123
      %p257 = pneg %p120
      %p258 = pneg %p144
      %p259 = pneg %p141
      %p260 = pneg %p165
      %p261 = pneg %p162
      %p262 = pneg %p191
      %p263 = pneg %p188
      %p264 = scmp.lt.s32.totalorder %s18, 1
      %s265 = scalar_select %p264, %s18, 1
      %s266 = smul.addr %s265, 8
      %s267 = smul.addr %s266, 8
      %s268 = scalar_lea.vmem %s7, %s267
      %p269 = scmp.lt.s32.totalorder %s18, 1
      %s270 = scalar_select %p269, %s18, 1
      %s271 = smul.addr %s270, 8
      %s272 = smul.addr %s271, 8
      %s273 = scalar_lea.vmem %s0, %s272
      %p274 = scmp.lt.s32.totalorder %s18, 1
      %s275 = scalar_select %p274, %s18, 1
      %s276 = smul.addr %s275, 8
      %s277 = smul.addr %s276, 8
      %s278 = scalar_lea.vmem %s7, %s277
      %279 = vst [vmem:[#allocation2] sm:$0xff] 0.0
      %280 = vst [vmem:[#allocation2 + $0x8] sm:$0xff] 0.0
      %281 = vst [vmem:[#allocation2 + $0x10] sm:$0xff] 0.0
      %282 = vst [vmem:[#allocation2 + $0x18] sm:$0xff] 0.0
      %283 = vst [vmem:[#allocation2 + $0x60] sm:$0xff] 0.0
      %284 = vst [vmem:[#allocation2 + $0x68] sm:$0xff] 0.0
      %285 = vst [vmem:[#allocation2 + $0x70] sm:$0xff] 0.0
      %286 = vst [vmem:[#allocation2 + $0x78] sm:$0xff] 0.0
      %v287 = vlaneseq
      %v288 = vshrl.u32 %v287, 7
      %v289 = vadd.s32 %v288, 8
      %v290 = vadd.s32 %v288, 16
      %v291 = vadd.s32 %v288, 24
      %vm292 = vcmp.lt.s32.totalorder %v288, 0
      %v293 = vsub.s32 0, %v288
      %v294 = vsel %vm292, %v293, %v288
      %v295 = vshrl.u32 %v294, 3
      %v296 = vand.u32 %v294, 7
      %v297 = vsub.s32 0, %v296
      %v298 = vsel %vm292, %v297, %v296
      %vm299 = vcmp.lt.s32.totalorder %v289, 0
      %v300 = vsub.s32 0, %v289
      %v301 = vsel %vm299, %v300, %v289
      %v302 = vshrl.u32 %v301, 3
      %v303 = vand.u32 %v301, 7
      %v304 = vsub.s32 0, %v303
      %v305 = vsel %vm299, %v304, %v303
      %vm306 = vcmp.lt.s32.totalorder %v290, 0
      %v307 = vsub.s32 0, %v290
      %v308 = vsel %vm306, %v307, %v290
      %v309 = vshrl.u32 %v308, 3
      %v310 = vand.u32 %v308, 7
      %v311 = vsub.s32 0, %v310
      %v312 = vsel %vm306, %v311, %v310
      %vm313 = vcmp.lt.s32.totalorder %v291, 0
      %v314 = vsub.s32 0, %v291
      %v315 = vsel %vm313, %v314, %v291
      %v316 = vshrl.u32 %v315, 3
      %v317 = vand.u32 %v315, 7
      %v318 = vsub.s32 0, %v317
      %v319 = vsel %vm313, %v318, %v317
      %vm320 = vcmp.ne.s32.totalorder %v298, 0
      %vm321 = vcmp.ne.s32.totalorder %v305, 0
      %vm322 = vcmp.ne.s32.totalorder %v312, 0
      %vm323 = vcmp.ne.s32.totalorder %v319, 0
      %vm324 = vcmp.lt.s32.totalorder %v298, 0
      %vm325 = vcmp.lt.s32.totalorder %v305, 0
      %vm326 = vcmp.lt.s32.totalorder %v312, 0
      %vm327 = vcmp.lt.s32.totalorder %v319, 0
      %vm328 = vmand %vm324, %vm320
      %vm329 = vmand %vm325, %vm321
      %vm330 = vmand %vm326, %vm322
      %vm331 = vmand %vm327, %vm323
      %v332 = vadd.s32 %v298, 8
      %v333 = vadd.s32 %v305, 8
      %v334 = vadd.s32 %v312, 8
      %v335 = vadd.s32 %v319, 8
      %v336 = vsel %vm328, %v332, %v298
      %v337 = vsel %vm329, %v333, %v305
      %v338 = vsel %vm330, %v334, %v312
      %v339 = vsel %vm331, %v335, %v319
      %vm340 = vcmp.lt.s32.totalorder %v336, 6
      %vm341 = vcmp.lt.s32.totalorder %v337, 6
      %vm342 = vcmp.lt.s32.totalorder %v338, 6
      %vm343 = vcmp.lt.s32.totalorder %v339, 6
      %v344 = vld [vmem:[%s273] sm:$0xff]
      %v345 = vld [vmem:[%s273 + $0x8] sm:$0xff]
      %v346 = vld [vmem:[%s273 + $0x10] sm:$0xff]
      %v347 = vld [vmem:[%s273 + $0x18] sm:$0xff]
      %v348 = vld [vmem:[%s273 + $0x20] sm:$0xff]
      %v349 = vld [vmem:[%s273 + $0x28] sm:$0xff]
      %v350 = vld [vmem:[%s273 + $0x30] sm:$0xff]
      %v351 = vld [vmem:[%s273 + $0x38] sm:$0xff]
      %vm352 = vcmp.ge.f32.partialorder %v344, 0.0
      %vm353 = vcmp.ge.f32.partialorder %v345, 0.0
      %vm354 = vcmp.ge.f32.partialorder %v346, 0.0
      %vm355 = vcmp.ge.f32.partialorder %v347, 0.0
      %vm356 = vcmp.ge.f32.partialorder %v348, 0.0
      %vm357 = vcmp.ge.f32.partialorder %v349, 0.0
      %vm358 = vcmp.ge.f32.partialorder %v350, 0.0
      %vm359 = vcmp.ge.f32.partialorder %v351, 0.0
      %v360 = vld [vmem:[%s1] sm:$0x3]
      %v362 = vlaneseq
      %v363 = vshrl.u32 %v362, 7
      %v364 = vsub.s32 0, %v363
      %v365 = vrot.slane %v360, %v364
      %v366 = vlaneseq
      %v367 = vshrl.u32 %v366, 7
      %v368 = vsub.s32 1, %v367
      %v369 = vrot.slane %v360, %v368
      %v372 = vmul.f32 %v365, %v344
      %v373 = vmul.f32 %v369, %v345
      %v374 = vmul.f32 %v365, %v346
      %v375 = vmul.f32 %v369, %v347
      %v376 = vmul.f32 %v365, %v348
      %v377 = vmul.f32 %v369, %v349
      %v378 = vmul.f32 %v365, %v350
      %v379 = vmul.f32 %v369, %v351
      %v380 = vsel %vm352, %v344, %v372
      %v381 = vsel %vm353, %v345, %v373
      %v382 = vsel %vm354, %v346, %v374
      %v383 = vsel %vm355, %v347, %v375
      %v384 = vsel %vm356, %v348, %v376
      %v385 = vsel %vm357, %v349, %v377
      %v386 = vsel %vm358, %v350, %v378
      %v387 = vsel %vm359, %v351, %v379
      %388 = vst [vmem:[#allocation2 + $0x20] sm:$0xff] %v380
      %389 = vst [vmem:[#allocation2 + $0x28] sm:$0xff] %v381
      %390 = vst [vmem:[#allocation2 + $0x30] sm:$0xff] %v382
      %391 = vst [vmem:[#allocation2 + $0x38] sm:$0xff] %v383
      %392 = vst [vmem:[#allocation2 + $0x40] sm:$0xff] %v384
      %393 = vst [vmem:[#allocation2 + $0x48] sm:$0xff] %v385
      %394 = vst [vmem:[#allocation2 + $0x50] sm:$0xff] %v386
      %395 = vst [vmem:[#allocation2 + $0x58] sm:$0xff] %v387
      %v396 = vld [vmem:[#allocation2] sm:$0x80]
      %v397 = vld [vmem:[#allocation2 + $0x8] sm:$0x80]
      %v398 = vld [vmem:[#allocation2 + $0x10] sm:$0xff]
      %v399 = vld [vmem:[#allocation2 + $0x18] sm:$0xff]
      %v400 = vld [vmem:[#allocation2 + $0x20] sm:$0xff]
      %v401 = vld [vmem:[#allocation2 + $0x28] sm:$0xff]
      %v402 = vld [vmem:[#allocation2 + $0x30] sm:$0xff]
      %v403 = vld [vmem:[#allocation2 + $0x38] sm:$0xff]
      %v404 = vld [vmem:[#allocation2 + $0x40] sm:$0x7f]
      %v405 = vld [vmem:[#allocation2 + $0x48] sm:$0x7f]
      %v406 = vpack.c.bf16 %v398, %v396
      %v407 = vpack.c.bf16 %v399, %v397
      %v408 = vpack.c.bf16 %v402, %v400
      %v409 = vpack.c.bf16 %v403, %v401
      %v410 = vpack.c.bf16 %v404, %v404
      %v411 = vpack.c.bf16 %v405, %v405
      %vm412 = vsmask.f32 4352
      %v414 = vshrl.u32 %v406, 16
      %v416 = vrot.slane %v414, 3
      %v417 = vshll.u32 %v406, 16
      %v419 = vrot.slane %v417, 4
      %v420 = vor.u32 %v416, %v419
      %v422 = vshrl.u32 %v408, 16
      %v424 = vrot.slane %v422, 3
      %v425 = vshll.u32 %v408, 16
      %v427 = vrot.slane %v425, 4
      %v428 = vor.u32 %v424, %v427
      %v429 = vsel %vm412, %v420, %v428
      %v431 = vshrl.u32 %v407, 16
      %v433 = vrot.slane %v431, 3
      %v434 = vshll.u32 %v407, 16
      %v436 = vrot.slane %v434, 4
      %v437 = vor.u32 %v433, %v436
      %v439 = vshrl.u32 %v409, 16
      %v441 = vrot.slane %v439, 3
      %v442 = vshll.u32 %v409, 16
      %v444 = vrot.slane %v442, 4
      %v445 = vor.u32 %v441, %v444
      %v446 = vsel %vm412, %v437, %v445
      %v448 = vshrl.u32 %v410, 16
      %v450 = vrot.slane %v448, 3
      %v451 = vshll.u32 %v410, 16
      %v453 = vrot.slane %v451, 4
      %v454 = vor.u32 %v450, %v453
      %v455 = vsel %vm412, %v428, %v454
      %v457 = vshrl.u32 %v411, 16
      %v459 = vrot.slane %v457, 3
      %v460 = vshll.u32 %v411, 16
      %v462 = vrot.slane %v460, 4
      %v463 = vor.u32 %v459, %v462
      %v464 = vsel %vm412, %v445, %v463
      %469 = vst [vmem:[#allocation3] sm:$0xff] %v429
      %470 = vst [vmem:[#allocation3 + $0x8] sm:$0xff] %v446
      %471 = vst [vmem:[#allocation3 + $0x90] sm:$0xff] %v455
      %472 = vst [vmem:[#allocation3 + $0x98] sm:$0xff] %v464
      %v473 = vld [vmem:[#allocation2 + $0x10] sm:$0xff]
      %v474 = vld [vmem:[#allocation2 + $0x18] sm:$0xff]
      %v475 = vld [vmem:[#allocation2 + $0x20] sm:$0xff]
      %v476 = vld [vmem:[#allocation2 + $0x28] sm:$0xff]
      %v477 = vld [vmem:[#allocation2 + $0x30] sm:$0xff]
      %v478 = vld [vmem:[#allocation2 + $0x38] sm:$0xff]
      %v479 = vld [vmem:[#allocation2 + $0x40] sm:$0xff]
      %v480 = vld [vmem:[#allocation2 + $0x48] sm:$0xff]
      %v481 = vpack.c.bf16 %v475, %v473
      %v482 = vpack.c.bf16 %v476, %v474
      %v483 = vpack.c.bf16 %v479, %v477
      %v484 = vpack.c.bf16 %v480, %v478
      %485 = vst [vmem:[#allocation3 + $0x10] sm:$0xff] %v481
      %486 = vst [vmem:[#allocation3 + $0x18] sm:$0xff] %v482
      %487 = vst [vmem:[#allocation3 + $0xa0] sm:$0xff] %v483
      %488 = vst [vmem:[#allocation3 + $0xa8] sm:$0xff] %v484
      %v489 = vld [vmem:[#allocation2 + $0x10] sm:$0xfe]
      %v490 = vld [vmem:[#allocation2 + $0x18] sm:$0xfe]
      %v491 = vld [vmem:[#allocation2 + $0x20] sm:$0xff]
      %v492 = vld [vmem:[#allocation2 + $0x28] sm:$0xff]
      %v493 = vld [vmem:[#allocation2 + $0x30] sm:$0xff]
      %v494 = vld [vmem:[#allocation2 + $0x38] sm:$0xff]
      %v495 = vld [vmem:[#allocation2 + $0x40] sm:$0xff]
      %v496 = vld [vmem:[#allocation2 + $0x48] sm:$0xff]
      %v497 = vld [vmem:[#allocation2 + $0x50] sm:$0x1]
      %v498 = vld [vmem:[#allocation2 + $0x58] sm:$0x1]
      %v499 = vpack.c.bf16 %v491, %v489
      %v500 = vpack.c.bf16 %v492, %v490
      %v501 = vpack.c.bf16 %v495, %v493
      %v502 = vpack.c.bf16 %v496, %v494
      %v503 = vpack.c.bf16 %v497, %v497
      %v504 = vpack.c.bf16 %v498, %v498
      %vm505 = vsmask.f32 7424
      %v507 = vshrl.u32 %v499, 16
      %v509 = vshll.u32 %v499, 16
      %v511 = vrot.slane %v509, 1
      %v512 = vor.u32 %v507, %v511
      %v514 = vshll.u32 %v501, 16
      %v516 = vrot.slane %v514, 1
      %v517 = vsel %vm505, %v512, %v516
      %v519 = vshrl.u32 %v500, 16
      %v521 = vshll.u32 %v500, 16
      %v523 = vrot.slane %v521, 1
      %v524 = vor.u32 %v519, %v523
      %v526 = vshll.u32 %v502, 16
      %v528 = vrot.slane %v526, 1
      %v529 = vsel %vm505, %v524, %v528
      %v530 = vshrl.u32 %v501, 16
      %v532 = vor.u32 %v530, %v516
      %v534 = vshll.u32 %v503, 16
      %v536 = vrot.slane %v534, 1
      %v537 = vsel %vm505, %v532, %v536
      %v538 = vshrl.u32 %v502, 16
      %v540 = vor.u32 %v538, %v528
      %v542 = vshll.u32 %v504, 16
      %v544 = vrot.slane %v542, 1
      %v545 = vsel %vm505, %v540, %v544
      %550 = vst [vmem:[#allocation3 + $0x20] sm:$0xff] %v517
      %551 = vst [vmem:[#allocation3 + $0x28] sm:$0xff] %v529
      %552 = vst [vmem:[#allocation3 + $0xb0] sm:$0xff] %v537
      %553 = vst [vmem:[#allocation3 + $0xb8] sm:$0xff] %v545
      %v554 = vld [vmem:[#allocation2 + $0x10] sm:$0x80]
      %v555 = vld [vmem:[#allocation2 + $0x18] sm:$0x80]
      %v556 = vld [vmem:[#allocation2 + $0x20] sm:$0xff]
      %v557 = vld [vmem:[#allocation2 + $0x28] sm:$0xff]
      %v558 = vld [vmem:[#allocation2 + $0x30] sm:$0xff]
      %v559 = vld [vmem:[#allocation2 + $0x38] sm:$0xff]
      %v560 = vld [vmem:[#allocation2 + $0x40] sm:$0xff]
      %v561 = vld [vmem:[#allocation2 + $0x48] sm:$0xff]
      %v562 = vld [vmem:[#allocation2 + $0x50] sm:$0x7f]
      %v563 = vld [vmem:[#allocation2 + $0x58] sm:$0x7f]
      %v564 = vpack.c.bf16 %v556, %v554
      %v565 = vpack.c.bf16 %v557, %v555
      %v566 = vpack.c.bf16 %v560, %v558
      %v567 = vpack.c.bf16 %v561, %v559
      %v568 = vpack.c.bf16 %v562, %v562
      %v569 = vpack.c.bf16 %v563, %v563
      %v571 = vshrl.u32 %v564, 16
      %v573 = vrot.slane %v571, 3
      %v574 = vshll.u32 %v564, 16
      %v576 = vrot.slane %v574, 4
      %v577 = vor.u32 %v573, %v576
      %v579 = vshrl.u32 %v566, 16
      %v581 = vrot.slane %v579, 3
      %v582 = vshll.u32 %v566, 16
      %v584 = vrot.slane %v582, 4
      %v585 = vor.u32 %v581, %v584
      %v586 = vsel %vm412, %v577, %v585
      %v588 = vshrl.u32 %v565, 16
      %v590 = vrot.slane %v588, 3
      %v591 = vshll.u32 %v565, 16
      %v593 = vrot.slane %v591, 4
      %v594 = vor.u32 %v590, %v593
      %v596 = vshrl.u32 %v567, 16
      %v598 = vrot.slane %v596, 3
      %v599 = vshll.u32 %v567, 16
      %v601 = vrot.slane %v599, 4
      %v602 = vor.u32 %v598, %v601
      %v603 = vsel %vm412, %v594, %v602
      %v605 = vshrl.u32 %v568, 16
      %v607 = vrot.slane %v605, 3
      %v608 = vshll.u32 %v568, 16
      %v610 = vrot.slane %v608, 4
      %v611 = vor.u32 %v607, %v610
      %v612 = vsel %vm412, %v585, %v611
      %v614 = vshrl.u32 %v569, 16
      %v616 = vrot.slane %v614, 3
      %v617 = vshll.u32 %v569, 16
      %v619 = vrot.slane %v617, 4
      %v620 = vor.u32 %v616, %v619
      %v621 = vsel %vm412, %v602, %v620
      %626 = vst [vmem:[#allocation3 + $0x30] sm:$0xff] %v586
      %627 = vst [vmem:[#allocation3 + $0x38] sm:$0xff] %v603
      %628 = vst [vmem:[#allocation3 + $0xc0] sm:$0xff] %v612
      %629 = vst [vmem:[#allocation3 + $0xc8] sm:$0xff] %v621
      %v630 = vld [vmem:[#allocation2 + $0x20] sm:$0xff]
      %v631 = vld [vmem:[#allocation2 + $0x28] sm:$0xff]
      %v632 = vld [vmem:[#allocation2 + $0x30] sm:$0xff]
      %v633 = vld [vmem:[#allocation2 + $0x38] sm:$0xff]
      %v634 = vld [vmem:[#allocation2 + $0x40] sm:$0xff]
      %v635 = vld [vmem:[#allocation2 + $0x48] sm:$0xff]
      %v636 = vld [vmem:[#allocation2 + $0x50] sm:$0xff]
      %v637 = vld [vmem:[#allocation2 + $0x58] sm:$0xff]
      %v638 = vpack.c.bf16 %v632, %v630
      %v639 = vpack.c.bf16 %v633, %v631
      %v640 = vpack.c.bf16 %v636, %v634
      %v641 = vpack.c.bf16 %v637, %v635
      %642 = vst [vmem:[#allocation3 + $0x40] sm:$0xff] %v638
      %643 = vst [vmem:[#allocation3 + $0x48] sm:$0xff] %v639
      %644 = vst [vmem:[#allocation3 + $0xd0] sm:$0xff] %v640
      %645 = vst [vmem:[#allocation3 + $0xd8] sm:$0xff] %v641
      %v646 = vld [vmem:[#allocation2 + $0x20] sm:$0xfe]
      %v647 = vld [vmem:[#allocation2 + $0x28] sm:$0xfe]
      %v648 = vld [vmem:[#allocation2 + $0x30] sm:$0xff]
      %v649 = vld [vmem:[#allocation2 + $0x38] sm:$0xff]
      %v650 = vld [vmem:[#allocation2 + $0x40] sm:$0xff]
      %v651 = vld [vmem:[#allocation2 + $0x48] sm:$0xff]
      %v652 = vld [vmem:[#allocation2 + $0x50] sm:$0xff]
      %v653 = vld [vmem:[#allocation2 + $0x58] sm:$0xff]
      %v654 = vld [vmem:[#allocation2 + $0x60] sm:$0x1]
      %v655 = vld [vmem:[#allocation2 + $0x68] sm:$0x1]
      %v656 = vpack.c.bf16 %v648, %v646
      %v657 = vpack.c.bf16 %v649, %v647
      %v658 = vpack.c.bf16 %v652, %v650
      %v659 = vpack.c.bf16 %v653, %v651
      %v660 = vpack.c.bf16 %v654, %v654
      %v661 = vpack.c.bf16 %v655, %v655
      %v663 = vshrl.u32 %v656, 16
      %v665 = vshll.u32 %v656, 16
      %v667 = vrot.slane %v665, 1
      %v668 = vor.u32 %v663, %v667
      %v670 = vshll.u32 %v658, 16
      %v672 = vrot.slane %v670, 1
      %v673 = vsel %vm505, %v668, %v672
      %v675 = vshrl.u32 %v657, 16
      %v677 = vshll.u32 %v657, 16
      %v679 = vrot.slane %v677, 1
      %v680 = vor.u32 %v675, %v679
      %v682 = vshll.u32 %v659, 16
      %v684 = vrot.slane %v682, 1
      %v685 = vsel %vm505, %v680, %v684
      %v686 = vshrl.u32 %v658, 16
      %v688 = vor.u32 %v686, %v672
      %v690 = vshll.u32 %v660, 16
      %v692 = vrot.slane %v690, 1
      %v693 = vsel %vm505, %v688, %v692
      %v694 = vshrl.u32 %v659, 16
      %v696 = vor.u32 %v694, %v684
      %v698 = vshll.u32 %v661, 16
      %v700 = vrot.slane %v698, 1
      %v701 = vsel %vm505, %v696, %v700
      %706 = vst [vmem:[#allocation3 + $0x50] sm:$0xff] %v673
      %707 = vst [vmem:[#allocation3 + $0x58] sm:$0xff] %v685
      %708 = vst [vmem:[#allocation3 + $0xe0] sm:$0xff] %v693
      %709 = vst [vmem:[#allocation3 + $0xe8] sm:$0xff] %v701
      %v710 = vld [vmem:[#allocation2 + $0x20] sm:$0x80]
      %v711 = vld [vmem:[#allocation2 + $0x28] sm:$0x80]
      %v712 = vld [vmem:[#allocation2 + $0x30] sm:$0xff]
      %v713 = vld [vmem:[#allocation2 + $0x38] sm:$0xff]
      %v714 = vld [vmem:[#allocation2 + $0x40] sm:$0xff]
      %v715 = vld [vmem:[#allocation2 + $0x48] sm:$0xff]
      %v716 = vld [vmem:[#allocation2 + $0x50] sm:$0xff]
      %v717 = vld [vmem:[#allocation2 + $0x58] sm:$0xff]
      %v718 = vld [vmem:[#allocation2 + $0x60] sm:$0x7f]
      %v719 = vld [vmem:[#allocation2 + $0x68] sm:$0x7f]
      %v720 = vpack.c.bf16 %v712, %v710
      %v721 = vpack.c.bf16 %v713, %v711
      %v722 = vpack.c.bf16 %v716, %v714
      %v723 = vpack.c.bf16 %v717, %v715
      %v724 = vpack.c.bf16 %v718, %v718
      %v725 = vpack.c.bf16 %v719, %v719
      %v727 = vshrl.u32 %v720, 16
      %v729 = vrot.slane %v727, 3
      %v730 = vshll.u32 %v720, 16
      %v732 = vrot.slane %v730, 4
      %v733 = vor.u32 %v729, %v732
      %v735 = vshrl.u32 %v722, 16
      %v737 = vrot.slane %v735, 3
      %v738 = vshll.u32 %v722, 16
      %v740 = vrot.slane %v738, 4
      %v741 = vor.u32 %v737, %v740
      %v742 = vsel %vm412, %v733, %v741
      %v744 = vshrl.u32 %v721, 16
      %v746 = vrot.slane %v744, 3
      %v747 = vshll.u32 %v721, 16
      %v749 = vrot.slane %v747, 4
      %v750 = vor.u32 %v746, %v749
      %v752 = vshrl.u32 %v723, 16
      %v754 = vrot.slane %v752, 3
      %v755 = vshll.u32 %v723, 16
      %v757 = vrot.slane %v755, 4
      %v758 = vor.u32 %v754, %v757
      %v759 = vsel %vm412, %v750, %v758
      %v761 = vshrl.u32 %v724, 16
      %v763 = vrot.slane %v761, 3
      %v764 = vshll.u32 %v724, 16
      %v766 = vrot.slane %v764, 4
      %v767 = vor.u32 %v763, %v766
      %v768 = vsel %vm412, %v741, %v767
      %v770 = vshrl.u32 %v725, 16
      %v772 = vrot.slane %v770, 3
      %v773 = vshll.u32 %v725, 16
      %v775 = vrot.slane %v773, 4
      %v776 = vor.u32 %v772, %v775
      %v777 = vsel %vm412, %v758, %v776
      %782 = vst [vmem:[#allocation3 + $0x60] sm:$0xff] %v742
      %783 = vst [vmem:[#allocation3 + $0x68] sm:$0xff] %v759
      %784 = vst [vmem:[#allocation3 + $0xf0] sm:$0xff] %v768
      %785 = vst [vmem:[#allocation3 + $0xf8] sm:$0xff] %v777
      %v786 = vld [vmem:[#allocation2 + $0x30] sm:$0xff]
      %v787 = vld [vmem:[#allocation2 + $0x38] sm:$0xff]
      %v788 = vld [vmem:[#allocation2 + $0x40] sm:$0xff]
      %v789 = vld [vmem:[#allocation2 + $0x48] sm:$0xff]
      %v790 = vld [vmem:[#allocation2 + $0x50] sm:$0xff]
      %v791 = vld [vmem:[#allocation2 + $0x58] sm:$0xff]
      %v792 = vld [vmem:[#allocation2 + $0x60] sm:$0xff]
      %v793 = vld [vmem:[#allocation2 + $0x68] sm:$0xff]
      %v794 = vpack.c.bf16 %v788, %v786
      %v795 = vpack.c.bf16 %v789, %v787
      %v796 = vpack.c.bf16 %v792, %v790
      %v797 = vpack.c.bf16 %v793, %v791
      %798 = vst [vmem:[#allocation3 + $0x70] sm:$0xff] %v794
      %799 = vst [vmem:[#allocation3 + $0x78] sm:$0xff] %v795
      %800 = vst [vmem:[#allocation3 + $0x100] sm:$0xff] %v796
      %801 = vst [vmem:[#allocation3 + $0x108] sm:$0xff] %v797
      %v802 = vld [vmem:[#allocation2 + $0x30] sm:$0xfe]
      %v803 = vld [vmem:[#allocation2 + $0x38] sm:$0xfe]
      %v804 = vld [vmem:[#allocation2 + $0x40] sm:$0xff]
      %v805 = vld [vmem:[#allocation2 + $0x48] sm:$0xff]
      %v806 = vld [vmem:[#allocation2 + $0x50] sm:$0xff]
      %v807 = vld [vmem:[#allocation2 + $0x58] sm:$0xff]
      %v808 = vld [vmem:[#allocation2 + $0x60] sm:$0xff]
      %v809 = vld [vmem:[#allocation2 + $0x68] sm:$0xff]
      %v810 = vld [vmem:[#allocation2 + $0x70] sm:$0x1]
      %v811 = vld [vmem:[#allocation2 + $0x78] sm:$0x1]
      %v812 = vpack.c.bf16 %v804, %v802
      %v813 = vpack.c.bf16 %v805, %v803
      %v814 = vpack.c.bf16 %v808, %v806
      %v815 = vpack.c.bf16 %v809, %v807
      %v816 = vpack.c.bf16 %v810, %v810
      %v817 = vpack.c.bf16 %v811, %v811
      %v819 = vshrl.u32 %v812, 16
      %v821 = vshll.u32 %v812, 16
      %v823 = vrot.slane %v821, 1
      %v824 = vor.u32 %v819, %v823
      %v826 = vshll.u32 %v814, 16
      %v828 = vrot.slane %v826, 1
      %v829 = vsel %vm505, %v824, %v828
      %v831 = vshrl.u32 %v813, 16
      %v833 = vshll.u32 %v813, 16
      %v835 = vrot.slane %v833, 1
      %v836 = vor.u32 %v831, %v835
      %v838 = vshll.u32 %v815, 16
      %v840 = vrot.slane %v838, 1
      %v841 = vsel %vm505, %v836, %v840
      %v842 = vshrl.u32 %v814, 16
      %v844 = vor.u32 %v842, %v828
      %v846 = vshll.u32 %v816, 16
      %v848 = vrot.slane %v846, 1
      %v849 = vsel %vm505, %v844, %v848
      %v850 = vshrl.u32 %v815, 16
      %v852 = vor.u32 %v850, %v840
      %v854 = vshll.u32 %v817, 16
      %v856 = vrot.slane %v854, 1
      %v857 = vsel %vm505, %v852, %v856
      %862 = vst [vmem:[#allocation3 + $0x80] sm:$0xff] %v829
      %863 = vst [vmem:[#allocation3 + $0x88] sm:$0xff] %v841
      %864 = vst [vmem:[#allocation3 + $0x110] sm:$0xff] %v849
      %865 = vst [vmem:[#allocation3 + $0x118] sm:$0xff] %v857
      %v866 = vld [vmem:[#allocation3] sm:$0xff]
      %v867 = vld [vmem:[#allocation3 + $0x8] sm:$0xff]
      %v868 = vld [vmem:[#allocation3 + $0x10] sm:$0xff]
      %v869 = vld [vmem:[#allocation3 + $0x18] sm:$0xff]
      %v870 = vld [vmem:[#allocation3 + $0x20] sm:$0xff]
      %v871 = vld [vmem:[#allocation3 + $0x28] sm:$0xff]
      %v872 = vld [vmem:[#allocation3 + $0x30] sm:$0xff]
      %v873 = vld [vmem:[#allocation3 + $0x38] sm:$0xff]
      %v874 = vld [vmem:[#allocation3 + $0x40] sm:$0xff]
      %v875 = vld [vmem:[#allocation3 + $0x48] sm:$0xff]
      %v876 = vld [vmem:[#allocation3 + $0x50] sm:$0xff]
      %v877 = vld [vmem:[#allocation3 + $0x58] sm:$0xff]
      %v878 = vld [vmem:[#allocation3 + $0x60] sm:$0xff]
      %v879 = vld [vmem:[#allocation3 + $0x68] sm:$0xff]
      %v880 = vld [vmem:[#allocation3 + $0x70] sm:$0xff]
      %v881 = vld [vmem:[#allocation3 + $0x78] sm:$0xff]
      %v882 = vld [vmem:[#allocation3 + $0x80] sm:$0xff]
      %v883 = vld [vmem:[#allocation3 + $0x88] sm:$0xff]
      %v884 = vld [vmem:[#allocation3 + $0x90] sm:$0xff]
      %v885 = vld [vmem:[#allocation3 + $0x98] sm:$0xff]
      %v886 = vld [vmem:[#allocation3 + $0xa0] sm:$0xff]
      %v887 = vld [vmem:[#allocation3 + $0xa8] sm:$0xff]
      %v888 = vld [vmem:[#allocation3 + $0xb0] sm:$0xff]
      %v889 = vld [vmem:[#allocation3 + $0xb8] sm:$0xff]
      %v890 = vld [vmem:[#allocation3 + $0xc0] sm:$0xff]
      %v891 = vld [vmem:[#allocation3 + $0xc8] sm:$0xff]
      %v892 = vld [vmem:[#allocation3 + $0xd0] sm:$0xff]
      %v893 = vld [vmem:[#allocation3 + $0xd8] sm:$0xff]
      %v894 = vld [vmem:[#allocation3 + $0xe0] sm:$0xff]
      %v895 = vld [vmem:[#allocation3 + $0xe8] sm:$0xff]
      %v896 = vld [vmem:[#allocation3 + $0xf0] sm:$0xff]
      %v897 = vld [vmem:[#allocation3 + $0xf8] sm:$0xff]
      %v898 = vld [vmem:[#allocation3 + $0x100] sm:$0xff]
      %v899 = vld [vmem:[#allocation3 + $0x108] sm:$0xff]
      %v900 = vld [vmem:[#allocation3 + $0x110] sm:$0xff]
      %v901 = vld [vmem:[#allocation3 + $0x118] sm:$0xff]
      %v902 = vld [vmem:[%s3] sm:$0xff]
      %v903 = vld [vmem:[%s3 + $0x8] sm:$0xff]
      %v904 = vld [vmem:[%s3 + $0x10] sm:$0xff]
      %v905 = vld [vmem:[%s3 + $0x18] sm:$0xff]
      %v906 = vld [vmem:[%s3 + $0x20] sm:$0xff]
      %v907 = vld [vmem:[%s3 + $0x28] sm:$0xff]
      %v908 = vld [vmem:[%s3 + $0x30] sm:$0xff]
      %v909 = vld [vmem:[%s3 + $0x38] sm:$0xff]
      %v910 = vld [vmem:[%s3 + $0x40] sm:$0xff]
      %v911 = vld [vmem:[%s3 + $0x48] sm:$0xff]
      %v912 = vld [vmem:[%s3 + $0x50] sm:$0xff]
      %v913 = vld [vmem:[%s3 + $0x58] sm:$0xff]
      %v914 = vld [vmem:[%s3 + $0x60] sm:$0xff]
      %v915 = vld [vmem:[%s3 + $0x68] sm:$0xff]
      %v916 = vld [vmem:[%s3 + $0x70] sm:$0xff]
      %v917 = vld [vmem:[%s3 + $0x78] sm:$0xff]
      %v918 = vld [vmem:[%s3 + $0x80] sm:$0xff]
      %v919 = vld [vmem:[%s3 + $0x88] sm:$0xff]
      %v920 = vld [vmem:[%s3 + $0x90] sm:$0xff]
      %v921 = vld [vmem:[%s3 + $0x98] sm:$0xff]
      %v922 = vld [vmem:[%s3 + $0xa0] sm:$0xff]
      %v923 = vld [vmem:[%s3 + $0xa8] sm:$0xff]
      %v924 = vld [vmem:[%s3 + $0xb0] sm:$0xff]
      %v925 = vld [vmem:[%s3 + $0xb8] sm:$0xff]
      %v926 = vld [vmem:[%s3 + $0xc0] sm:$0xff]
      %v927 = vld [vmem:[%s3 + $0xc8] sm:$0xff]
      %v928 = vld [vmem:[%s3 + $0xd0] sm:$0xff]
      %v929 = vld [vmem:[%s3 + $0xd8] sm:$0xff]
      %v930 = vld [vmem:[%s3 + $0xe0] sm:$0xff]
      %v931 = vld [vmem:[%s3 + $0xe8] sm:$0xff]
      %v932 = vld [vmem:[%s3 + $0xf0] sm:$0xff]
      %v933 = vld [vmem:[%s3 + $0xf8] sm:$0xff]
      %v934 = vld [vmem:[%s3 + $0x100] sm:$0xff]
      %v935 = vld [vmem:[%s3 + $0x108] sm:$0xff]
      %v936 = vld [vmem:[%s3 + $0x110] sm:$0xff]
      %v937 = vld [vmem:[%s3 + $0x118] sm:$0xff]
      %v938 = vld [vmem:[%s3 + $0x120] sm:$0xff]
      %v939 = vld [vmem:[%s3 + $0x128] sm:$0xff]
      %v940 = vld [vmem:[%s3 + $0x130] sm:$0xff]
      %v941 = vld [vmem:[%s3 + $0x138] sm:$0xff]
      %v942 = vld [vmem:[%s3 + $0x140] sm:$0xff]
      %v943 = vld [vmem:[%s3 + $0x148] sm:$0xff]
      %v944 = vld [vmem:[%s3 + $0x150] sm:$0xff]
      %v945 = vld [vmem:[%s3 + $0x158] sm:$0xff]
      %v946 = vld [vmem:[%s3 + $0x160] sm:$0xff]
      %v947 = vld [vmem:[%s3 + $0x168] sm:$0xff]
      %v948 = vld [vmem:[%s3 + $0x170] sm:$0xff]
      %v949 = vld [vmem:[%s3 + $0x178] sm:$0xff]
      %v950 = vld [vmem:[%s3 + $0x180] sm:$0xff]
      %v951 = vld [vmem:[%s3 + $0x188] sm:$0xff]
      %v952 = vld [vmem:[%s3 + $0x190] sm:$0xff]
      %v953 = vld [vmem:[%s3 + $0x198] sm:$0xff]
      %v954 = vld [vmem:[%s3 + $0x1a0] sm:$0xff]
      %v955 = vld [vmem:[%s3 + $0x1a8] sm:$0xff]
      %v956 = vld [vmem:[%s3 + $0x1b0] sm:$0xff]
      %v957 = vld [vmem:[%s3 + $0x1b8] sm:$0xff]
      %v958 = vld [vmem:[%s3 + $0x1c0] sm:$0xff]
      %v959 = vld [vmem:[%s3 + $0x1c8] sm:$0xff]
      %v960 = vld [vmem:[%s3 + $0x1d0] sm:$0xff]
      %v961 = vld [vmem:[%s3 + $0x1d8] sm:$0xff]
      %v962 = vld [vmem:[%s3 + $0x1e0] sm:$0xff]
      %v963 = vld [vmem:[%s3 + $0x1e8] sm:$0xff]
      %v964 = vld [vmem:[%s3 + $0x1f0] sm:$0xff]
      %v965 = vld [vmem:[%s3 + $0x1f8] sm:$0xff]
      %v966 = vld [vmem:[%s3 + $0x200] sm:$0xff]
      %v967 = vld [vmem:[%s3 + $0x208] sm:$0xff]
      %v968 = vld [vmem:[%s3 + $0x210] sm:$0xff]
      %v969 = vld [vmem:[%s3 + $0x218] sm:$0xff]
      %v970 = vld [vmem:[%s3 + $0x220] sm:$0xff]
      %v971 = vld [vmem:[%s3 + $0x228] sm:$0xff]
      %v972 = vld [vmem:[%s3 + $0x230] sm:$0xff]
      %v973 = vld [vmem:[%s3 + $0x238] sm:$0xff]
      %v974 = vld [vmem:[%s3 + $0x240] sm:$0xff]
      %v975 = vld [vmem:[%s3 + $0x248] sm:$0xff]
      %v976 = vld [vmem:[%s3 + $0x250] sm:$0xff]
      %v977 = vld [vmem:[%s3 + $0x258] sm:$0xff]
      %v978 = vld [vmem:[%s3 + $0x260] sm:$0xff]
      %v979 = vld [vmem:[%s3 + $0x268] sm:$0xff]
      %v980 = vld [vmem:[%s3 + $0x270] sm:$0xff]
      %v981 = vld [vmem:[%s3 + $0x278] sm:$0xff]
      %v982 = vld [vmem:[%s3 + $0x280] sm:$0xff]
      %v983 = vld [vmem:[%s3 + $0x288] sm:$0xff]
      %v984 = vld [vmem:[%s3 + $0x290] sm:$0xff]
      %v985 = vld [vmem:[%s3 + $0x298] sm:$0xff]
      %v986 = vld [vmem:[%s3 + $0x2a0] sm:$0xff]
      %v987 = vld [vmem:[%s3 + $0x2a8] sm:$0xff]
      %v988 = vld [vmem:[%s3 + $0x2b0] sm:$0xff]
      %v989 = vld [vmem:[%s3 + $0x2b8] sm:$0xff]
      %v990 = vld [vmem:[%s3 + $0x2c0] sm:$0xff]
      %v991 = vld [vmem:[%s3 + $0x2c8] sm:$0xff]
      %v992 = vld [vmem:[%s3 + $0x2d0] sm:$0xff]
      %v993 = vld [vmem:[%s3 + $0x2d8] sm:$0xff]
      %v994 = vld [vmem:[%s3 + $0x2e0] sm:$0xff]
      %v995 = vld [vmem:[%s3 + $0x2e8] sm:$0xff]
      %v996 = vld [vmem:[%s3 + $0x2f0] sm:$0xff]
      %v997 = vld [vmem:[%s3 + $0x2f8] sm:$0xff]
      %v998 = vld [vmem:[%s3 + $0x300] sm:$0xff]
      %v999 = vld [vmem:[%s3 + $0x308] sm:$0xff]
      %v1000 = vld [vmem:[%s3 + $0x310] sm:$0xff]
      %v1001 = vld [vmem:[%s3 + $0x318] sm:$0xff]
      %v1002 = vld [vmem:[%s3 + $0x320] sm:$0xff]
      %v1003 = vld [vmem:[%s3 + $0x328] sm:$0xff]
      %v1004 = vld [vmem:[%s3 + $0x330] sm:$0xff]
      %v1005 = vld [vmem:[%s3 + $0x338] sm:$0xff]
      %v1006 = vld [vmem:[%s3 + $0x340] sm:$0xff]
      %v1007 = vld [vmem:[%s3 + $0x348] sm:$0xff]
      %v1008 = vld [vmem:[%s3 + $0x350] sm:$0xff]
      %v1009 = vld [vmem:[%s3 + $0x358] sm:$0xff]
      %v1010 = vld [vmem:[%s3 + $0x360] sm:$0xff]
      %v1011 = vld [vmem:[%s3 + $0x368] sm:$0xff]
      %v1012 = vld [vmem:[%s3 + $0x370] sm:$0xff]
      %v1013 = vld [vmem:[%s3 + $0x378] sm:$0xff]
      %v1014 = vld [vmem:[%s3 + $0x380] sm:$0xff]
      %v1015 = vld [vmem:[%s3 + $0x388] sm:$0xff]
      %v1016 = vld [vmem:[%s3 + $0x390] sm:$0xff]
      %v1017 = vld [vmem:[%s3 + $0x398] sm:$0xff]
      %v1018 = vld [vmem:[%s3 + $0x3a0] sm:$0xff]
      %v1019 = vld [vmem:[%s3 + $0x3a8] sm:$0xff]
      %v1020 = vld [vmem:[%s3 + $0x3b0] sm:$0xff]
      %v1021 = vld [vmem:[%s3 + $0x3b8] sm:$0xff]
      %v1022 = vld [vmem:[%s3 + $0x3c0] sm:$0xff]
      %v1023 = vld [vmem:[%s3 + $0x3c8] sm:$0xff]
      %v1024 = vld [vmem:[%s3 + $0x3d0] sm:$0xff]
      %v1025 = vld [vmem:[%s3 + $0x3d8] sm:$0xff]
      %v1026 = vld [vmem:[%s3 + $0x3e0] sm:$0xff]
      %v1027 = vld [vmem:[%s3 + $0x3e8] sm:$0xff]
      %v1028 = vld [vmem:[%s3 + $0x3f0] sm:$0xff]
      %v1029 = vld [vmem:[%s3 + $0x3f8] sm:$0xff]
      %v1030 = vld [vmem:[%s3 + $0x400] sm:$0xff]
      %v1031 = vld [vmem:[%s3 + $0x408] sm:$0xff]
      %v1032 = vld [vmem:[%s3 + $0x410] sm:$0xff]
      %v1033 = vld [vmem:[%s3 + $0x418] sm:$0xff]
      %v1034 = vld [vmem:[%s3 + $0x420] sm:$0xff]
      %v1035 = vld [vmem:[%s3 + $0x428] sm:$0xff]
      %v1036 = vld [vmem:[%s3 + $0x430] sm:$0xff]
      %v1037 = vld [vmem:[%s3 + $0x438] sm:$0xff]
      %v1038 = vld [vmem:[%s3 + $0x440] sm:$0xff]
      %v1039 = vld [vmem:[%s3 + $0x448] sm:$0xff]
      %v1040 = vld [vmem:[%s3 + $0x450] sm:$0xff]
      %v1041 = vld [vmem:[%s3 + $0x458] sm:$0xff]
      %v1042 = vld [vmem:[%s3 + $0x460] sm:$0xff]
      %v1043 = vld [vmem:[%s3 + $0x468] sm:$0xff]
      %v1044 = vld [vmem:[%s3 + $0x470] sm:$0xff]
      %v1045 = vld [vmem:[%s3 + $0x478] sm:$0xff]
      %v1046 = vld [vmem:[%s3 + $0x480] sm:$0xff]
      %v1047 = vld [vmem:[%s3 + $0x488] sm:$0xff]
      %v1048 = vld [vmem:[%s3 + $0x490] sm:$0xff]
      %v1049 = vld [vmem:[%s3 + $0x498] sm:$0xff]
      %v1050 = vld [vmem:[%s3 + $0x4a0] sm:$0xff]
      %v1051 = vld [vmem:[%s3 + $0x4a8] sm:$0xff]
      %v1052 = vld [vmem:[%s3 + $0x4b0] sm:$0xff]
      %v1053 = vld [vmem:[%s3 + $0x4b8] sm:$0xff]
      %v1054 = vld [vmem:[%s3 + $0x4c0] sm:$0xff]
      %v1055 = vld [vmem:[%s3 + $0x4c8] sm:$0xff]
      %v1056 = vld [vmem:[%s3 + $0x4d0] sm:$0xff]
      %v1057 = vld [vmem:[%s3 + $0x4d8] sm:$0xff]
      %v1058 = vld [vmem:[%s3 + $0x4e0] sm:$0xff]
      %v1059 = vld [vmem:[%s3 + $0x4e8] sm:$0xff]
      %v1060 = vld [vmem:[%s3 + $0x4f0] sm:$0xff]
      %v1061 = vld [vmem:[%s3 + $0x4f8] sm:$0xff]
      %v1062 = vld [vmem:[%s3 + $0x500] sm:$0xff]
      %v1063 = vld [vmem:[%s3 + $0x508] sm:$0xff]
      %v1064 = vld [vmem:[%s3 + $0x510] sm:$0xff]
      %v1065 = vld [vmem:[%s3 + $0x518] sm:$0xff]
      %v1066 = vld [vmem:[%s3 + $0x520] sm:$0xff]
      %v1067 = vld [vmem:[%s3 + $0x528] sm:$0xff]
      %v1068 = vld [vmem:[%s3 + $0x530] sm:$0xff]
      %v1069 = vld [vmem:[%s3 + $0x538] sm:$0xff]
      %v1070 = vld [vmem:[%s3 + $0x540] sm:$0xff]
      %v1071 = vld [vmem:[%s3 + $0x548] sm:$0xff]
      %v1072 = vld [vmem:[%s3 + $0x550] sm:$0xff]
      %v1073 = vld [vmem:[%s3 + $0x558] sm:$0xff]
      %v1074 = vld [vmem:[%s3 + $0x560] sm:$0xff]
      %v1075 = vld [vmem:[%s3 + $0x568] sm:$0xff]
      %v1076 = vld [vmem:[%s3 + $0x570] sm:$0xff]
      %v1077 = vld [vmem:[%s3 + $0x578] sm:$0xff]
      %v1078 = vld [vmem:[%s3 + $0x580] sm:$0xff]
      %v1079 = vld [vmem:[%s3 + $0x588] sm:$0xff]
      %v1080 = vld [vmem:[%s3 + $0x590] sm:$0xff]
      %v1081 = vld [vmem:[%s3 + $0x598] sm:$0xff]
      %v1082 = vld [vmem:[%s3 + $0x5a0] sm:$0xff]
      %v1083 = vld [vmem:[%s3 + $0x5a8] sm:$0xff]
      %v1084 = vld [vmem:[%s3 + $0x5b0] sm:$0xff]
      %v1085 = vld [vmem:[%s3 + $0x5b8] sm:$0xff]
      %v1086 = vld [vmem:[%s3 + $0x5c0] sm:$0xff]
      %v1087 = vld [vmem:[%s3 + $0x5c8] sm:$0xff]
      %v1088 = vld [vmem:[%s3 + $0x5d0] sm:$0xff]
      %v1089 = vld [vmem:[%s3 + $0x5d8] sm:$0xff]
      %v1090 = vld [vmem:[%s3 + $0x5e0] sm:$0xff]
      %v1091 = vld [vmem:[%s3 + $0x5e8] sm:$0xff]
      %v1092 = vld [vmem:[%s3 + $0x5f0] sm:$0xff]
      %v1093 = vld [vmem:[%s3 + $0x5f8] sm:$0xff]
      %v1094 = vld [vmem:[%s3 + $0x600] sm:$0xff]
      %v1095 = vld [vmem:[%s3 + $0x608] sm:$0xff]
      %v1096 = vld [vmem:[%s3 + $0x610] sm:$0xff]
      %v1097 = vld [vmem:[%s3 + $0x618] sm:$0xff]
      %v1098 = vld [vmem:[%s3 + $0x620] sm:$0xff]
      %v1099 = vld [vmem:[%s3 + $0x628] sm:$0xff]
      %v1100 = vld [vmem:[%s3 + $0x630] sm:$0xff]
      %v1101 = vld [vmem:[%s3 + $0x638] sm:$0xff]
      %v1102 = vld [vmem:[%s3 + $0x640] sm:$0xff]
      %v1103 = vld [vmem:[%s3 + $0x648] sm:$0xff]
      %v1104 = vld [vmem:[%s3 + $0x650] sm:$0xff]
      %v1105 = vld [vmem:[%s3 + $0x658] sm:$0xff]
      %v1106 = vld [vmem:[%s3 + $0x660] sm:$0xff]
      %v1107 = vld [vmem:[%s3 + $0x668] sm:$0xff]
      %v1108 = vld [vmem:[%s3 + $0x670] sm:$0xff]
      %v1109 = vld [vmem:[%s3 + $0x678] sm:$0xff]
      %v1110 = vld [vmem:[%s3 + $0x680] sm:$0xff]
      %v1111 = vld [vmem:[%s3 + $0x688] sm:$0xff]
      %v1112 = vld [vmem:[%s3 + $0x690] sm:$0xff]
      %v1113 = vld [vmem:[%s3 + $0x698] sm:$0xff]
      %v1114 = vld [vmem:[%s3 + $0x6a0] sm:$0xff]
      %v1115 = vld [vmem:[%s3 + $0x6a8] sm:$0xff]
      %v1116 = vld [vmem:[%s3 + $0x6b0] sm:$0xff]
      %v1117 = vld [vmem:[%s3 + $0x6b8] sm:$0xff]
      %v1118 = vld [vmem:[%s3 + $0x6c0] sm:$0xff]
      %v1119 = vld [vmem:[%s3 + $0x6c8] sm:$0xff]
      %v1120 = vld [vmem:[%s3 + $0x6d0] sm:$0xff]
      %v1121 = vld [vmem:[%s3 + $0x6d8] sm:$0xff]
      %v1122 = vld [vmem:[%s3 + $0x6e0] sm:$0xff]
      %v1123 = vld [vmem:[%s3 + $0x6e8] sm:$0xff]
      %v1124 = vld [vmem:[%s3 + $0x6f0] sm:$0xff]
      %v1125 = vld [vmem:[%s3 + $0x6f8] sm:$0xff]
      %v1126 = vld [vmem:[%s3 + $0x700] sm:$0xff]
      %v1127 = vld [vmem:[%s3 + $0x708] sm:$0xff]
      %v1128 = vld [vmem:[%s3 + $0x710] sm:$0xff]
      %v1129 = vld [vmem:[%s3 + $0x718] sm:$0xff]
      %v1130 = vld [vmem:[%s3 + $0x720] sm:$0xff]
      %v1131 = vld [vmem:[%s3 + $0x728] sm:$0xff]
      %v1132 = vld [vmem:[%s3 + $0x730] sm:$0xff]
      %v1133 = vld [vmem:[%s3 + $0x738] sm:$0xff]
      %v1134 = vld [vmem:[%s3 + $0x740] sm:$0xff]
      %v1135 = vld [vmem:[%s3 + $0x748] sm:$0xff]
      %v1136 = vld [vmem:[%s3 + $0x750] sm:$0xff]
      %v1137 = vld [vmem:[%s3 + $0x758] sm:$0xff]
      %v1138 = vld [vmem:[%s3 + $0x760] sm:$0xff]
      %v1139 = vld [vmem:[%s3 + $0x768] sm:$0xff]
      %v1140 = vld [vmem:[%s3 + $0x770] sm:$0xff]
      %v1141 = vld [vmem:[%s3 + $0x778] sm:$0xff]
      %v1142 = vld [vmem:[%s3 + $0x780] sm:$0xff]
      %v1143 = vld [vmem:[%s3 + $0x788] sm:$0xff]
      %v1144 = vld [vmem:[%s3 + $0x790] sm:$0xff]
      %v1145 = vld [vmem:[%s3 + $0x798] sm:$0xff]
      %v1146 = vld [vmem:[%s3 + $0x7a0] sm:$0xff]
      %v1147 = vld [vmem:[%s3 + $0x7a8] sm:$0xff]
      %v1148 = vld [vmem:[%s3 + $0x7b0] sm:$0xff]
      %v1149 = vld [vmem:[%s3 + $0x7b8] sm:$0xff]
      %v1150 = vld [vmem:[%s3 + $0x7c0] sm:$0xff]
      %v1151 = vld [vmem:[%s3 + $0x7c8] sm:$0xff]
      %v1152 = vld [vmem:[%s3 + $0x7d0] sm:$0xff]
      %v1153 = vld [vmem:[%s3 + $0x7d8] sm:$0xff]
      %v1154 = vld [vmem:[%s3 + $0x7e0] sm:$0xff]
      %v1155 = vld [vmem:[%s3 + $0x7e8] sm:$0xff]
      %v1156 = vld [vmem:[%s3 + $0x7f0] sm:$0xff]
      %v1157 = vld [vmem:[%s3 + $0x7f8] sm:$0xff]
      %v1158 = vld [vmem:[%s3 + $0x800] sm:$0xff]
      %v1159 = vld [vmem:[%s3 + $0x808] sm:$0xff]
      %v1160 = vld [vmem:[%s3 + $0x810] sm:$0xff]
      %v1161 = vld [vmem:[%s3 + $0x818] sm:$0xff]
      %v1162 = vld [vmem:[%s3 + $0x820] sm:$0xff]
      %v1163 = vld [vmem:[%s3 + $0x828] sm:$0xff]
      %v1164 = vld [vmem:[%s3 + $0x830] sm:$0xff]
      %v1165 = vld [vmem:[%s3 + $0x838] sm:$0xff]
      %v1166 = vld [vmem:[%s3 + $0x840] sm:$0xff]
      %v1167 = vld [vmem:[%s3 + $0x848] sm:$0xff]
      %v1168 = vld [vmem:[%s3 + $0x850] sm:$0xff]
      %v1169 = vld [vmem:[%s3 + $0x858] sm:$0xff]
      %v1170 = vld [vmem:[%s3 + $0x860] sm:$0xff]
      %v1171 = vld [vmem:[%s3 + $0x868] sm:$0xff]
      %v1172 = vld [vmem:[%s3 + $0x870] sm:$0xff]
      %v1173 = vld [vmem:[%s3 + $0x878] sm:$0xff]
      %v1174 = vld [vmem:[%s3 + $0x880] sm:$0xff]
      %v1175 = vld [vmem:[%s3 + $0x888] sm:$0xff]
      %v1176 = vld [vmem:[%s3 + $0x890] sm:$0xff]
      %v1177 = vld [vmem:[%s3 + $0x898] sm:$0xff]
      %v1178 = vld [vmem:[%s3 + $0x8a0] sm:$0xff]
      %v1179 = vld [vmem:[%s3 + $0x8a8] sm:$0xff]
      %v1180 = vld [vmem:[%s3 + $0x8b0] sm:$0xff]
      %v1181 = vld [vmem:[%s3 + $0x8b8] sm:$0xff]
      %v1182 = vld [vmem:[%s3 + $0x8c0] sm:$0xff]
      %v1183 = vld [vmem:[%s3 + $0x8c8] sm:$0xff]
      %v1184 = vld [vmem:[%s3 + $0x8d0] sm:$0xff]
      %v1185 = vld [vmem:[%s3 + $0x8d8] sm:$0xff]
      %v1186 = vld [vmem:[%s3 + $0x8e0] sm:$0xff]
      %v1187 = vld [vmem:[%s3 + $0x8e8] sm:$0xff]
      %v1188 = vld [vmem:[%s3 + $0x8f0] sm:$0xff]
      %v1189 = vld [vmem:[%s3 + $0x8f8] sm:$0xff]
      %v1478 = vunpack.c.l.b16 %v902
      %v1479 = vunpack.c.h.b16 %v902
      %v1480 = vunpack.c.l.b16 %v903
      %v1481 = vunpack.c.h.b16 %v903
      %v1482 = vunpack.c.l.b16 %v904
      %v1483 = vunpack.c.h.b16 %v904
      %v1484 = vunpack.c.l.b16 %v905
      %v1485 = vunpack.c.h.b16 %v905
      %v1486 = vunpack.c.l.b16 %v906
      %v1487 = vunpack.c.h.b16 %v906
      %v1488 = vunpack.c.l.b16 %v907
      %v1489 = vunpack.c.h.b16 %v907
      %v1490 = vunpack.c.l.b16 %v908
      %v1491 = vunpack.c.h.b16 %v908
      %v1492 = vunpack.c.l.b16 %v909
      %v1493 = vunpack.c.h.b16 %v909
      %v1494 = vunpack.c.l.b16 %v910
      %v1495 = vunpack.c.h.b16 %v910
      %v1496 = vunpack.c.l.b16 %v911
      %v1497 = vunpack.c.h.b16 %v911
      %v1498 = vunpack.c.l.b16 %v912
      %v1499 = vunpack.c.h.b16 %v912
      %v1500 = vunpack.c.l.b16 %v913
      %v1501 = vunpack.c.h.b16 %v913
      %v1502 = vunpack.c.l.b16 %v914
      %v1503 = vunpack.c.h.b16 %v914
      %v1504 = vunpack.c.l.b16 %v915
      %v1505 = vunpack.c.h.b16 %v915
      %v1506 = vunpack.c.l.b16 %v916
      %v1507 = vunpack.c.h.b16 %v916
      %v1508 = vunpack.c.l.b16 %v917
      %v1509 = vunpack.c.h.b16 %v917
      %v1510 = vunpack.c.l.b16 %v918
      %v1511 = vunpack.c.h.b16 %v918
      %v1512 = vunpack.c.l.b16 %v919
      %v1513 = vunpack.c.h.b16 %v919
      %v1514 = vunpack.c.l.b16 %v920
      %v1515 = vunpack.c.h.b16 %v920
      %v1516 = vunpack.c.l.b16 %v921
      %v1517 = vunpack.c.h.b16 %v921
      %v1518 = vunpack.c.l.b16 %v922
      %v1519 = vunpack.c.h.b16 %v922
      %v1520 = vunpack.c.l.b16 %v923
      %v1521 = vunpack.c.h.b16 %v923
      %v1522 = vunpack.c.l.b16 %v924
      %v1523 = vunpack.c.h.b16 %v924
      %v1524 = vunpack.c.l.b16 %v925
      %v1525 = vunpack.c.h.b16 %v925
      %v1526 = vunpack.c.l.b16 %v926
      %v1527 = vunpack.c.h.b16 %v926
      %v1528 = vunpack.c.l.b16 %v927
      %v1529 = vunpack.c.h.b16 %v927
      %v1530 = vunpack.c.l.b16 %v928
      %v1531 = vunpack.c.h.b16 %v928
      %v1532 = vunpack.c.l.b16 %v929
      %v1533 = vunpack.c.h.b16 %v929
      %v1534 = vunpack.c.l.b16 %v930
      %v1535 = vunpack.c.h.b16 %v930
      %v1536 = vunpack.c.l.b16 %v931
      %v1537 = vunpack.c.h.b16 %v931
      %v1538 = vunpack.c.l.b16 %v932
      %v1539 = vunpack.c.h.b16 %v932
      %v1540 = vunpack.c.l.b16 %v933
      %v1541 = vunpack.c.h.b16 %v933
      %v1542 = vunpack.c.l.b16 %v934
      %v1543 = vunpack.c.h.b16 %v934
      %v1544 = vunpack.c.l.b16 %v935
      %v1545 = vunpack.c.h.b16 %v935
      %v1546 = vunpack.c.l.b16 %v936
      %v1547 = vunpack.c.h.b16 %v936
      %v1548 = vunpack.c.l.b16 %v937
      %v1549 = vunpack.c.h.b16 %v937
      %v1550 = vunpack.c.l.b16 %v938
      %v1551 = vunpack.c.h.b16 %v938
      %v1552 = vunpack.c.l.b16 %v939
      %v1553 = vunpack.c.h.b16 %v939
      %v1554 = vunpack.c.l.b16 %v940
      %v1555 = vunpack.c.h.b16 %v940
      %v1556 = vunpack.c.l.b16 %v941
      %v1557 = vunpack.c.h.b16 %v941
      %v1558 = vunpack.c.l.b16 %v942
      %v1559 = vunpack.c.h.b16 %v942
      %v1560 = vunpack.c.l.b16 %v943
      %v1561 = vunpack.c.h.b16 %v943
      %v1562 = vunpack.c.l.b16 %v944
      %v1563 = vunpack.c.h.b16 %v944
      %v1564 = vunpack.c.l.b16 %v945
      %v1565 = vunpack.c.h.b16 %v945
      %v1566 = vunpack.c.l.b16 %v946
      %v1567 = vunpack.c.h.b16 %v946
      %v1568 = vunpack.c.l.b16 %v947
      %v1569 = vunpack.c.h.b16 %v947
      %v1570 = vunpack.c.l.b16 %v948
      %v1571 = vunpack.c.h.b16 %v948
      %v1572 = vunpack.c.l.b16 %v949
      %v1573 = vunpack.c.h.b16 %v949
      %v1574 = vunpack.c.l.b16 %v950
      %v1575 = vunpack.c.h.b16 %v950
      %v1576 = vunpack.c.l.b16 %v951
      %v1577 = vunpack.c.h.b16 %v951
      %v1578 = vunpack.c.l.b16 %v952
      %v1579 = vunpack.c.h.b16 %v952
      %v1580 = vunpack.c.l.b16 %v953
      %v1581 = vunpack.c.h.b16 %v953
      %v1582 = vunpack.c.l.b16 %v954
      %v1583 = vunpack.c.h.b16 %v954
      %v1584 = vunpack.c.l.b16 %v955
      %v1585 = vunpack.c.h.b16 %v955
      %v1586 = vunpack.c.l.b16 %v956
      %v1587 = vunpack.c.h.b16 %v956
      %v1588 = vunpack.c.l.b16 %v957
      %v1589 = vunpack.c.h.b16 %v957
      %v1590 = vunpack.c.l.b16 %v958
      %v1591 = vunpack.c.h.b16 %v958
      %v1592 = vunpack.c.l.b16 %v959
      %v1593 = vunpack.c.h.b16 %v959
      %v1594 = vunpack.c.l.b16 %v960
      %v1595 = vunpack.c.h.b16 %v960
      %v1596 = vunpack.c.l.b16 %v961
      %v1597 = vunpack.c.h.b16 %v961
      %v1598 = vunpack.c.l.b16 %v962
      %v1599 = vunpack.c.h.b16 %v962
      %v1600 = vunpack.c.l.b16 %v963
      %v1601 = vunpack.c.h.b16 %v963
      %v1602 = vunpack.c.l.b16 %v964
      %v1603 = vunpack.c.h.b16 %v964
      %v1604 = vunpack.c.l.b16 %v965
      %v1605 = vunpack.c.h.b16 %v965
      %v1606 = vunpack.c.l.b16 %v966
      %v1607 = vunpack.c.h.b16 %v966
      %v1608 = vunpack.c.l.b16 %v967
      %v1609 = vunpack.c.h.b16 %v967
      %v1610 = vunpack.c.l.b16 %v968
      %v1611 = vunpack.c.h.b16 %v968
      %v1612 = vunpack.c.l.b16 %v969
      %v1613 = vunpack.c.h.b16 %v969
      %v1614 = vunpack.c.l.b16 %v970
      %v1615 = vunpack.c.h.b16 %v970
      %v1616 = vunpack.c.l.b16 %v971
      %v1617 = vunpack.c.h.b16 %v971
      %v1618 = vunpack.c.l.b16 %v972
      %v1619 = vunpack.c.h.b16 %v972
      %v1620 = vunpack.c.l.b16 %v973
      %v1621 = vunpack.c.h.b16 %v973
      %v1622 = vunpack.c.l.b16 %v974
      %v1623 = vunpack.c.h.b16 %v974
      %v1624 = vunpack.c.l.b16 %v975
      %v1625 = vunpack.c.h.b16 %v975
      %v1626 = vunpack.c.l.b16 %v976
      %v1627 = vunpack.c.h.b16 %v976
      %v1628 = vunpack.c.l.b16 %v977
      %v1629 = vunpack.c.h.b16 %v977
      %v1630 = vunpack.c.l.b16 %v978
      %v1631 = vunpack.c.h.b16 %v978
      %v1632 = vunpack.c.l.b16 %v979
      %v1633 = vunpack.c.h.b16 %v979
      %v1634 = vunpack.c.l.b16 %v980
      %v1635 = vunpack.c.h.b16 %v980
      %v1636 = vunpack.c.l.b16 %v981
      %v1637 = vunpack.c.h.b16 %v981
      %v1638 = vunpack.c.l.b16 %v982
      %v1639 = vunpack.c.h.b16 %v982
      %v1640 = vunpack.c.l.b16 %v983
      %v1641 = vunpack.c.h.b16 %v983
      %v1642 = vunpack.c.l.b16 %v984
      %v1643 = vunpack.c.h.b16 %v984
      %v1644 = vunpack.c.l.b16 %v985
      %v1645 = vunpack.c.h.b16 %v985
      %v1646 = vunpack.c.l.b16 %v986
      %v1647 = vunpack.c.h.b16 %v986
      %v1648 = vunpack.c.l.b16 %v987
      %v1649 = vunpack.c.h.b16 %v987
      %v1650 = vunpack.c.l.b16 %v988
      %v1651 = vunpack.c.h.b16 %v988
      %v1652 = vunpack.c.l.b16 %v989
      %v1653 = vunpack.c.h.b16 %v989
      %v1654 = vunpack.c.l.b16 %v990
      %v1655 = vunpack.c.h.b16 %v990
      %v1656 = vunpack.c.l.b16 %v991
      %v1657 = vunpack.c.h.b16 %v991
      %v1658 = vunpack.c.l.b16 %v992
      %v1659 = vunpack.c.h.b16 %v992
      %v1660 = vunpack.c.l.b16 %v993
      %v1661 = vunpack.c.h.b16 %v993
      %v1662 = vunpack.c.l.b16 %v994
      %v1663 = vunpack.c.h.b16 %v994
      %v1664 = vunpack.c.l.b16 %v995
      %v1665 = vunpack.c.h.b16 %v995
      %v1666 = vunpack.c.l.b16 %v996
      %v1667 = vunpack.c.h.b16 %v996
      %v1668 = vunpack.c.l.b16 %v997
      %v1669 = vunpack.c.h.b16 %v997
      %v1670 = vunpack.c.l.b16 %v998
      %v1671 = vunpack.c.h.b16 %v998
      %v1672 = vunpack.c.l.b16 %v999
      %v1673 = vunpack.c.h.b16 %v999
      %v1674 = vunpack.c.l.b16 %v1000
      %v1675 = vunpack.c.h.b16 %v1000
      %v1676 = vunpack.c.l.b16 %v1001
      %v1677 = vunpack.c.h.b16 %v1001
      %v1678 = vunpack.c.l.b16 %v1002
      %v1679 = vunpack.c.h.b16 %v1002
      %v1680 = vunpack.c.l.b16 %v1003
      %v1681 = vunpack.c.h.b16 %v1003
      %v1682 = vunpack.c.l.b16 %v1004
      %v1683 = vunpack.c.h.b16 %v1004
      %v1684 = vunpack.c.l.b16 %v1005
      %v1685 = vunpack.c.h.b16 %v1005
      %v1686 = vunpack.c.l.b16 %v1006
      %v1687 = vunpack.c.h.b16 %v1006
      %v1688 = vunpack.c.l.b16 %v1007
      %v1689 = vunpack.c.h.b16 %v1007
      %v1690 = vunpack.c.l.b16 %v1008
      %v1691 = vunpack.c.h.b16 %v1008
      %v1692 = vunpack.c.l.b16 %v1009
      %v1693 = vunpack.c.h.b16 %v1009
      %v1694 = vunpack.c.l.b16 %v1010
      %v1695 = vunpack.c.h.b16 %v1010
      %v1696 = vunpack.c.l.b16 %v1011
      %v1697 = vunpack.c.h.b16 %v1011
      %v1698 = vunpack.c.l.b16 %v1012
      %v1699 = vunpack.c.h.b16 %v1012
      %v1700 = vunpack.c.l.b16 %v1013
      %v1701 = vunpack.c.h.b16 %v1013
      %v1702 = vunpack.c.l.b16 %v1014
      %v1703 = vunpack.c.h.b16 %v1014
      %v1704 = vunpack.c.l.b16 %v1015
      %v1705 = vunpack.c.h.b16 %v1015
      %v1706 = vunpack.c.l.b16 %v1016
      %v1707 = vunpack.c.h.b16 %v1016
      %v1708 = vunpack.c.l.b16 %v1017
      %v1709 = vunpack.c.h.b16 %v1017
      %v1710 = vunpack.c.l.b16 %v1018
      %v1711 = vunpack.c.h.b16 %v1018
      %v1712 = vunpack.c.l.b16 %v1019
      %v1713 = vunpack.c.h.b16 %v1019
      %v1714 = vunpack.c.l.b16 %v1020
      %v1715 = vunpack.c.h.b16 %v1020
      %v1716 = vunpack.c.l.b16 %v1021
      %v1717 = vunpack.c.h.b16 %v1021
      %v1718 = vunpack.c.l.b16 %v1022
      %v1719 = vunpack.c.h.b16 %v1022
      %v1720 = vunpack.c.l.b16 %v1023
      %v1721 = vunpack.c.h.b16 %v1023
      %v1722 = vunpack.c.l.b16 %v1024
      %v1723 = vunpack.c.h.b16 %v1024
      %v1724 = vunpack.c.l.b16 %v1025
      %v1725 = vunpack.c.h.b16 %v1025
      %v1726 = vunpack.c.l.b16 %v1026
      %v1727 = vunpack.c.h.b16 %v1026
      %v1728 = vunpack.c.l.b16 %v1027
      %v1729 = vunpack.c.h.b16 %v1027
      %v1730 = vunpack.c.l.b16 %v1028
      %v1731 = vunpack.c.h.b16 %v1028
      %v1732 = vunpack.c.l.b16 %v1029
      %v1733 = vunpack.c.h.b16 %v1029
      %v1734 = vunpack.c.l.b16 %v1030
      %v1735 = vunpack.c.h.b16 %v1030
      %v1736 = vunpack.c.l.b16 %v1031
      %v1737 = vunpack.c.h.b16 %v1031
      %v1738 = vunpack.c.l.b16 %v1032
      %v1739 = vunpack.c.h.b16 %v1032
      %v1740 = vunpack.c.l.b16 %v1033
      %v1741 = vunpack.c.h.b16 %v1033
      %v1742 = vunpack.c.l.b16 %v1034
      %v1743 = vunpack.c.h.b16 %v1034
      %v1744 = vunpack.c.l.b16 %v1035
      %v1745 = vunpack.c.h.b16 %v1035
      %v1746 = vunpack.c.l.b16 %v1036
      %v1747 = vunpack.c.h.b16 %v1036
      %v1748 = vunpack.c.l.b16 %v1037
      %v1749 = vunpack.c.h.b16 %v1037
      %v1750 = vunpack.c.l.b16 %v1038
      %v1751 = vunpack.c.h.b16 %v1038
      %v1752 = vunpack.c.l.b16 %v1039
      %v1753 = vunpack.c.h.b16 %v1039
      %v1754 = vunpack.c.l.b16 %v1040
      %v1755 = vunpack.c.h.b16 %v1040
      %v1756 = vunpack.c.l.b16 %v1041
      %v1757 = vunpack.c.h.b16 %v1041
      %v1758 = vunpack.c.l.b16 %v1042
      %v1759 = vunpack.c.h.b16 %v1042
      %v1760 = vunpack.c.l.b16 %v1043
      %v1761 = vunpack.c.h.b16 %v1043
      %v1762 = vunpack.c.l.b16 %v1044
      %v1763 = vunpack.c.h.b16 %v1044
      %v1764 = vunpack.c.l.b16 %v1045
      %v1765 = vunpack.c.h.b16 %v1045
      %v1766 = vunpack.c.l.b16 %v1046
      %v1767 = vunpack.c.h.b16 %v1046
      %v1768 = vunpack.c.l.b16 %v1047
      %v1769 = vunpack.c.h.b16 %v1047
      %v1770 = vunpack.c.l.b16 %v1048
      %v1771 = vunpack.c.h.b16 %v1048
      %v1772 = vunpack.c.l.b16 %v1049
      %v1773 = vunpack.c.h.b16 %v1049
      %v1774 = vunpack.c.l.b16 %v1050
      %v1775 = vunpack.c.h.b16 %v1050
      %v1776 = vunpack.c.l.b16 %v1051
      %v1777 = vunpack.c.h.b16 %v1051
      %v1778 = vunpack.c.l.b16 %v1052
      %v1779 = vunpack.c.h.b16 %v1052
      %v1780 = vunpack.c.l.b16 %v1053
      %v1781 = vunpack.c.h.b16 %v1053
      %v1782 = vunpack.c.l.b16 %v1054
      %v1783 = vunpack.c.h.b16 %v1054
      %v1784 = vunpack.c.l.b16 %v1055
      %v1785 = vunpack.c.h.b16 %v1055
      %v1786 = vunpack.c.l.b16 %v1056
      %v1787 = vunpack.c.h.b16 %v1056
      %v1788 = vunpack.c.l.b16 %v1057
      %v1789 = vunpack.c.h.b16 %v1057
      %v1790 = vunpack.c.l.b16 %v1058
      %v1791 = vunpack.c.h.b16 %v1058
      %v1792 = vunpack.c.l.b16 %v1059
      %v1793 = vunpack.c.h.b16 %v1059
      %v1794 = vunpack.c.l.b16 %v1060
      %v1795 = vunpack.c.h.b16 %v1060
      %v1796 = vunpack.c.l.b16 %v1061
      %v1797 = vunpack.c.h.b16 %v1061
      %v1798 = vunpack.c.l.b16 %v1062
      %v1799 = vunpack.c.h.b16 %v1062
      %v1800 = vunpack.c.l.b16 %v1063
      %v1801 = vunpack.c.h.b16 %v1063
      %v1802 = vunpack.c.l.b16 %v1064
      %v1803 = vunpack.c.h.b16 %v1064
      %v1804 = vunpack.c.l.b16 %v1065
      %v1805 = vunpack.c.h.b16 %v1065
      %v1806 = vunpack.c.l.b16 %v1066
      %v1807 = vunpack.c.h.b16 %v1066
      %v1808 = vunpack.c.l.b16 %v1067
      %v1809 = vunpack.c.h.b16 %v1067
      %v1810 = vunpack.c.l.b16 %v1068
      %v1811 = vunpack.c.h.b16 %v1068
      %v1812 = vunpack.c.l.b16 %v1069
      %v1813 = vunpack.c.h.b16 %v1069
      %v1814 = vunpack.c.l.b16 %v1070
      %v1815 = vunpack.c.h.b16 %v1070
      %v1816 = vunpack.c.l.b16 %v1071
      %v1817 = vunpack.c.h.b16 %v1071
      %v1818 = vunpack.c.l.b16 %v1072
      %v1819 = vunpack.c.h.b16 %v1072
      %v1820 = vunpack.c.l.b16 %v1073
      %v1821 = vunpack.c.h.b16 %v1073
      %v1822 = vunpack.c.l.b16 %v1074
      %v1823 = vunpack.c.h.b16 %v1074
      %v1824 = vunpack.c.l.b16 %v1075
      %v1825 = vunpack.c.h.b16 %v1075
      %v1826 = vunpack.c.l.b16 %v1076
      %v1827 = vunpack.c.h.b16 %v1076
      %v1828 = vunpack.c.l.b16 %v1077
      %v1829 = vunpack.c.h.b16 %v1077
      %v1830 = vunpack.c.l.b16 %v1078
      %v1831 = vunpack.c.h.b16 %v1078
      %v1832 = vunpack.c.l.b16 %v1079
      %v1833 = vunpack.c.h.b16 %v1079
      %v1834 = vunpack.c.l.b16 %v1080
      %v1835 = vunpack.c.h.b16 %v1080
      %v1836 = vunpack.c.l.b16 %v1081
      %v1837 = vunpack.c.h.b16 %v1081
      %v1838 = vunpack.c.l.b16 %v1082
      %v1839 = vunpack.c.h.b16 %v1082
      %v1840 = vunpack.c.l.b16 %v1083
      %v1841 = vunpack.c.h.b16 %v1083
      %v1842 = vunpack.c.l.b16 %v1084
      %v1843 = vunpack.c.h.b16 %v1084
      %v1844 = vunpack.c.l.b16 %v1085
      %v1845 = vunpack.c.h.b16 %v1085
      %v1846 = vunpack.c.l.b16 %v1086
      %v1847 = vunpack.c.h.b16 %v1086
      %v1848 = vunpack.c.l.b16 %v1087
      %v1849 = vunpack.c.h.b16 %v1087
      %v1850 = vunpack.c.l.b16 %v1088
      %v1851 = vunpack.c.h.b16 %v1088
      %v1852 = vunpack.c.l.b16 %v1089
      %v1853 = vunpack.c.h.b16 %v1089
      %v1854 = vunpack.c.l.b16 %v1090
      %v1855 = vunpack.c.h.b16 %v1090
      %v1856 = vunpack.c.l.b16 %v1091
      %v1857 = vunpack.c.h.b16 %v1091
      %v1858 = vunpack.c.l.b16 %v1092
      %v1859 = vunpack.c.h.b16 %v1092
      %v1860 = vunpack.c.l.b16 %v1093
      %v1861 = vunpack.c.h.b16 %v1093
      %v1862 = vunpack.c.l.b16 %v1094
      %v1863 = vunpack.c.h.b16 %v1094
      %v1864 = vunpack.c.l.b16 %v1095
      %v1865 = vunpack.c.h.b16 %v1095
      %v1866 = vunpack.c.l.b16 %v1096
      %v1867 = vunpack.c.h.b16 %v1096
      %v1868 = vunpack.c.l.b16 %v1097
      %v1869 = vunpack.c.h.b16 %v1097
      %v1870 = vunpack.c.l.b16 %v1098
      %v1871 = vunpack.c.h.b16 %v1098
      %v1872 = vunpack.c.l.b16 %v1099
      %v1873 = vunpack.c.h.b16 %v1099
      %v1874 = vunpack.c.l.b16 %v1100
      %v1875 = vunpack.c.h.b16 %v1100
      %v1876 = vunpack.c.l.b16 %v1101
      %v1877 = vunpack.c.h.b16 %v1101
      %v1878 = vunpack.c.l.b16 %v1102
      %v1879 = vunpack.c.h.b16 %v1102
      %v1880 = vunpack.c.l.b16 %v1103
      %v1881 = vunpack.c.h.b16 %v1103
      %v1882 = vunpack.c.l.b16 %v1104
      %v1883 = vunpack.c.h.b16 %v1104
      %v1884 = vunpack.c.l.b16 %v1105
      %v1885 = vunpack.c.h.b16 %v1105
      %v1886 = vunpack.c.l.b16 %v1106
      %v1887 = vunpack.c.h.b16 %v1106
      %v1888 = vunpack.c.l.b16 %v1107
      %v1889 = vunpack.c.h.b16 %v1107
      %v1890 = vunpack.c.l.b16 %v1108
      %v1891 = vunpack.c.h.b16 %v1108
      %v1892 = vunpack.c.l.b16 %v1109
      %v1893 = vunpack.c.h.b16 %v1109
      %v1894 = vunpack.c.l.b16 %v1110
      %v1895 = vunpack.c.h.b16 %v1110
      %v1896 = vunpack.c.l.b16 %v1111
      %v1897 = vunpack.c.h.b16 %v1111
      %v1898 = vunpack.c.l.b16 %v1112
      %v1899 = vunpack.c.h.b16 %v1112
      %v1900 = vunpack.c.l.b16 %v1113
      %v1901 = vunpack.c.h.b16 %v1113
      %v1902 = vunpack.c.l.b16 %v1114
      %v1903 = vunpack.c.h.b16 %v1114
      %v1904 = vunpack.c.l.b16 %v1115
      %v1905 = vunpack.c.h.b16 %v1115
      %v1906 = vunpack.c.l.b16 %v1116
      %v1907 = vunpack.c.h.b16 %v1116
      %v1908 = vunpack.c.l.b16 %v1117
      %v1909 = vunpack.c.h.b16 %v1117
      %v1910 = vunpack.c.l.b16 %v1118
      %v1911 = vunpack.c.h.b16 %v1118
      %v1912 = vunpack.c.l.b16 %v1119
      %v1913 = vunpack.c.h.b16 %v1119
      %v1914 = vunpack.c.l.b16 %v1120
      %v1915 = vunpack.c.h.b16 %v1120
      %v1916 = vunpack.c.l.b16 %v1121
      %v1917 = vunpack.c.h.b16 %v1121
      %v1918 = vunpack.c.l.b16 %v1122
      %v1919 = vunpack.c.h.b16 %v1122
      %v1920 = vunpack.c.l.b16 %v1123
      %v1921 = vunpack.c.h.b16 %v1123
      %v1922 = vunpack.c.l.b16 %v1124
      %v1923 = vunpack.c.h.b16 %v1124
      %v1924 = vunpack.c.l.b16 %v1125
      %v1925 = vunpack.c.h.b16 %v1125
      %v1926 = vunpack.c.l.b16 %v1126
      %v1927 = vunpack.c.h.b16 %v1126
      %v1928 = vunpack.c.l.b16 %v1127
      %v1929 = vunpack.c.h.b16 %v1127
      %v1930 = vunpack.c.l.b16 %v1128
      %v1931 = vunpack.c.h.b16 %v1128
      %v1932 = vunpack.c.l.b16 %v1129
      %v1933 = vunpack.c.h.b16 %v1129
      %v1934 = vunpack.c.l.b16 %v1130
      %v1935 = vunpack.c.h.b16 %v1130
      %v1936 = vunpack.c.l.b16 %v1131
      %v1937 = vunpack.c.h.b16 %v1131
      %v1938 = vunpack.c.l.b16 %v1132
      %v1939 = vunpack.c.h.b16 %v1132
      %v1940 = vunpack.c.l.b16 %v1133
      %v1941 = vunpack.c.h.b16 %v1133
      %v1942 = vunpack.c.l.b16 %v1134
      %v1943 = vunpack.c.h.b16 %v1134
      %v1944 = vunpack.c.l.b16 %v1135
      %v1945 = vunpack.c.h.b16 %v1135
      %v1946 = vunpack.c.l.b16 %v1136
      %v1947 = vunpack.c.h.b16 %v1136
      %v1948 = vunpack.c.l.b16 %v1137
      %v1949 = vunpack.c.h.b16 %v1137
      %v1950 = vunpack.c.l.b16 %v1138
      %v1951 = vunpack.c.h.b16 %v1138
      %v1952 = vunpack.c.l.b16 %v1139
      %v1953 = vunpack.c.h.b16 %v1139
      %v1954 = vunpack.c.l.b16 %v1140
      %v1955 = vunpack.c.h.b16 %v1140
      %v1956 = vunpack.c.l.b16 %v1141
      %v1957 = vunpack.c.h.b16 %v1141
      %v1958 = vunpack.c.l.b16 %v1142
      %v1959 = vunpack.c.h.b16 %v1142
      %v1960 = vunpack.c.l.b16 %v1143
      %v1961 = vunpack.c.h.b16 %v1143
      %v1962 = vunpack.c.l.b16 %v1144
      %v1963 = vunpack.c.h.b16 %v1144
      %v1964 = vunpack.c.l.b16 %v1145
      %v1965 = vunpack.c.h.b16 %v1145
      %v1966 = vunpack.c.l.b16 %v1146
      %v1967 = vunpack.c.h.b16 %v1146
      %v1968 = vunpack.c.l.b16 %v1147
      %v1969 = vunpack.c.h.b16 %v1147
      %v1970 = vunpack.c.l.b16 %v1148
      %v1971 = vunpack.c.h.b16 %v1148
      %v1972 = vunpack.c.l.b16 %v1149
      %v1973 = vunpack.c.h.b16 %v1149
      %v1974 = vunpack.c.l.b16 %v1150
      %v1975 = vunpack.c.h.b16 %v1150
      %v1976 = vunpack.c.l.b16 %v1151
      %v1977 = vunpack.c.h.b16 %v1151
      %v1978 = vunpack.c.l.b16 %v1152
      %v1979 = vunpack.c.h.b16 %v1152
      %v1980 = vunpack.c.l.b16 %v1153
      %v1981 = vunpack.c.h.b16 %v1153
      %v1982 = vunpack.c.l.b16 %v1154
      %v1983 = vunpack.c.h.b16 %v1154
      %v1984 = vunpack.c.l.b16 %v1155
      %v1985 = vunpack.c.h.b16 %v1155
      %v1986 = vunpack.c.l.b16 %v1156
      %v1987 = vunpack.c.h.b16 %v1156
      %v1988 = vunpack.c.l.b16 %v1157
      %v1989 = vunpack.c.h.b16 %v1157
      %v1990 = vunpack.c.l.b16 %v1158
      %v1991 = vunpack.c.h.b16 %v1158
      %v1992 = vunpack.c.l.b16 %v1159
      %v1993 = vunpack.c.h.b16 %v1159
      %v1994 = vunpack.c.l.b16 %v1160
      %v1995 = vunpack.c.h.b16 %v1160
      %v1996 = vunpack.c.l.b16 %v1161
      %v1997 = vunpack.c.h.b16 %v1161
      %v1998 = vunpack.c.l.b16 %v1162
      %v1999 = vunpack.c.h.b16 %v1162
      %v2000 = vunpack.c.l.b16 %v1163
      %v2001 = vunpack.c.h.b16 %v1163
      %v2002 = vunpack.c.l.b16 %v1164
      %v2003 = vunpack.c.h.b16 %v1164
      %v2004 = vunpack.c.l.b16 %v1165
      %v2005 = vunpack.c.h.b16 %v1165
      %v2006 = vunpack.c.l.b16 %v1166
      %v2007 = vunpack.c.h.b16 %v1166
      %v2008 = vunpack.c.l.b16 %v1167
      %v2009 = vunpack.c.h.b16 %v1167
      %v2010 = vunpack.c.l.b16 %v1168
      %v2011 = vunpack.c.h.b16 %v1168
      %v2012 = vunpack.c.l.b16 %v1169
      %v2013 = vunpack.c.h.b16 %v1169
      %v2014 = vunpack.c.l.b16 %v1170
      %v2015 = vunpack.c.h.b16 %v1170
      %v2016 = vunpack.c.l.b16 %v1171
      %v2017 = vunpack.c.h.b16 %v1171
      %v2018 = vunpack.c.l.b16 %v1172
      %v2019 = vunpack.c.h.b16 %v1172
      %v2020 = vunpack.c.l.b16 %v1173
      %v2021 = vunpack.c.h.b16 %v1173
      %v2022 = vunpack.c.l.b16 %v1174
      %v2023 = vunpack.c.h.b16 %v1174
      %v2024 = vunpack.c.l.b16 %v1175
      %v2025 = vunpack.c.h.b16 %v1175
      %v2026 = vunpack.c.l.b16 %v1176
      %v2027 = vunpack.c.h.b16 %v1176
      %v2028 = vunpack.c.l.b16 %v1177
      %v2029 = vunpack.c.h.b16 %v1177
      %v2030 = vunpack.c.l.b16 %v1178
      %v2031 = vunpack.c.h.b16 %v1178
      %v2032 = vunpack.c.l.b16 %v1179
      %v2033 = vunpack.c.h.b16 %v1179
      %v2034 = vunpack.c.l.b16 %v1180
      %v2035 = vunpack.c.h.b16 %v1180
      %v2036 = vunpack.c.l.b16 %v1181
      %v2037 = vunpack.c.h.b16 %v1181
      %v2038 = vunpack.c.l.b16 %v1182
      %v2039 = vunpack.c.h.b16 %v1182
      %v2040 = vunpack.c.l.b16 %v1183
      %v2041 = vunpack.c.h.b16 %v1183
      %v2042 = vunpack.c.l.b16 %v1184
      %v2043 = vunpack.c.h.b16 %v1184
      %v2044 = vunpack.c.l.b16 %v1185
      %v2045 = vunpack.c.h.b16 %v1185
      %v2046 = vunpack.c.l.b16 %v1186
      %v2047 = vunpack.c.h.b16 %v1186
      %v2048 = vunpack.c.l.b16 %v1187
      %v2049 = vunpack.c.h.b16 %v1187
      %v2050 = vunpack.c.l.b16 %v1188
      %v2051 = vunpack.c.h.b16 %v1188
      %v2052 = vunpack.c.l.b16 %v1189
      %v2053 = vunpack.c.h.b16 %v1189
      %v2054 = vpack.c.b16 %v1480, %v1478
      %v2055 = vpack.c.b16 %v1481, %v1479
      %v2056 = vpack.c.b16 %v1484, %v1482
      %v2057 = vpack.c.b16 %v1485, %v1483
      %v2058 = vpack.c.b16 %v1488, %v1486
      %v2059 = vpack.c.b16 %v1489, %v1487
      %v2060 = vpack.c.b16 %v1492, %v1490
      %v2061 = vpack.c.b16 %v1493, %v1491
      %v2062 = vpack.c.b16 %v1496, %v1494
      %v2063 = vpack.c.b16 %v1497, %v1495
      %v2064 = vpack.c.b16 %v1500, %v1498
      %v2065 = vpack.c.b16 %v1501, %v1499
      %v2066 = vpack.c.b16 %v1504, %v1502
      %v2067 = vpack.c.b16 %v1505, %v1503
      %v2068 = vpack.c.b16 %v1508, %v1506
      %v2069 = vpack.c.b16 %v1509, %v1507
      %v2070 = vpack.c.b16 %v1512, %v1510
      %v2071 = vpack.c.b16 %v1513, %v1511
      %v2072 = vpack.c.b16 %v1516, %v1514
      %v2073 = vpack.c.b16 %v1517, %v1515
      %v2074 = vpack.c.b16 %v1520, %v1518
      %v2075 = vpack.c.b16 %v1521, %v1519
      %v2076 = vpack.c.b16 %v1524, %v1522
      %v2077 = vpack.c.b16 %v1525, %v1523
      %v2078 = vpack.c.b16 %v1528, %v1526
      %v2079 = vpack.c.b16 %v1529, %v1527
      %v2080 = vpack.c.b16 %v1532, %v1530
      %v2081 = vpack.c.b16 %v1533, %v1531
      %v2082 = vpack.c.b16 %v1536, %v1534
      %v2083 = vpack.c.b16 %v1537, %v1535
      %v2084 = vpack.c.b16 %v1540, %v1538
      %v2085 = vpack.c.b16 %v1541, %v1539
      %v2086 = vpack.c.b16 %v1544, %v1542
      %v2087 = vpack.c.b16 %v1545, %v1543
      %v2088 = vpack.c.b16 %v1548, %v1546
      %v2089 = vpack.c.b16 %v1549, %v1547
      %v2090 = vpack.c.b16 %v1552, %v1550
      %v2091 = vpack.c.b16 %v1553, %v1551
      %v2092 = vpack.c.b16 %v1556, %v1554
      %v2093 = vpack.c.b16 %v1557, %v1555
      %v2094 = vpack.c.b16 %v1560, %v1558
      %v2095 = vpack.c.b16 %v1561, %v1559
      %v2096 = vpack.c.b16 %v1564, %v1562
      %v2097 = vpack.c.b16 %v1565, %v1563
      %v2098 = vpack.c.b16 %v1568, %v1566
      %v2099 = vpack.c.b16 %v1569, %v1567
      %v2100 = vpack.c.b16 %v1572, %v1570
      %v2101 = vpack.c.b16 %v1573, %v1571
      %v2102 = vpack.c.b16 %v1576, %v1574
      %v2103 = vpack.c.b16 %v1577, %v1575
      %v2104 = vpack.c.b16 %v1580, %v1578
      %v2105 = vpack.c.b16 %v1581, %v1579
      %v2106 = vpack.c.b16 %v1584, %v1582
      %v2107 = vpack.c.b16 %v1585, %v1583
      %v2108 = vpack.c.b16 %v1588, %v1586
      %v2109 = vpack.c.b16 %v1589, %v1587
      %v2110 = vpack.c.b16 %v1592, %v1590
      %v2111 = vpack.c.b16 %v1593, %v1591
      %v2112 = vpack.c.b16 %v1596, %v1594
      %v2113 = vpack.c.b16 %v1597, %v1595
      %v2114 = vpack.c.b16 %v1600, %v1598
      %v2115 = vpack.c.b16 %v1601, %v1599
      %v2116 = vpack.c.b16 %v1604, %v1602
      %v2117 = vpack.c.b16 %v1605, %v1603
      %v2118 = vpack.c.b16 %v1608, %v1606
      %v2119 = vpack.c.b16 %v1609, %v1607
      %v2120 = vpack.c.b16 %v1612, %v1610
      %v2121 = vpack.c.b16 %v1613, %v1611
      %v2122 = vpack.c.b16 %v1616, %v1614
      %v2123 = vpack.c.b16 %v1617, %v1615
      %v2124 = vpack.c.b16 %v1620, %v1618
      %v2125 = vpack.c.b16 %v1621, %v1619
      %v2126 = vpack.c.b16 %v1624, %v1622
      %v2127 = vpack.c.b16 %v1625, %v1623
      %v2128 = vpack.c.b16 %v1628, %v1626
      %v2129 = vpack.c.b16 %v1629, %v1627
      %v2130 = vpack.c.b16 %v1632, %v1630
      %v2131 = vpack.c.b16 %v1633, %v1631
      %v2132 = vpack.c.b16 %v1636, %v1634
      %v2133 = vpack.c.b16 %v1637, %v1635
      %v2134 = vpack.c.b16 %v1640, %v1638
      %v2135 = vpack.c.b16 %v1641, %v1639
      %v2136 = vpack.c.b16 %v1644, %v1642
      %v2137 = vpack.c.b16 %v1645, %v1643
      %v2138 = vpack.c.b16 %v1648, %v1646
      %v2139 = vpack.c.b16 %v1649, %v1647
      %v2140 = vpack.c.b16 %v1652, %v1650
      %v2141 = vpack.c.b16 %v1653, %v1651
      %v2142 = vpack.c.b16 %v1656, %v1654
      %v2143 = vpack.c.b16 %v1657, %v1655
      %v2144 = vpack.c.b16 %v1660, %v1658
      %v2145 = vpack.c.b16 %v1661, %v1659
      %v2146 = vpack.c.b16 %v1664, %v1662
      %v2147 = vpack.c.b16 %v1665, %v1663
      %v2148 = vpack.c.b16 %v1668, %v1666
      %v2149 = vpack.c.b16 %v1669, %v1667
      %v2150 = vpack.c.b16 %v1672, %v1670
      %v2151 = vpack.c.b16 %v1673, %v1671
      %v2152 = vpack.c.b16 %v1676, %v1674
      %v2153 = vpack.c.b16 %v1677, %v1675
      %v2154 = vpack.c.b16 %v1680, %v1678
      %v2155 = vpack.c.b16 %v1681, %v1679
      %v2156 = vpack.c.b16 %v1684, %v1682
      %v2157 = vpack.c.b16 %v1685, %v1683
      %v2158 = vpack.c.b16 %v1688, %v1686
      %v2159 = vpack.c.b16 %v1689, %v1687
      %v2160 = vpack.c.b16 %v1692, %v1690
      %v2161 = vpack.c.b16 %v1693, %v1691
      %v2162 = vpack.c.b16 %v1696, %v1694
      %v2163 = vpack.c.b16 %v1697, %v1695
      %v2164 = vpack.c.b16 %v1700, %v1698
      %v2165 = vpack.c.b16 %v1701, %v1699
      %v2166 = vpack.c.b16 %v1704, %v1702
      %v2167 = vpack.c.b16 %v1705, %v1703
      %v2168 = vpack.c.b16 %v1708, %v1706
      %v2169 = vpack.c.b16 %v1709, %v1707
      %v2170 = vpack.c.b16 %v1712, %v1710
      %v2171 = vpack.c.b16 %v1713, %v1711
      %v2172 = vpack.c.b16 %v1716, %v1714
      %v2173 = vpack.c.b16 %v1717, %v1715
      %v2174 = vpack.c.b16 %v1720, %v1718
      %v2175 = vpack.c.b16 %v1721, %v1719
      %v2176 = vpack.c.b16 %v1724, %v1722
      %v2177 = vpack.c.b16 %v1725, %v1723
      %v2178 = vpack.c.b16 %v1728, %v1726
      %v2179 = vpack.c.b16 %v1729, %v1727
      %v2180 = vpack.c.b16 %v1732, %v1730
      %v2181 = vpack.c.b16 %v1733, %v1731
      %v2182 = vpack.c.b16 %v1736, %v1734
      %v2183 = vpack.c.b16 %v1737, %v1735
      %v2184 = vpack.c.b16 %v1740, %v1738
      %v2185 = vpack.c.b16 %v1741, %v1739
      %v2186 = vpack.c.b16 %v1744, %v1742
      %v2187 = vpack.c.b16 %v1745, %v1743
      %v2188 = vpack.c.b16 %v1748, %v1746
      %v2189 = vpack.c.b16 %v1749, %v1747
      %v2190 = vpack.c.b16 %v1752, %v1750
      %v2191 = vpack.c.b16 %v1753, %v1751
      %v2192 = vpack.c.b16 %v1756, %v1754
      %v2193 = vpack.c.b16 %v1757, %v1755
      %v2194 = vpack.c.b16 %v1760, %v1758
      %v2195 = vpack.c.b16 %v1761, %v1759
      %v2196 = vpack.c.b16 %v1764, %v1762
      %v2197 = vpack.c.b16 %v1765, %v1763
      %v2198 = vpack.c.b16 %v1768, %v1766
      %v2199 = vpack.c.b16 %v1769, %v1767
      %v2200 = vpack.c.b16 %v1772, %v1770
      %v2201 = vpack.c.b16 %v1773, %v1771
      %v2202 = vpack.c.b16 %v1776, %v1774
      %v2203 = vpack.c.b16 %v1777, %v1775
      %v2204 = vpack.c.b16 %v1780, %v1778
      %v2205 = vpack.c.b16 %v1781, %v1779
      %v2206 = vpack.c.b16 %v1784, %v1782
      %v2207 = vpack.c.b16 %v1785, %v1783
      %v2208 = vpack.c.b16 %v1788, %v1786
      %v2209 = vpack.c.b16 %v1789, %v1787
      %v2210 = vpack.c.b16 %v1792, %v1790
      %v2211 = vpack.c.b16 %v1793, %v1791
      %v2212 = vpack.c.b16 %v1796, %v1794
      %v2213 = vpack.c.b16 %v1797, %v1795
      %v2214 = vpack.c.b16 %v1800, %v1798
      %v2215 = vpack.c.b16 %v1801, %v1799
      %v2216 = vpack.c.b16 %v1804, %v1802
      %v2217 = vpack.c.b16 %v1805, %v1803
      %v2218 = vpack.c.b16 %v1808, %v1806
      %v2219 = vpack.c.b16 %v1809, %v1807
      %v2220 = vpack.c.b16 %v1812, %v1810
      %v2221 = vpack.c.b16 %v1813, %v1811
      %v2222 = vpack.c.b16 %v1816, %v1814
      %v2223 = vpack.c.b16 %v1817, %v1815
      %v2224 = vpack.c.b16 %v1820, %v1818
      %v2225 = vpack.c.b16 %v1821, %v1819
      %v2226 = vpack.c.b16 %v1824, %v1822
      %v2227 = vpack.c.b16 %v1825, %v1823
      %v2228 = vpack.c.b16 %v1828, %v1826
      %v2229 = vpack.c.b16 %v1829, %v1827
      %v2230 = vpack.c.b16 %v1832, %v1830
      %v2231 = vpack.c.b16 %v1833, %v1831
      %v2232 = vpack.c.b16 %v1836, %v1834
      %v2233 = vpack.c.b16 %v1837, %v1835
      %v2234 = vpack.c.b16 %v1840, %v1838
      %v2235 = vpack.c.b16 %v1841, %v1839
      %v2236 = vpack.c.b16 %v1844, %v1842
      %v2237 = vpack.c.b16 %v1845, %v1843
      %v2238 = vpack.c.b16 %v1848, %v1846
      %v2239 = vpack.c.b16 %v1849, %v1847
      %v2240 = vpack.c.b16 %v1852, %v1850
      %v2241 = vpack.c.b16 %v1853, %v1851
      %v2242 = vpack.c.b16 %v1856, %v1854
      %v2243 = vpack.c.b16 %v1857, %v1855
      %v2244 = vpack.c.b16 %v1860, %v1858
      %v2245 = vpack.c.b16 %v1861, %v1859
      %v2246 = vpack.c.b16 %v1864, %v1862
      %v2247 = vpack.c.b16 %v1865, %v1863
      %v2248 = vpack.c.b16 %v1868, %v1866
      %v2249 = vpack.c.b16 %v1869, %v1867
      %v2250 = vpack.c.b16 %v1872, %v1870
      %v2251 = vpack.c.b16 %v1873, %v1871
      %v2252 = vpack.c.b16 %v1876, %v1874
      %v2253 = vpack.c.b16 %v1877, %v1875
      %v2254 = vpack.c.b16 %v1880, %v1878
      %v2255 = vpack.c.b16 %v1881, %v1879
      %v2256 = vpack.c.b16 %v1884, %v1882
      %v2257 = vpack.c.b16 %v1885, %v1883
      %v2258 = vpack.c.b16 %v1888, %v1886
      %v2259 = vpack.c.b16 %v1889, %v1887
      %v2260 = vpack.c.b16 %v1892, %v1890
      %v2261 = vpack.c.b16 %v1893, %v1891
      %v2262 = vpack.c.b16 %v1896, %v1894
      %v2263 = vpack.c.b16 %v1897, %v1895
      %v2264 = vpack.c.b16 %v1900, %v1898
      %v2265 = vpack.c.b16 %v1901, %v1899
      %v2266 = vpack.c.b16 %v1904, %v1902
      %v2267 = vpack.c.b16 %v1905, %v1903
      %v2268 = vpack.c.b16 %v1908, %v1906
      %v2269 = vpack.c.b16 %v1909, %v1907
      %v2270 = vpack.c.b16 %v1912, %v1910
      %v2271 = vpack.c.b16 %v1913, %v1911
      %v2272 = vpack.c.b16 %v1916, %v1914
      %v2273 = vpack.c.b16 %v1917, %v1915
      %v2274 = vpack.c.b16 %v1920, %v1918
      %v2275 = vpack.c.b16 %v1921, %v1919
      %v2276 = vpack.c.b16 %v1924, %v1922
      %v2277 = vpack.c.b16 %v1925, %v1923
      %v2278 = vpack.c.b16 %v1928, %v1926
      %v2279 = vpack.c.b16 %v1929, %v1927
      %v2280 = vpack.c.b16 %v1932, %v1930
      %v2281 = vpack.c.b16 %v1933, %v1931
      %v2282 = vpack.c.b16 %v1936, %v1934
      %v2283 = vpack.c.b16 %v1937, %v1935
      %v2284 = vpack.c.b16 %v1940, %v1938
      %v2285 = vpack.c.b16 %v1941, %v1939
      %v2286 = vpack.c.b16 %v1944, %v1942
      %v2287 = vpack.c.b16 %v1945, %v1943
      %v2288 = vpack.c.b16 %v1948, %v1946
      %v2289 = vpack.c.b16 %v1949, %v1947
      %v2290 = vpack.c.b16 %v1952, %v1950
      %v2291 = vpack.c.b16 %v1953, %v1951
      %v2292 = vpack.c.b16 %v1956, %v1954
      %v2293 = vpack.c.b16 %v1957, %v1955
      %v2294 = vpack.c.b16 %v1960, %v1958
      %v2295 = vpack.c.b16 %v1961, %v1959
      %v2296 = vpack.c.b16 %v1964, %v1962
      %v2297 = vpack.c.b16 %v1965, %v1963
      %v2298 = vpack.c.b16 %v1968, %v1966
      %v2299 = vpack.c.b16 %v1969, %v1967
      %v2300 = vpack.c.b16 %v1972, %v1970
      %v2301 = vpack.c.b16 %v1973, %v1971
      %v2302 = vpack.c.b16 %v1976, %v1974
      %v2303 = vpack.c.b16 %v1977, %v1975
      %v2304 = vpack.c.b16 %v1980, %v1978
      %v2305 = vpack.c.b16 %v1981, %v1979
      %v2306 = vpack.c.b16 %v1984, %v1982
      %v2307 = vpack.c.b16 %v1985, %v1983
      %v2308 = vpack.c.b16 %v1988, %v1986
      %v2309 = vpack.c.b16 %v1989, %v1987
      %v2310 = vpack.c.b16 %v1992, %v1990
      %v2311 = vpack.c.b16 %v1993, %v1991
      %v2312 = vpack.c.b16 %v1996, %v1994
      %v2313 = vpack.c.b16 %v1997, %v1995
      %v2314 = vpack.c.b16 %v2000, %v1998
      %v2315 = vpack.c.b16 %v2001, %v1999
      %v2316 = vpack.c.b16 %v2004, %v2002
      %v2317 = vpack.c.b16 %v2005, %v2003
      %v2318 = vpack.c.b16 %v2008, %v2006
      %v2319 = vpack.c.b16 %v2009, %v2007
      %v2320 = vpack.c.b16 %v2012, %v2010
      %v2321 = vpack.c.b16 %v2013, %v2011
      %v2322 = vpack.c.b16 %v2016, %v2014
      %v2323 = vpack.c.b16 %v2017, %v2015
      %v2324 = vpack.c.b16 %v2020, %v2018
      %v2325 = vpack.c.b16 %v2021, %v2019
      %v2326 = vpack.c.b16 %v2024, %v2022
      %v2327 = vpack.c.b16 %v2025, %v2023
      %v2328 = vpack.c.b16 %v2028, %v2026
      %v2329 = vpack.c.b16 %v2029, %v2027
      %v2330 = vpack.c.b16 %v2032, %v2030
      %v2331 = vpack.c.b16 %v2033, %v2031
      %v2332 = vpack.c.b16 %v2036, %v2034
      %v2333 = vpack.c.b16 %v2037, %v2035
      %v2334 = vpack.c.b16 %v2040, %v2038
      %v2335 = vpack.c.b16 %v2041, %v2039
      %v2336 = vpack.c.b16 %v2044, %v2042
      %v2337 = vpack.c.b16 %v2045, %v2043
      %v2338 = vpack.c.b16 %v2048, %v2046
      %v2339 = vpack.c.b16 %v2049, %v2047
      %v2340 = vpack.c.b16 %v2052, %v2050
      %v2341 = vpack.c.b16 %v2053, %v2051
      %2630 = vmatprep.subr.bf16.mxu0 %v2055
      %2631 = vmatpush1.bf16.msra.mxu0 %v2054
      %2632 = vmatprep.subr.bf16.mxu0 %v2057
      %2633 = vmatpush1.bf16.msra.mxu0 %v2056
      %2634 = vmatprep.subr.bf16.mxu0 %v2059
      %2635 = vmatpush1.bf16.msra.mxu0 %v2058
      %2636 = vmatprep.subr.bf16.mxu0 %v2061
      %2637 = vmatpush1.bf16.msra.mxu0 %v2060
      %2638 = vmatprep.subr.bf16.mxu0 %v2063
      %2639 = vmatpush1.bf16.msra.mxu0 %v2062
      %2640 = vmatprep.subr.bf16.mxu0 %v2065
      %2641 = vmatpush1.bf16.msra.mxu0 %v2064
      %2642 = vmatprep.subr.bf16.mxu0 %v2067
      %2643 = vmatpush1.bf16.msra.mxu0 %v2066
      %2644 = vmatprep.subr.bf16.mxu0 %v2069
      %2645 = vmatpush1.bf16.msra.mxu0 %v2068
      %2646 = vmatprep.subr.bf16.mxu0 %v2071
      %2647 = vmatpush1.bf16.msra.mxu0 %v2070
      %2648 = vmatprep.subr.bf16.mxu0 %v2073
      %2649 = vmatpush1.bf16.msra.mxu0 %v2072
      %2650 = vmatprep.subr.bf16.mxu0 %v2075
      %2651 = vmatpush1.bf16.msra.mxu0 %v2074
      %2652 = vmatprep.subr.bf16.mxu0 %v2077
      %2653 = vmatpush1.bf16.msra.mxu0 %v2076
      %2654 = vmatprep.subr.bf16.mxu0 %v2079
      %2655 = vmatpush1.bf16.msra.mxu0 %v2078
      %2656 = vmatprep.subr.bf16.mxu0 %v2081
      %2657 = vmatpush1.bf16.msra.mxu0 %v2080
      %2658 = vmatprep.subr.bf16.mxu0 %v2083
      %2659 = vmatpush1.bf16.msra.mxu0 %v2082
      %2660 = vmatprep.subr.bf16.mxu0 %v2085
      %2661 = vmatpush1.bf16.msra.mxu0 %v2084
      %2662 = vmatprep.mubr.bf16.mxu0 %v867
      %2663 = vmatmul.mubr.bf16.gmra.mrb[0].mxu0 %v866
      %v2664 = vpop.f32.mrb[0].mxu0
      %v2665 = vadd.f32 0.0, %v2664
      %v2666 = vpop.f32.mrb[0].mxu0
      %v2667 = vadd.f32 0.0, %v2666
      %v2668 = vpop.f32.mrb[0].mxu0
      %v2669 = vadd.f32 0.0, %v2668
      %v2670 = vpop.f32.mrb[0].mxu0
      %v2671 = vadd.f32 0.0, %v2670
      %2672 = vmatprep.mubr.bf16.mxu0 %v885
      %2673 = vmatmul.mubr.bf16.gmra.mrb[0].mxu0 %v884
      %v2674 = vpop.f32.mrb[0].mxu0
      %v2675 = vadd.f32 0.0, %v2674
      %v2676 = vpop.f32.mrb[0].mxu0
      %v2677 = vadd.f32 0.0, %v2676
      %v2678 = vpop.f32.mrb[0].mxu0
      %v2679 = vadd.f32 0.0, %v2678
      %v2680 = vpop.f32.mrb[0].mxu0
      %v2681 = vadd.f32 0.0, %v2680
      %2682 = vdwg.mxu0
      %2683 = vmatprep.subr.bf16.mxu0 %v2087
      %2684 = vmatpush1.bf16.msra.mxu0 %v2086
      %2685 = vmatprep.subr.bf16.mxu0 %v2089
      %2686 = vmatpush1.bf16.msra.mxu0 %v2088
      %2687 = vmatprep.subr.bf16.mxu0 %v2091
      %2688 = vmatpush1.bf16.msra.mxu0 %v2090
      %2689 = vmatprep.subr.bf16.mxu0 %v2093
      %2690 = vmatpush1.bf16.msra.mxu0 %v2092
      %2691 = vmatprep.subr.bf16.mxu0 %v2095
      %2692 = vmatpush1.bf16.msra.mxu0 %v2094
      %2693 = vmatprep.subr.bf16.mxu0 %v2097
      %2694 = vmatpush1.bf16.msra.mxu0 %v2096
      %2695 = vmatprep.subr.bf16.mxu0 %v2099
      %2696 = vmatpush1.bf16.msra.mxu0 %v2098
      %2697 = vmatprep.subr.bf16.mxu0 %v2101
      %2698 = vmatpush1.bf16.msra.mxu0 %v2100
      %2699 = vmatprep.subr.bf16.mxu0 %v2103
      %2700 = vmatpush1.bf16.msra.mxu0 %v2102
      %2701 = vmatprep.subr.bf16.mxu0 %v2105
      %2702 = vmatpush1.bf16.msra.mxu0 %v2104
      %2703 = vmatprep.subr.bf16.mxu0 %v2107
      %2704 = vmatpush1.bf16.msra.mxu0 %v2106
      %2705 = vmatprep.subr.bf16.mxu0 %v2109
      %2706 = vmatpush1.bf16.msra.mxu0 %v2108
      %2707 = vmatprep.subr.bf16.mxu0 %v2111
      %2708 = vmatpush1.bf16.msra.mxu0 %v2110
      %2709 = vmatprep.subr.bf16.mxu0 %v2113
      %2710 = vmatpush1.bf16.msra.mxu0 %v2112
      %2711 = vmatprep.subr.bf16.mxu0 %v2115
      %2712 = vmatpush1.bf16.msra.mxu0 %v2114
      %2713 = vmatprep.subr.bf16.mxu0 %v2117
      %2714 = vmatpush1.bf16.msra.mxu0 %v2116
      %2715 = vmatprep.mubr.bf16.mxu0 %v869
      %2716 = vmatmul.mubr.bf16.gmra.mrb[0].mxu0 %v868
      %v2717 = vpop.f32.mrb[0].mxu0
      %v2718 = vadd.f32 %v2665, %v2717
      %v2719 = vpop.f32.mrb[0].mxu0
      %v2720 = vadd.f32 %v2667, %v2719
      %v2721 = vpop.f32.mrb[0].mxu0
      %v2722 = vadd.f32 %v2669, %v2721
      %v2723 = vpop.f32.mrb[0].mxu0
      %v2724 = vadd.f32 %v2671, %v2723
      %2725 = vmatprep.mubr.bf16.mxu0 %v887
      %2726 = vmatmul.mubr.bf16.gmra.mrb[0].mxu0 %v886
      %v2727 = vpop.f32.mrb[0].mxu0
      %v2728 = vadd.f32 %v2675, %v2727
      %v2729 = vpop.f32.mrb[0].mxu0
      %v2730 = vadd.f32 %v2677, %v2729
      %v2731 = vpop.f32.mrb[0].mxu0
      %v2732 = vadd.f32 %v2679, %v2731
      %v2733 = vpop.f32.mrb[0].mxu0
      %v2734 = vadd.f32 %v2681, %v2733
      %2735 = vdwg.mxu0
      %2736 = vmatprep.subr.bf16.mxu0 %v2119
      %2737 = vmatpush1.bf16.msra.mxu0 %v2118
      %2738 = vmatprep.subr.bf16.mxu0 %v2121
      %2739 = vmatpush1.bf16.msra.mxu0 %v2120
      %2740 = vmatprep.subr.bf16.mxu0 %v2123
      %2741 = vmatpush1.bf16.msra.mxu0 %v2122
      %2742 = vmatprep.subr.bf16.mxu0 %v2125
      %2743 = vmatpush1.bf16.msra.mxu0 %v2124
      %2744 = vmatprep.subr.bf16.mxu0 %v2127
      %2745 = vmatpush1.bf16.msra.mxu0 %v2126
      %2746 = vmatprep.subr.bf16.mxu0 %v2129
      %2747 = vmatpush1.bf16.msra.mxu0 %v2128
      %2748 = vmatprep.subr.bf16.mxu0 %v2131
      %2749 = vmatpush1.bf16.msra.mxu0 %v2130
      %2750 = vmatprep.subr.bf16.mxu0 %v2133
      %2751 = vmatpush1.bf16.msra.mxu0 %v2132
      %2752 = vmatprep.subr.bf16.mxu0 %v2135
      %2753 = vmatpush1.bf16.msra.mxu0 %v2134
      %2754 = vmatprep.subr.bf16.mxu0 %v2137
      %2755 = vmatpush1.bf16.msra.mxu0 %v2136
      %2756 = vmatprep.subr.bf16.mxu0 %v2139
      %2757 = vmatpush1.bf16.msra.mxu0 %v2138
      %2758 = vmatprep.subr.bf16.mxu0 %v2141
      %2759 = vmatpush1.bf16.msra.mxu0 %v2140
      %2760 = vmatprep.subr.bf16.mxu0 %v2143
      %2761 = vmatpush1.bf16.msra.mxu0 %v2142
      %2762 = vmatprep.subr.bf16.mxu0 %v2145
      %2763 = vmatpush1.bf16.msra.mxu0 %v2144
      %2764 = vmatprep.subr.bf16.mxu0 %v2147
      %2765 = vmatpush1.bf16.msra.mxu0 %v2146
      %2766 = vmatprep.subr.bf16.mxu0 %v2149
      %2767 = vmatpush1.bf16.msra.mxu0 %v2148
      %2768 = vmatprep.mubr.bf16.mxu0 %v871
      %2769 = vmatmul.mubr.bf16.gmra.mrb[0].mxu0 %v870
      %v2770 = vpop.f32.mrb[0].mxu0
      %v2771 = vadd.f32 %v2718, %v2770
      %v2772 = vpop.f32.mrb[0].mxu0
      %v2773 = vadd.f32 %v2720, %v2772
      %v2774 = vpop.f32.mrb[0].mxu0
      %v2775 = vadd.f32 %v2722, %v2774
      %v2776 = vpop.f32.mrb[0].mxu0
      %v2777 = vadd.f32 %v2724, %v2776
      %2778 = vmatprep.mubr.bf16.mxu0 %v889
      %2779 = vmatmul.mubr.bf16.gmra.mrb[0].mxu0 %v888
      %v2780 = vpop.f32.mrb[0].mxu0
      %v2781 = vadd.f32 %v2728, %v2780
      %v2782 = vpop.f32.mrb[0].mxu0
      %v2783 = vadd.f32 %v2730, %v2782
      %v2784 = vpop.f32.mrb[0].mxu0
      %v2785 = vadd.f32 %v2732, %v2784
      %v2786 = vpop.f32.mrb[0].mxu0
      %v2787 = vadd.f32 %v2734, %v2786
      %2788 = vdwg.mxu0
      %2789 = vmatprep.subr.bf16.mxu0 %v2151
      %2790 = vmatpush1.bf16.msra.mxu0 %v2150
      %2791 = vmatprep.subr.bf16.mxu0 %v2153
      %2792 = vmatpush1.bf16.msra.mxu0 %v2152
      %2793 = vmatprep.subr.bf16.mxu0 %v2155
      %2794 = vmatpush1.bf16.msra.mxu0 %v2154
      %2795 = vmatprep.subr.bf16.mxu0 %v2157
      %2796 = vmatpush1.bf16.msra.mxu0 %v2156
      %2797 = vmatprep.subr.bf16.mxu0 %v2159
      %2798 = vmatpush1.bf16.msra.mxu0 %v2158
      %2799 = vmatprep.subr.bf16.mxu0 %v2161
      %2800 = vmatpush1.bf16.msra.mxu0 %v2160
      %2801 = vmatprep.subr.bf16.mxu0 %v2163
      %2802 = vmatpush1.bf16.msra.mxu0 %v2162
      %2803 = vmatprep.subr.bf16.mxu0 %v2165
      %2804 = vmatpush1.bf16.msra.mxu0 %v2164
      %2805 = vmatprep.subr.bf16.mxu0 %v2167
      %2806 = vmatpush1.bf16.msra.mxu0 %v2166
      %2807 = vmatprep.subr.bf16.mxu0 %v2169
      %2808 = vmatpush1.bf16.msra.mxu0 %v2168
      %2809 = vmatprep.subr.bf16.mxu0 %v2171
      %2810 = vmatpush1.bf16.msra.mxu0 %v2170
      %2811 = vmatprep.subr.bf16.mxu0 %v2173
      %2812 = vmatpush1.bf16.msra.mxu0 %v2172
      %2813 = vmatprep.subr.bf16.mxu0 %v2175
      %2814 = vmatpush1.bf16.msra.mxu0 %v2174
      %2815 = vmatprep.subr.bf16.mxu0 %v2177
      %2816 = vmatpush1.bf16.msra.mxu0 %v2176
      %2817 = vmatprep.subr.bf16.mxu0 %v2179
      %2818 = vmatpush1.bf16.msra.mxu0 %v2178
      %2819 = vmatprep.subr.bf16.mxu0 %v2181
      %2820 = vmatpush1.bf16.msra.mxu0 %v2180
      %2821 = vmatprep.mubr.bf16.mxu0 %v873
      %2822 = vmatmul.mubr.bf16.gmra.mrb[0].mxu0 %v872
      %v2823 = vpop.f32.mrb[0].mxu0
      %v2824 = vadd.f32 %v2771, %v2823
      %v2825 = vpop.f32.mrb[0].mxu0
      %v2826 = vadd.f32 %v2773, %v2825
      %v2827 = vpop.f32.mrb[0].mxu0
      %v2828 = vadd.f32 %v2775, %v2827
      %v2829 = vpop.f32.mrb[0].mxu0
      %v2830 = vadd.f32 %v2777, %v2829
      %2831 = vmatprep.mubr.bf16.mxu0 %v891
      %2832 = vmatmul.mubr.bf16.gmra.mrb[0].mxu0 %v890
      %v2833 = vpop.f32.mrb[0].mxu0
      %v2834 = vadd.f32 %v2781, %v2833
      %v2835 = vpop.f32.mrb[0].mxu0
      %v2836 = vadd.f32 %v2783, %v2835
      %v2837 = vpop.f32.mrb[0].mxu0
      %v2838 = vadd.f32 %v2785, %v2837
      %v2839 = vpop.f32.mrb[0].mxu0
      %v2840 = vadd.f32 %v2787, %v2839
      %2841 = vdwg.mxu0
      %2842 = vmatprep.subr.bf16.mxu0 %v2183
      %2843 = vmatpush1.bf16.msra.mxu0 %v2182
      %2844 = vmatprep.subr.bf16.mxu0 %v2185
      %2845 = vmatpush1.bf16.msra.mxu0 %v2184
      %2846 = vmatprep.subr.bf16.mxu0 %v2187
      %2847 = vmatpush1.bf16.msra.mxu0 %v2186
      %2848 = vmatprep.subr.bf16.mxu0 %v2189
      %2849 = vmatpush1.bf16.msra.mxu0 %v2188
      %2850 = vmatprep.subr.bf16.mxu0 %v2191
      %2851 = vmatpush1.bf16.msra.mxu0 %v2190
      %2852 = vmatprep.subr.bf16.mxu0 %v2193
      %2853 = vmatpush1.bf16.msra.mxu0 %v2192
      %2854 = vmatprep.subr.bf16.mxu0 %v2195
      %2855 = vmatpush1.bf16.msra.mxu0 %v2194
      %2856 = vmatprep.subr.bf16.mxu0 %v2197
      %2857 = vmatpush1.bf16.msra.mxu0 %v2196
      %2858 = vmatprep.subr.bf16.mxu0 %v2199
      %2859 = vmatpush1.bf16.msra.mxu0 %v2198
      %2860 = vmatprep.subr.bf16.mxu0 %v2201
      %2861 = vmatpush1.bf16.msra.mxu0 %v2200
      %2862 = vmatprep.subr.bf16.mxu0 %v2203
      %2863 = vmatpush1.bf16.msra.mxu0 %v2202
      %2864 = vmatprep.subr.bf16.mxu0 %v2205
      %2865 = vmatpush1.bf16.msra.mxu0 %v2204
      %2866 = vmatprep.subr.bf16.mxu0 %v2207
      %2867 = vmatpush1.bf16.msra.mxu0 %v2206
      %2868 = vmatprep.subr.bf16.mxu0 %v2209
      %2869 = vmatpush1.bf16.msra.mxu0 %v2208
      %2870 = vmatprep.subr.bf16.mxu0 %v2211
      %2871 = vmatpush1.bf16.msra.mxu0 %v2210
      %2872 = vmatprep.subr.bf16.mxu0 %v2213
      %2873 = vmatpush1.bf16.msra.mxu0 %v2212
      %2874 = vmatprep.mubr.bf16.mxu0 %v875
      %2875 = vmatmul.mubr.bf16.gmra.mrb[0].mxu0 %v874
      %v2876 = vpop.f32.mrb[0].mxu0
      %v2877 = vadd.f32 %v2824, %v2876
      %v2878 = vpop.f32.mrb[0].mxu0
      %v2879 = vadd.f32 %v2826, %v2878
      %v2880 = vpop.f32.mrb[0].mxu0
      %v2881 = vadd.f32 %v2828, %v2880
      %v2882 = vpop.f32.mrb[0].mxu0
      %v2883 = vadd.f32 %v2830, %v2882
      %2884 = vmatprep.mubr.bf16.mxu0 %v893
      %2885 = vmatmul.mubr.bf16.gmra.mrb[0].mxu0 %v892
      %v2886 = vpop.f32.mrb[0].mxu0
      %v2887 = vadd.f32 %v2834, %v2886
      %v2888 = vpop.f32.mrb[0].mxu0
      %v2889 = vadd.f32 %v2836, %v2888
      %v2890 = vpop.f32.mrb[0].mxu0
      %v2891 = vadd.f32 %v2838, %v2890
      %v2892 = vpop.f32.mrb[0].mxu0
      %v2893 = vadd.f32 %v2840, %v2892
      %2894 = vdwg.mxu0
      %2895 = vmatprep.subr.bf16.mxu0 %v2215
      %2896 = vmatpush1.bf16.msra.mxu0 %v2214
      %2897 = vmatprep.subr.bf16.mxu0 %v2217
      %2898 = vmatpush1.bf16.msra.mxu0 %v2216
      %2899 = vmatprep.subr.bf16.mxu0 %v2219
      %2900 = vmatpush1.bf16.msra.mxu0 %v2218
      %2901 = vmatprep.subr.bf16.mxu0 %v2221
      %2902 = vmatpush1.bf16.msra.mxu0 %v2220
      %2903 = vmatprep.subr.bf16.mxu0 %v2223
      %2904 = vmatpush1.bf16.msra.mxu0 %v2222
      %2905 = vmatprep.subr.bf16.mxu0 %v2225
      %2906 = vmatpush1.bf16.msra.mxu0 %v2224
      %2907 = vmatprep.subr.bf16.mxu0 %v2227
      %2908 = vmatpush1.bf16.msra.mxu0 %v2226
      %2909 = vmatprep.subr.bf16.mxu0 %v2229
      %2910 = vmatpush1.bf16.msra.mxu0 %v2228
      %2911 = vmatprep.subr.bf16.mxu0 %v2231
      %2912 = vmatpush1.bf16.msra.mxu0 %v2230
      %2913 = vmatprep.subr.bf16.mxu0 %v2233
      %2914 = vmatpush1.bf16.msra.mxu0 %v2232
      %2915 = vmatprep.subr.bf16.mxu0 %v2235
      %2916 = vmatpush1.bf16.msra.mxu0 %v2234
      %2917 = vmatprep.subr.bf16.mxu0 %v2237
      %2918 = vmatpush1.bf16.msra.mxu0 %v2236
      %2919 = vmatprep.subr.bf16.mxu0 %v2239
      %2920 = vmatpush1.bf16.msra.mxu0 %v2238
      %2921 = vmatprep.subr.bf16.mxu0 %v2241
      %2922 = vmatpush1.bf16.msra.mxu0 %v2240
      %2923 = vmatprep.subr.bf16.mxu0 %v2243
      %2924 = vmatpush1.bf16.msra.mxu0 %v2242
      %2925 = vmatprep.subr.bf16.mxu0 %v2245
      %2926 = vmatpush1.bf16.msra.mxu0 %v2244
      %2927 = vmatprep.mubr.bf16.mxu0 %v877
      %2928 = vmatmul.mubr.bf16.gmra.mrb[0].mxu0 %v876
      %v2929 = vpop.f32.mrb[0].mxu0
      %v2930 = vadd.f32 %v2877, %v2929
      %v2931 = vpop.f32.mrb[0].mxu0
      %v2932 = vadd.f32 %v2879, %v2931
      %v2933 = vpop.f32.mrb[0].mxu0
      %v2934 = vadd.f32 %v2881, %v2933
      %v2935 = vpop.f32.mrb[0].mxu0
      %v2936 = vadd.f32 %v2883, %v2935
      %2937 = vmatprep.mubr.bf16.mxu0 %v895
      %2938 = vmatmul.mubr.bf16.gmra.mrb[0].mxu0 %v894
      %v2939 = vpop.f32.mrb[0].mxu0
      %v2940 = vadd.f32 %v2887, %v2939
      %v2941 = vpop.f32.mrb[0].mxu0
      %v2942 = vadd.f32 %v2889, %v2941
      %v2943 = vpop.f32.mrb[0].mxu0
      %v2944 = vadd.f32 %v2891, %v2943
      %v2945 = vpop.f32.mrb[0].mxu0
      %v2946 = vadd.f32 %v2893, %v2945
      %2947 = vdwg.mxu0
      %2948 = vmatprep.subr.bf16.mxu0 %v2247
      %2949 = vmatpush1.bf16.msra.mxu0 %v2246
      %2950 = vmatprep.subr.bf16.mxu0 %v2249
      %2951 = vmatpush1.bf16.msra.mxu0 %v2248
      %2952 = vmatprep.subr.bf16.mxu0 %v2251
      %2953 = vmatpush1.bf16.msra.mxu0 %v2250
      %2954 = vmatprep.subr.bf16.mxu0 %v2253
      %2955 = vmatpush1.bf16.msra.mxu0 %v2252
      %2956 = vmatprep.subr.bf16.mxu0 %v2255
      %2957 = vmatpush1.bf16.msra.mxu0 %v2254
      %2958 = vmatprep.subr.bf16.mxu0 %v2257
      %2959 = vmatpush1.bf16.msra.mxu0 %v2256
      %2960 = vmatprep.subr.bf16.mxu0 %v2259
      %2961 = vmatpush1.bf16.msra.mxu0 %v2258
      %2962 = vmatprep.subr.bf16.mxu0 %v2261
      %2963 = vmatpush1.bf16.msra.mxu0 %v2260
      %2964 = vmatprep.subr.bf16.mxu0 %v2263
      %2965 = vmatpush1.bf16.msra.mxu0 %v2262
      %2966 = vmatprep.subr.bf16.mxu0 %v2265
      %2967 = vmatpush1.bf16.msra.mxu0 %v2264
      %2968 = vmatprep.subr.bf16.mxu0 %v2267
      %2969 = vmatpush1.bf16.msra.mxu0 %v2266
      %2970 = vmatprep.subr.bf16.mxu0 %v2269
      %2971 = vmatpush1.bf16.msra.mxu0 %v2268
      %2972 = vmatprep.subr.bf16.mxu0 %v2271
      %2973 = vmatpush1.bf16.msra.mxu0 %v2270
      %2974 = vmatprep.subr.bf16.mxu0 %v2273
      %2975 = vmatpush1.bf16.msra.mxu0 %v2272
      %2976 = vmatprep.subr.bf16.mxu0 %v2275
      %2977 = vmatpush1.bf16.msra.mxu0 %v2274
      %2978 = vmatprep.subr.bf16.mxu0 %v2277
      %2979 = vmatpush1.bf16.msra.mxu0 %v2276
      %2980 = vmatprep.mubr.bf16.mxu0 %v879
      %2981 = vmatmul.mubr.bf16.gmra.mrb[0].mxu0 %v878
      %v2982 = vpop.f32.mrb[0].mxu0
      %v2983 = vadd.f32 %v2930, %v2982
      %v2984 = vpop.f32.mrb[0].mxu0
      %v2985 = vadd.f32 %v2932, %v2984
      %v2986 = vpop.f32.mrb[0].mxu0
      %v2987 = vadd.f32 %v2934, %v2986
      %v2988 = vpop.f32.mrb[0].mxu0
      %v2989 = vadd.f32 %v2936, %v2988
      %2990 = vmatprep.mubr.bf16.mxu0 %v897
      %2991 = vmatmul.mubr.bf16.gmra.mrb[0].mxu0 %v896
      %v2992 = vpop.f32.mrb[0].mxu0
      %v2993 = vadd.f32 %v2940, %v2992
      %v2994 = vpop.f32.mrb[0].mxu0
      %v2995 = vadd.f32 %v2942, %v2994
      %v2996 = vpop.f32.mrb[0].mxu0
      %v2997 = vadd.f32 %v2944, %v2996
      %v2998 = vpop.f32.mrb[0].mxu0
      %v2999 = vadd.f32 %v2946, %v2998
      %3000 = vdwg.mxu0
      %3001 = vmatprep.subr.bf16.mxu0 %v2279
      %3002 = vmatpush1.bf16.msra.mxu0 %v2278
      %3003 = vmatprep.subr.bf16.mxu0 %v2281
      %3004 = vmatpush1.bf16.msra.mxu0 %v2280
      %3005 = vmatprep.subr.bf16.mxu0 %v2283
      %3006 = vmatpush1.bf16.msra.mxu0 %v2282
      %3007 = vmatprep.subr.bf16.mxu0 %v2285
      %3008 = vmatpush1.bf16.msra.mxu0 %v2284
      %3009 = vmatprep.subr.bf16.mxu0 %v2287
      %3010 = vmatpush1.bf16.msra.mxu0 %v2286
      %3011 = vmatprep.subr.bf16.mxu0 %v2289
      %3012 = vmatpush1.bf16.msra.mxu0 %v2288
      %3013 = vmatprep.subr.bf16.mxu0 %v2291
      %3014 = vmatpush1.bf16.msra.mxu0 %v2290
      %3015 = vmatprep.subr.bf16.mxu0 %v2293
      %3016 = vmatpush1.bf16.msra.mxu0 %v2292
      %3017 = vmatprep.subr.bf16.mxu0 %v2295
      %3018 = vmatpush1.bf16.msra.mxu0 %v2294
      %3019 = vmatprep.subr.bf16.mxu0 %v2297
      %3020 = vmatpush1.bf16.msra.mxu0 %v2296
      %3021 = vmatprep.subr.bf16.mxu0 %v2299
      %3022 = vmatpush1.bf16.msra.mxu0 %v2298
      %3023 = vmatprep.subr.bf16.mxu0 %v2301
      %3024 = vmatpush1.bf16.msra.mxu0 %v2300
      %3025 = vmatprep.subr.bf16.mxu0 %v2303
      %3026 = vmatpush1.bf16.msra.mxu0 %v2302
      %3027 = vmatprep.subr.bf16.mxu0 %v2305
      %3028 = vmatpush1.bf16.msra.mxu0 %v2304
      %3029 = vmatprep.subr.bf16.mxu0 %v2307
      %3030 = vmatpush1.bf16.msra.mxu0 %v2306
      %3031 = vmatprep.subr.bf16.mxu0 %v2309
      %3032 = vmatpush1.bf16.msra.mxu0 %v2308
      %3033 = vmatprep.mubr.bf16.mxu0 %v881
      %3034 = vmatmul.mubr.bf16.gmra.mrb[0].mxu0 %v880
      %v3035 = vpop.f32.mrb[0].mxu0
      %v3036 = vadd.f32 %v2983, %v3035
      %v3037 = vpop.f32.mrb[0].mxu0
      %v3038 = vadd.f32 %v2985, %v3037
      %v3039 = vpop.f32.mrb[0].mxu0
      %v3040 = vadd.f32 %v2987, %v3039
      %v3041 = vpop.f32.mrb[0].mxu0
      %v3042 = vadd.f32 %v2989, %v3041
      %3043 = vmatprep.mubr.bf16.mxu0 %v899
      %3044 = vmatmul.mubr.bf16.gmra.mrb[0].mxu0 %v898
      %v3045 = vpop.f32.mrb[0].mxu0
      %v3046 = vadd.f32 %v2993, %v3045
      %v3047 = vpop.f32.mrb[0].mxu0
      %v3048 = vadd.f32 %v2995, %v3047
      %v3049 = vpop.f32.mrb[0].mxu0
      %v3050 = vadd.f32 %v2997, %v3049
      %v3051 = vpop.f32.mrb[0].mxu0
      %v3052 = vadd.f32 %v2999, %v3051
      %3053 = vdwg.mxu0
      %3054 = vmatprep.subr.bf16.mxu0 %v2311
      %3055 = vmatpush1.bf16.msra.mxu0 %v2310
      %3056 = vmatprep.subr.bf16.mxu0 %v2313
      %3057 = vmatpush1.bf16.msra.mxu0 %v2312
      %3058 = vmatprep.subr.bf16.mxu0 %v2315
      %3059 = vmatpush1.bf16.msra.mxu0 %v2314
      %3060 = vmatprep.subr.bf16.mxu0 %v2317
      %3061 = vmatpush1.bf16.msra.mxu0 %v2316
      %3062 = vmatprep.subr.bf16.mxu0 %v2319
      %3063 = vmatpush1.bf16.msra.mxu0 %v2318
      %3064 = vmatprep.subr.bf16.mxu0 %v2321
      %3065 = vmatpush1.bf16.msra.mxu0 %v2320
      %3066 = vmatprep.subr.bf16.mxu0 %v2323
      %3067 = vmatpush1.bf16.msra.mxu0 %v2322
      %3068 = vmatprep.subr.bf16.mxu0 %v2325
      %3069 = vmatpush1.bf16.msra.mxu0 %v2324
      %3070 = vmatprep.subr.bf16.mxu0 %v2327
      %3071 = vmatpush1.bf16.msra.mxu0 %v2326
      %3072 = vmatprep.subr.bf16.mxu0 %v2329
      %3073 = vmatpush1.bf16.msra.mxu0 %v2328
      %3074 = vmatprep.subr.bf16.mxu0 %v2331
      %3075 = vmatpush1.bf16.msra.mxu0 %v2330
      %3076 = vmatprep.subr.bf16.mxu0 %v2333
      %3077 = vmatpush1.bf16.msra.mxu0 %v2332
      %3078 = vmatprep.subr.bf16.mxu0 %v2335
      %3079 = vmatpush1.bf16.msra.mxu0 %v2334
      %3080 = vmatprep.subr.bf16.mxu0 %v2337
      %3081 = vmatpush1.bf16.msra.mxu0 %v2336
      %3082 = vmatprep.subr.bf16.mxu0 %v2339
      %3083 = vmatpush1.bf16.msra.mxu0 %v2338
      %3084 = vmatprep.subr.bf16.mxu0 %v2341
      %3085 = vmatpush1.bf16.msra.mxu0 %v2340
      %3086 = vmatprep.mubr.bf16.mxu0 %v883
      %3087 = vmatmul.mubr.bf16.gmra.mrb[0].mxu0 %v882
      %v3088 = vpop.f32.mrb[0].mxu0
      %v3089 = vadd.f32 %v3036, %v3088
      %v3090 = vpop.f32.mrb[0].mxu0
      %v3091 = vadd.f32 %v3038, %v3090
      %v3092 = vpop.f32.mrb[0].mxu0
      %v3093 = vadd.f32 %v3040, %v3092
      %v3094 = vpop.f32.mrb[0].mxu0
      %v3095 = vadd.f32 %v3042, %v3094
      %3096 = vmatprep.mubr.bf16.mxu0 %v901
      %3097 = vmatmul.mubr.bf16.gmra.mrb[0].mxu0 %v900
      %v3098 = vpop.f32.mrb[0].mxu0
      %v3099 = vadd.f32 %v3046, %v3098
      %v3100 = vpop.f32.mrb[0].mxu0
      %v3101 = vadd.f32 %v3048, %v3100
      %v3102 = vpop.f32.mrb[0].mxu0
      %v3103 = vadd.f32 %v3050, %v3102
      %v3104 = vpop.f32.mrb[0].mxu0
      %v3105 = vadd.f32 %v3052, %v3104
      %3106 = vdwg.mxu0
      %v3107 = vadd.f32 %v344, %v3089
      %v3108 = vadd.f32 %v345, %v3091
      %v3109 = vadd.f32 %v346, %v3093
      %v3110 = vadd.f32 %v347, %v3095
      %v3111 = vadd.f32 %v348, %v3099
      %v3112 = vadd.f32 %v349, %v3101
      %v3113 = vadd.f32 %v350, %v3103
      %v3114 = vadd.f32 %v351, %v3105
      %v3115 = vld [vmem:[%s2] sm:$0x3]
      %v3117 = vlaneseq
      %v3118 = vshrl.u32 %v3117, 7
      %v3119 = vsub.s32 0, %v3118
      %v3120 = vrot.slane %v3115, %v3119
      %v3121 = vlaneseq
      %v3122 = vshrl.u32 %v3121, 7
      %v3123 = vsub.s32 1, %v3122
      %v3124 = vrot.slane %v3115, %v3123
      %v3127 = vadd.f32 %v3107, %v3120
      %v3128 = vadd.f32 %v3108, %v3124
      %v3129 = vadd.f32 %v3109, %v3120
      %v3130 = vadd.f32 %v3110, %v3124
      %v3131 = vadd.f32 %v3111, %v3120
      %v3132 = vadd.f32 %v3112, %v3124
      %v3133 = vadd.f32 %v3113, %v3120
      %v3134 = vadd.f32 %v3114, %v3124
      %3135 = vst [vmem:[%s278] sm:$0xff] %v3127
      %3136 = vst [vmem:[%s278 + $0x8] sm:$0xff] %v3128
      %3137 = vst [vmem:[%s278 + $0x10] sm:$0xff] %v3129
      %3138 = vst [vmem:[%s278 + $0x18] sm:$0xff] %v3130
      %3139 = vst [vmem:[%s278 + $0x20] sm:$0xff] %v3131
      %3140 = vst [vmem:[%s278 + $0x28] sm:$0xff] %v3132
      %3141 = vst [vmem:[%s278 + $0x30] sm:$0xff] %v3133
      %3142 = vst [vmem:[%s278 + $0x38] sm:$0xff] %v3134
      %vm3143 = vcmp.ge.f32.partialorder %v3127, 0.0
      %vm3144 = vcmp.ge.f32.partialorder %v3128, 0.0
      %vm3145 = vcmp.ge.f32.partialorder %v3129, 0.0
      %vm3146 = vcmp.ge.f32.partialorder %v3130, 0.0
      %vm3147 = vcmp.ge.f32.partialorder %v3131, 0.0
      %vm3148 = vcmp.ge.f32.partialorder %v3132, 0.0
      %vm3149 = vcmp.ge.f32.partialorder %v3133, 0.0
      %vm3150 = vcmp.ge.f32.partialorder %v3134, 0.0
      %v3151 = vld [vmem:[%s4] sm:$0x3]
      %v3153 = vlaneseq
      %v3154 = vshrl.u32 %v3153, 7
      %v3155 = vsub.s32 0, %v3154
      %v3156 = vrot.slane %v3151, %v3155
      %v3157 = vlaneseq
      %v3158 = vshrl.u32 %v3157, 7
      %v3159 = vsub.s32 1, %v3158
      %v3160 = vrot.slane %v3151, %v3159
      %v3163 = vmul.f32 %v3156, %v3127
      %v3164 = vmul.f32 %v3160, %v3128
      %v3165 = vmul.f32 %v3156, %v3129
      %v3166 = vmul.f32 %v3160, %v3130
      %v3167 = vmul.f32 %v3156, %v3131
      %v3168 = vmul.f32 %v3160, %v3132
      %v3169 = vmul.f32 %v3156, %v3133
      %v3170 = vmul.f32 %v3160, %v3134
      %v3171 = vsel %vm3143, %v3127, %v3163
      %v3172 = vsel %vm3144, %v3128, %v3164
      %v3173 = vsel %vm3145, %v3129, %v3165
      %v3174 = vsel %vm3146, %v3130, %v3166
      %v3175 = vsel %vm3147, %v3131, %v3167
      %v3176 = vsel %vm3148, %v3132, %v3168
      %v3177 = vsel %vm3149, %v3133, %v3169
      %v3178 = vsel %vm3150, %v3134, %v3170
      %v3179 = vsel %vm340, 1, 0
      %v3180 = vsel %vm341, 1, 0
      %v3181 = vsel %vm342, 1, 0
      %v3182 = vsel %vm343, 1, 0
      %vm3183 = vcmp.eq.s32.totalorder %v3179, 1
      %vm3184 = vcmp.eq.s32.totalorder %v3180, 1
      %vm3185 = vcmp.eq.s32.totalorder %v3181, 1
      %vm3186 = vcmp.eq.s32.totalorder %v3182, 1
      %v3187 = vsel %vm3183, %v3171, 0.0
      %v3188 = vsel %vm3183, %v3172, 0.0
      %v3189 = vsel %vm3184, %v3173, 0.0
      %v3190 = vsel %vm3184, %v3174, 0.0
      %v3191 = vsel %vm3185, %v3175, 0.0
      %v3192 = vsel %vm3185, %v3176, 0.0
      %v3193 = vsel %vm3186, %v3177, 0.0
      %v3194 = vsel %vm3186, %v3178, 0.0
      %3195 = vst [vmem:[#allocation2 + $0x20] sm:$0xff] %v3187
      %3196 = vst [vmem:[#allocation2 + $0x28] sm:$0xff] %v3188
      %3197 = vst [vmem:[#allocation2 + $0x30] sm:$0xff] %v3189
      %3198 = vst [vmem:[#allocation2 + $0x38] sm:$0xff] %v3190
      %3199 = vst [vmem:[#allocation2 + $0x40] sm:$0xff] %v3191
      %3200 = vst [vmem:[#allocation2 + $0x48] sm:$0xff] %v3192
      %3201 = vst [vmem:[#allocation2 + $0x50] sm:$0xff] %v3193
      %3202 = vst [vmem:[#allocation2 + $0x58] sm:$0xff] %v3194
      %v3203 = vld [vmem:[%s278] sm:$0xff]
      %v3204 = vld [vmem:[%s278 + $0x8] sm:$0xff]
      %v3205 = vld [vmem:[%s278 + $0x10] sm:$0xff]
      %v3206 = vld [vmem:[%s278 + $0x18] sm:$0xff]
      %v3207 = vld [vmem:[%s278 + $0x20] sm:$0xff]
      %v3208 = vld [vmem:[%s278 + $0x28] sm:$0xff]
      %v3209 = vld [vmem:[%s278 + $0x30] sm:$0xff]
      %v3210 = vld [vmem:[%s278 + $0x38] sm:$0xff]
      %v3211 = vld [vmem:[#allocation2] sm:$0x80]
      %v3212 = vld [vmem:[#allocation2 + $0x8] sm:$0x80]
      %v3213 = vld [vmem:[#allocation2 + $0x10] sm:$0xff]
      %v3214 = vld [vmem:[#allocation2 + $0x18] sm:$0xff]
      %v3215 = vld [vmem:[#allocation2 + $0x20] sm:$0xff]
      %v3216 = vld [vmem:[#allocation2 + $0x28] sm:$0xff]
      %v3217 = vld [vmem:[#allocation2 + $0x30] sm:$0xff]
      %v3218 = vld [vmem:[#allocation2 + $0x38] sm:$0xff]
      %v3219 = vld [vmem:[#allocation2 + $0x40] sm:$0x7f]
      %v3220 = vld [vmem:[#allocation2 + $0x48] sm:$0x7f]
      %v3221 = vpack.c.bf16 %v3213, %v3211
      %v3222 = vpack.c.bf16 %v3214, %v3212
      %v3223 = vpack.c.bf16 %v3217, %v3215
      %v3224 = vpack.c.bf16 %v3218, %v3216
      %v3225 = vpack.c.bf16 %v3219, %v3219
      %v3226 = vpack.c.bf16 %v3220, %v3220
      %v3228 = vshrl.u32 %v3221, 16
      %v3230 = vrot.slane %v3228, 3
      %v3231 = vshll.u32 %v3221, 16
      %v3233 = vrot.slane %v3231, 4
      %v3234 = vor.u32 %v3230, %v3233
      %v3236 = vshrl.u32 %v3223, 16
      %v3238 = vrot.slane %v3236, 3
      %v3239 = vshll.u32 %v3223, 16
      %v3241 = vrot.slane %v3239, 4
      %v3242 = vor.u32 %v3238, %v3241
      %v3243 = vsel %vm412, %v3234, %v3242
      %v3245 = vshrl.u32 %v3222, 16
      %v3247 = vrot.slane %v3245, 3
      %v3248 = vshll.u32 %v3222, 16
      %v3250 = vrot.slane %v3248, 4
      %v3251 = vor.u32 %v3247, %v3250
      %v3253 = vshrl.u32 %v3224, 16
      %v3255 = vrot.slane %v3253, 3
      %v3256 = vshll.u32 %v3224, 16
      %v3258 = vrot.slane %v3256, 4
      %v3259 = vor.u32 %v3255, %v3258
      %v3260 = vsel %vm412, %v3251, %v3259
      %v3262 = vshrl.u32 %v3225, 16
      %v3264 = vrot.slane %v3262, 3
      %v3265 = vshll.u32 %v3225, 16
      %v3267 = vrot.slane %v3265, 4
      %v3268 = vor.u32 %v3264, %v3267
      %v3269 = vsel %vm412, %v3242, %v3268
      %v3271 = vshrl.u32 %v3226, 16
      %v3273 = vrot.slane %v3271, 3
      %v3274 = vshll.u32 %v3226, 16
      %v3276 = vrot.slane %v3274, 4
      %v3277 = vor.u32 %v3273, %v3276
      %v3278 = vsel %vm412, %v3259, %v3277
      %3283 = vst [vmem:[#allocation3] sm:$0xff] %v3243
      %3284 = vst [vmem:[#allocation3 + $0x8] sm:$0xff] %v3260
      %3285 = vst [vmem:[#allocation3 + $0x90] sm:$0xff] %v3269
      %3286 = vst [vmem:[#allocation3 + $0x98] sm:$0xff] %v3278
      %v3287 = vld [vmem:[#allocation2 + $0x10] sm:$0xff]
      %v3288 = vld [vmem:[#allocation2 + $0x18] sm:$0xff]
      %v3289 = vld [vmem:[#allocation2 + $0x20] sm:$0xff]
      %v3290 = vld [vmem:[#allocation2 + $0x28] sm:$0xff]
      %v3291 = vld [vmem:[#allocation2 + $0x30] sm:$0xff]
      %v3292 = vld [vmem:[#allocation2 + $0x38] sm:$0xff]
      %v3293 = vld [vmem:[#allocation2 + $0x40] sm:$0xff]
      %v3294 = vld [vmem:[#allocation2 + $0x48] sm:$0xff]
      %v3295 = vpack.c.bf16 %v3289, %v3287
      %v3296 = vpack.c.bf16 %v3290, %v3288
      %v3297 = vpack.c.bf16 %v3293, %v3291
      %v3298 = vpack.c.bf16 %v3294, %v3292
      %3299 = vst [vmem:[#allocation3 + $0x10] sm:$0xff] %v3295
      %3300 = vst [vmem:[#allocation3 + $0x18] sm:$0xff] %v3296
      %3301 = vst [vmem:[#allocation3 + $0xa0] sm:$0xff] %v3297
      %3302 = vst [vmem:[#allocation3 + $0xa8] sm:$0xff] %v3298
      %v3303 = vld [vmem:[#allocation2 + $0x10] sm:$0xfe]
      %v3304 = vld [vmem:[#allocation2 + $0x18] sm:$0xfe]
      %v3305 = vld [vmem:[#allocation2 + $0x20] sm:$0xff]
      %v3306 = vld [vmem:[#allocation2 + $0x28] sm:$0xff]
      %v3307 = vld [vmem:[#allocation2 + $0x30] sm:$0xff]
      %v3308 = vld [vmem:[#allocation2 + $0x38] sm:$0xff]
      %v3309 = vld [vmem:[#allocation2 + $0x40] sm:$0xff]
      %v3310 = vld [vmem:[#allocation2 + $0x48] sm:$0xff]
      %v3311 = vld [vmem:[#allocation2 + $0x50] sm:$0x1]
      %v3312 = vld [vmem:[#allocation2 + $0x58] sm:$0x1]
      %v3313 = vpack.c.bf16 %v3305, %v3303
      %v3314 = vpack.c.bf16 %v3306, %v3304
      %v3315 = vpack.c.bf16 %v3309, %v3307
      %v3316 = vpack.c.bf16 %v3310, %v3308
      %v3317 = vpack.c.bf16 %v3311, %v3311
      %v3318 = vpack.c.bf16 %v3312, %v3312
      %v3320 = vshrl.u32 %v3313, 16
      %v3322 = vshll.u32 %v3313, 16
      %v3324 = vrot.slane %v3322, 1
      %v3325 = vor.u32 %v3320, %v3324
      %v3327 = vshll.u32 %v3315, 16
      %v3329 = vrot.slane %v3327, 1
      %v3330 = vsel %vm505, %v3325, %v3329
      %v3332 = vshrl.u32 %v3314, 16
      %v3334 = vshll.u32 %v3314, 16
      %v3336 = vrot.slane %v3334, 1
      %v3337 = vor.u32 %v3332, %v3336
      %v3339 = vshll.u32 %v3316, 16
      %v3341 = vrot.slane %v3339, 1
      %v3342 = vsel %vm505, %v3337, %v3341
      %v3343 = vshrl.u32 %v3315, 16
      %v3345 = vor.u32 %v3343, %v3329
      %v3347 = vshll.u32 %v3317, 16
      %v3349 = vrot.slane %v3347, 1
      %v3350 = vsel %vm505, %v3345, %v3349
      %v3351 = vshrl.u32 %v3316, 16
      %v3353 = vor.u32 %v3351, %v3341
      %v3355 = vshll.u32 %v3318, 16
      %v3357 = vrot.slane %v3355, 1
      %v3358 = vsel %vm505, %v3353, %v3357
      %3363 = vst [vmem:[#allocation3 + $0x20] sm:$0xff] %v3330
      %3364 = vst [vmem:[#allocation3 + $0x28] sm:$0xff] %v3342
      %3365 = vst [vmem:[#allocation3 + $0xb0] sm:$0xff] %v3350
      %3366 = vst [vmem:[#allocation3 + $0xb8] sm:$0xff] %v3358
      %v3367 = vld [vmem:[#allocation2 + $0x10] sm:$0x80]
      %v3368 = vld [vmem:[#allocation2 + $0x18] sm:$0x80]
      %v3369 = vld [vmem:[#allocation2 + $0x20] sm:$0xff]
      %v3370 = vld [vmem:[#allocation2 + $0x28] sm:$0xff]
      %v3371 = vld [vmem:[#allocation2 + $0x30] sm:$0xff]
      %v3372 = vld [vmem:[#allocation2 + $0x38] sm:$0xff]
      %v3373 = vld [vmem:[#allocation2 + $0x40] sm:$0xff]
      %v3374 = vld [vmem:[#allocation2 + $0x48] sm:$0xff]
      %v3375 = vld [vmem:[#allocation2 + $0x50] sm:$0x7f]
      %v3376 = vld [vmem:[#allocation2 + $0x58] sm:$0x7f]
      %v3377 = vpack.c.bf16 %v3369, %v3367
      %v3378 = vpack.c.bf16 %v3370, %v3368
      %v3379 = vpack.c.bf16 %v3373, %v3371
      %v3380 = vpack.c.bf16 %v3374, %v3372
      %v3381 = vpack.c.bf16 %v3375, %v3375
      %v3382 = vpack.c.bf16 %v3376, %v3376
      %v3384 = vshrl.u32 %v3377, 16
      %v3386 = vrot.slane %v3384, 3
      %v3387 = vshll.u32 %v3377, 16
      %v3389 = vrot.slane %v3387, 4
      %v3390 = vor.u32 %v3386, %v3389
      %v3392 = vshrl.u32 %v3379, 16
      %v3394 = vrot.slane %v3392, 3
      %v3395 = vshll.u32 %v3379, 16
      %v3397 = vrot.slane %v3395, 4
      %v3398 = vor.u32 %v3394, %v3397
      %v3399 = vsel %vm412, %v3390, %v3398
      %v3401 = vshrl.u32 %v3378, 16
      %v3403 = vrot.slane %v3401, 3
      %v3404 = vshll.u32 %v3378, 16
      %v3406 = vrot.slane %v3404, 4
      %v3407 = vor.u32 %v3403, %v3406
      %v3409 = vshrl.u32 %v3380, 16
      %v3411 = vrot.slane %v3409, 3
      %v3412 = vshll.u32 %v3380, 16
      %v3414 = vrot.slane %v3412, 4
      %v3415 = vor.u32 %v3411, %v3414
      %v3416 = vsel %vm412, %v3407, %v3415
      %v3418 = vshrl.u32 %v3381, 16
      %v3420 = vrot.slane %v3418, 3
      %v3421 = vshll.u32 %v3381, 16
      %v3423 = vrot.slane %v3421, 4
      %v3424 = vor.u32 %v3420, %v3423
      %v3425 = vsel %vm412, %v3398, %v3424
      %v3427 = vshrl.u32 %v3382, 16
      %v3429 = vrot.slane %v3427, 3
      %v3430 = vshll.u32 %v3382, 16
      %v3432 = vrot.slane %v3430, 4
      %v3433 = vor.u32 %v3429, %v3432
      %v3434 = vsel %vm412, %v3415, %v3433
      %3439 = vst [vmem:[#allocation3 + $0x30] sm:$0xff] %v3399
      %3440 = vst [vmem:[#allocation3 + $0x38] sm:$0xff] %v3416
      %3441 = vst [vmem:[#allocation3 + $0xc0] sm:$0xff] %v3425
      %3442 = vst [vmem:[#allocation3 + $0xc8] sm:$0xff] %v3434
      %v3443 = vld [vmem:[#allocation2 + $0x20] sm:$0xff]
      %v3444 = vld [vmem:[#allocation2 + $0x28] sm:$0xff]
      %v3445 = vld [vmem:[#allocation2 + $0x30] sm:$0xff]
      %v3446 = vld [vmem:[#allocation2 + $0x38] sm:$0xff]
      %v3447 = vld [vmem:[#allocation2 + $0x40] sm:$0xff]
      %v3448 = vld [vmem:[#allocation2 + $0x48] sm:$0xff]
      %v3449 = vld [vmem:[#allocation2 + $0x50] sm:$0xff]
      %v3450 = vld [vmem:[#allocation2 + $0x58] sm:$0xff]
      %v3451 = vpack.c.bf16 %v3445, %v3443
      %v3452 = vpack.c.bf16 %v3446, %v3444
      %v3453 = vpack.c.bf16 %v3449, %v3447
      %v3454 = vpack.c.bf16 %v3450, %v3448
      %3455 = vst [vmem:[#allocation3 + $0x40] sm:$0xff] %v3451
      %3456 = vst [vmem:[#allocation3 + $0x48] sm:$0xff] %v3452
      %3457 = vst [vmem:[#allocation3 + $0xd0] sm:$0xff] %v3453
      %3458 = vst [vmem:[#allocation3 + $0xd8] sm:$0xff] %v3454
      %v3459 = vld [vmem:[#allocation2 + $0x20] sm:$0xfe]
      %v3460 = vld [vmem:[#allocation2 + $0x28] sm:$0xfe]
      %v3461 = vld [vmem:[#allocation2 + $0x30] sm:$0xff]
      %v3462 = vld [vmem:[#allocation2 + $0x38] sm:$0xff]
      %v3463 = vld [vmem:[#allocation2 + $0x40] sm:$0xff]
      %v3464 = vld [vmem:[#allocation2 + $0x48] sm:$0xff]
      %v3465 = vld [vmem:[#allocation2 + $0x50] sm:$0xff]
      %v3466 = vld [vmem:[#allocation2 + $0x58] sm:$0xff]
      %v3467 = vld [vmem:[#allocation2 + $0x60] sm:$0x1]
      %v3468 = vld [vmem:[#allocation2 + $0x68] sm:$0x1]
      %v3469 = vpack.c.bf16 %v3461, %v3459
      %v3470 = vpack.c.bf16 %v3462, %v3460
      %v3471 = vpack.c.bf16 %v3465, %v3463
      %v3472 = vpack.c.bf16 %v3466, %v3464
      %v3473 = vpack.c.bf16 %v3467, %v3467
      %v3474 = vpack.c.bf16 %v3468, %v3468
      %v3476 = vshrl.u32 %v3469, 16
      %v3478 = vshll.u32 %v3469, 16
      %v3480 = vrot.slane %v3478, 1
      %v3481 = vor.u32 %v3476, %v3480
      %v3483 = vshll.u32 %v3471, 16
      %v3485 = vrot.slane %v3483, 1
      %v3486 = vsel %vm505, %v3481, %v3485
      %v3488 = vshrl.u32 %v3470, 16
      %v3490 = vshll.u32 %v3470, 16
      %v3492 = vrot.slane %v3490, 1
      %v3493 = vor.u32 %v3488, %v3492
      %v3495 = vshll.u32 %v3472, 16
      %v3497 = vrot.slane %v3495, 1
      %v3498 = vsel %vm505, %v3493, %v3497
      %v3499 = vshrl.u32 %v3471, 16
      %v3501 = vor.u32 %v3499, %v3485
      %v3503 = vshll.u32 %v3473, 16
      %v3505 = vrot.slane %v3503, 1
      %v3506 = vsel %vm505, %v3501, %v3505
      %v3507 = vshrl.u32 %v3472, 16
      %v3509 = vor.u32 %v3507, %v3497
      %v3511 = vshll.u32 %v3474, 16
      %v3513 = vrot.slane %v3511, 1
      %v3514 = vsel %vm505, %v3509, %v3513
      %3519 = vst [vmem:[#allocation3 + $0x50] sm:$0xff] %v3486
      %3520 = vst [vmem:[#allocation3 + $0x58] sm:$0xff] %v3498
      %3521 = vst [vmem:[#allocation3 + $0xe0] sm:$0xff] %v3506
      %3522 = vst [vmem:[#allocation3 + $0xe8] sm:$0xff] %v3514
      %v3523 = vld [vmem:[#allocation2 + $0x20] sm:$0x80]
      %v3524 = vld [vmem:[#allocation2 + $0x28] sm:$0x80]
      %v3525 = vld [vmem:[#allocation2 + $0x30] sm:$0xff]
      %v3526 = vld [vmem:[#allocation2 + $0x38] sm:$0xff]
      %v3527 = vld [vmem:[#allocation2 + $0x40] sm:$0xff]
      %v3528 = vld [vmem:[#allocation2 + $0x48] sm:$0xff]
      %v3529 = vld [vmem:[#allocation2 + $0x50] sm:$0xff]
      %v3530 = vld [vmem:[#allocation2 + $0x58] sm:$0xff]
      %v3531 = vld [vmem:[#allocation2 + $0x60] sm:$0x7f]
      %v3532 = vld [vmem:[#allocation2 + $0x68] sm:$0x7f]
      %v3533 = vpack.c.bf16 %v3525, %v3523
      %v3534 = vpack.c.bf16 %v3526, %v3524
      %v3535 = vpack.c.bf16 %v3529, %v3527
      %v3536 = vpack.c.bf16 %v3530, %v3528
      %v3537 = vpack.c.bf16 %v3531, %v3531
      %v3538 = vpack.c.bf16 %v3532, %v3532
      %v3540 = vshrl.u32 %v3533, 16
      %v3542 = vrot.slane %v3540, 3
      %v3543 = vshll.u32 %v3533, 16
      %v3545 = vrot.slane %v3543, 4
      %v3546 = vor.u32 %v3542, %v3545
      %v3548 = vshrl.u32 %v3535, 16
      %v3550 = vrot.slane %v3548, 3
      %v3551 = vshll.u32 %v3535, 16
      %v3553 = vrot.slane %v3551, 4
      %v3554 = vor.u32 %v3550, %v3553
      %v3555 = vsel %vm412, %v3546, %v3554
      %v3557 = vshrl.u32 %v3534, 16
      %v3559 = vrot.slane %v3557, 3
      %v3560 = vshll.u32 %v3534, 16
      %v3562 = vrot.slane %v3560, 4
      %v3563 = vor.u32 %v3559, %v3562
      %v3565 = vshrl.u32 %v3536, 16
      %v3567 = vrot.slane %v3565, 3
      %v3568 = vshll.u32 %v3536, 16
      %v3570 = vrot.slane %v3568, 4
      %v3571 = vor.u32 %v3567, %v3570
      %v3572 = vsel %vm412, %v3563, %v3571
      %v3574 = vshrl.u32 %v3537, 16
      %v3576 = vrot.slane %v3574, 3
      %v3577 = vshll.u32 %v3537, 16
      %v3579 = vrot.slane %v3577, 4
      %v3580 = vor.u32 %v3576, %v3579
      %v3581 = vsel %vm412, %v3554, %v3580
      %v3583 = vshrl.u32 %v3538, 16
      %v3585 = vrot.slane %v3583, 3
      %v3586 = vshll.u32 %v3538, 16
      %v3588 = vrot.slane %v3586, 4
      %v3589 = vor.u32 %v3585, %v3588
      %v3590 = vsel %vm412, %v3571, %v3589
      %3595 = vst [vmem:[#allocation3 + $0x60] sm:$0xff] %v3555
      %3596 = vst [vmem:[#allocation3 + $0x68] sm:$0xff] %v3572
      %3597 = vst [vmem:[#allocation3 + $0xf0] sm:$0xff] %v3581
      %3598 = vst [vmem:[#allocation3 + $0xf8] sm:$0xff] %v3590
      %v3599 = vld [vmem:[#allocation2 + $0x30] sm:$0xff]
      %v3600 = vld [vmem:[#allocation2 + $0x38] sm:$0xff]
      %v3601 = vld [vmem:[#allocation2 + $0x40] sm:$0xff]
      %v3602 = vld [vmem:[#allocation2 + $0x48] sm:$0xff]
      %v3603 = vld [vmem:[#allocation2 + $0x50] sm:$0xff]
      %v3604 = vld [vmem:[#allocation2 + $0x58] sm:$0xff]
      %v3605 = vld [vmem:[#allocation2 + $0x60] sm:$0xff]
      %v3606 = vld [vmem:[#allocation2 + $0x68] sm:$0xff]
      %v3607 = vpack.c.bf16 %v3601, %v3599
      %v3608 = vpack.c.bf16 %v3602, %v3600
      %v3609 = vpack.c.bf16 %v3605, %v3603
      %v3610 = vpack.c.bf16 %v3606, %v3604
      %3611 = vst [vmem:[#allocation3 + $0x70] sm:$0xff] %v3607
      %3612 = vst [vmem:[#allocation3 + $0x78] sm:$0xff] %v3608
      %3613 = vst [vmem:[#allocation3 + $0x100] sm:$0xff] %v3609
      %3614 = vst [vmem:[#allocation3 + $0x108] sm:$0xff] %v3610
      %v3615 = vld [vmem:[#allocation2 + $0x30] sm:$0xfe]
      %v3616 = vld [vmem:[#allocation2 + $0x38] sm:$0xfe]
      %v3617 = vld [vmem:[#allocation2 + $0x40] sm:$0xff]
      %v3618 = vld [vmem:[#allocation2 + $0x48] sm:$0xff]
      %v3619 = vld [vmem:[#allocation2 + $0x50] sm:$0xff]
      %v3620 = vld [vmem:[#allocation2 + $0x58] sm:$0xff]
      %v3621 = vld [vmem:[#allocation2 + $0x60] sm:$0xff]
      %v3622 = vld [vmem:[#allocation2 + $0x68] sm:$0xff]
      %v3623 = vld [vmem:[#allocation2 + $0x70] sm:$0x1]
      %v3624 = vld [vmem:[#allocation2 + $0x78] sm:$0x1]
      %v3625 = vpack.c.bf16 %v3617, %v3615
      %v3626 = vpack.c.bf16 %v3618, %v3616
      %v3627 = vpack.c.bf16 %v3621, %v3619
      %v3628 = vpack.c.bf16 %v3622, %v3620
      %v3629 = vpack.c.bf16 %v3623, %v3623
      %v3630 = vpack.c.bf16 %v3624, %v3624
      %v3632 = vshrl.u32 %v3625, 16
      %v3634 = vshll.u32 %v3625, 16
      %v3636 = vrot.slane %v3634, 1
      %v3637 = vor.u32 %v3632, %v3636
      %v3639 = vshll.u32 %v3627, 16
      %v3641 = vrot.slane %v3639, 1
      %v3642 = vsel %vm505, %v3637, %v3641
      %v3644 = vshrl.u32 %v3626, 16
      %v3646 = vshll.u32 %v3626, 16
      %v3648 = vrot.slane %v3646, 1
      %v3649 = vor.u32 %v3644, %v3648
      %v3651 = vshll.u32 %v3628, 16
      %v3653 = vrot.slane %v3651, 1
      %v3654 = vsel %vm505, %v3649, %v3653
      %v3655 = vshrl.u32 %v3627, 16
      %v3657 = vor.u32 %v3655, %v3641
      %v3659 = vshll.u32 %v3629, 16
      %v3661 = vrot.slane %v3659, 1
      %v3662 = vsel %vm505, %v3657, %v3661
      %v3663 = vshrl.u32 %v3628, 16
      %v3665 = vor.u32 %v3663, %v3653
      %v3667 = vshll.u32 %v3630, 16
      %v3669 = vrot.slane %v3667, 1
      %v3670 = vsel %vm505, %v3665, %v3669
      %3675 = vst [vmem:[#allocation3 + $0x80] sm:$0xff] %v3642
      %3676 = vst [vmem:[#allocation3 + $0x88] sm:$0xff] %v3654
      %3677 = vst [vmem:[#allocation3 + $0x110] sm:$0xff] %v3662
      %3678 = vst [vmem:[#allocation3 + $0x118] sm:$0xff] %v3670
      %v3679 = vld [vmem:[#allocation3] sm:$0xff]
      %v3680 = vld [vmem:[#allocation3 + $0x8] sm:$0xff]
      %v3681 = vld [vmem:[#allocation3 + $0x10] sm:$0xff]
      %v3682 = vld [vmem:[#allocation3 + $0x18] sm:$0xff]
      %v3683 = vld [vmem:[#allocation3 + $0x20] sm:$0xff]
      %v3684 = vld [vmem:[#allocation3 + $0x28] sm:$0xff]
      %v3685 = vld [vmem:[#allocation3 + $0x30] sm:$0xff]
      %v3686 = vld [vmem:[#allocation3 + $0x38] sm:$0xff]
      %v3687 = vld [vmem:[#allocation3 + $0x40] sm:$0xff]
      %v3688 = vld [vmem:[#allocation3 + $0x48] sm:$0xff]
      %v3689 = vld [vmem:[#allocation3 + $0x50] sm:$0xff]
      %v3690 = vld [vmem:[#allocation3 + $0x58] sm:$0xff]
      %v3691 = vld [vmem:[#allocation3 + $0x60] sm:$0xff]
      %v3692 = vld [vmem:[#allocation3 + $0x68] sm:$0xff]
      %v3693 = vld [vmem:[#allocation3 + $0x70] sm:$0xff]
      %v3694 = vld [vmem:[#allocation3 + $0x78] sm:$0xff]
      %v3695 = vld [vmem:[#allocation3 + $0x80] sm:$0xff]
      %v3696 = vld [vmem:[#allocation3 + $0x88] sm:$0xff]
      %v3697 = vld [vmem:[#allocation3 + $0x90] sm:$0xff]
      %v3698 = vld [vmem:[#allocation3 + $0x98] sm:$0xff]
      %v3699 = vld [vmem:[#allocation3 + $0xa0] sm:$0xff]
      %v3700 = vld [vmem:[#allocation3 + $0xa8] sm:$0xff]
      %v3701 = vld [vmem:[#allocation3 + $0xb0] sm:$0xff]
      %v3702 = vld [vmem:[#allocation3 + $0xb8] sm:$0xff]
      %v3703 = vld [vmem:[#allocation3 + $0xc0] sm:$0xff]
      %v3704 = vld [vmem:[#allocation3 + $0xc8] sm:$0xff]
      %v3705 = vld [vmem:[#allocation3 + $0xd0] sm:$0xff]
      %v3706 = vld [vmem:[#allocation3 + $0xd8] sm:$0xff]
      %v3707 = vld [vmem:[#allocation3 + $0xe0] sm:$0xff]
      %v3708 = vld [vmem:[#allocation3 + $0xe8] sm:$0xff]
      %v3709 = vld [vmem:[#allocation3 + $0xf0] sm:$0xff]
      %v3710 = vld [vmem:[#allocation3 + $0xf8] sm:$0xff]
      %v3711 = vld [vmem:[#allocation3 + $0x100] sm:$0xff]
      %v3712 = vld [vmem:[#allocation3 + $0x108] sm:$0xff]
      %v3713 = vld [vmem:[#allocation3 + $0x110] sm:$0xff]
      %v3714 = vld [vmem:[#allocation3 + $0x118] sm:$0xff]
      %v3715 = vld [vmem:[%s6] sm:$0xff]
      %v3716 = vld [vmem:[%s6 + $0x8] sm:$0xff]
      %v3717 = vld [vmem:[%s6 + $0x10] sm:$0xff]
      %v3718 = vld [vmem:[%s6 + $0x18] sm:$0xff]
      %v3719 = vld [vmem:[%s6 + $0x20] sm:$0xff]
      %v3720 = vld [vmem:[%s6 + $0x28] sm:$0xff]
      %v3721 = vld [vmem:[%s6 + $0x30] sm:$0xff]
      %v3722 = vld [vmem:[%s6 + $0x38] sm:$0xff]
      %v3723 = vld [vmem:[%s6 + $0x40] sm:$0xff]
      %v3724 = vld [vmem:[%s6 + $0x48] sm:$0xff]
      %v3725 = vld [vmem:[%s6 + $0x50] sm:$0xff]
      %v3726 = vld [vmem:[%s6 + $0x58] sm:$0xff]
      %v3727 = vld [vmem:[%s6 + $0x60] sm:$0xff]
      %v3728 = vld [vmem:[%s6 + $0x68] sm:$0xff]
      %v3729 = vld [vmem:[%s6 + $0x70] sm:$0xff]
      %v3730 = vld [vmem:[%s6 + $0x78] sm:$0xff]
      %v3731 = vld [vmem:[%s6 + $0x80] sm:$0xff]
      %v3732 = vld [vmem:[%s6 + $0x88] sm:$0xff]
      %v3733 = vld [vmem:[%s6 + $0x90] sm:$0xff]
      %v3734 = vld [vmem:[%s6 + $0x98] sm:$0xff]
      %v3735 = vld [vmem:[%s6 + $0xa0] sm:$0xff]
      %v3736 = vld [vmem:[%s6 + $0xa8] sm:$0xff]
      %v3737 = vld [vmem:[%s6 + $0xb0] sm:$0xff]
      %v3738 = vld [vmem:[%s6 + $0xb8] sm:$0xff]
      %v3739 = vld [vmem:[%s6 + $0xc0] sm:$0xff]
      %v3740 = vld [vmem:[%s6 + $0xc8] sm:$0xff]
      %v3741 = vld [vmem:[%s6 + $0xd0] sm:$0xff]
      %v3742 = vld [vmem:[%s6 + $0xd8] sm:$0xff]
      %v3743 = vld [vmem:[%s6 + $0xe0] sm:$0xff]
      %v3744 = vld [vmem:[%s6 + $0xe8] sm:$0xff]
      %v3745 = vld [vmem:[%s6 + $0xf0] sm:$0xff]
      %v3746 = vld [vmem:[%s6 + $0xf8] sm:$0xff]
      %v3747 = vld [vmem:[%s6 + $0x100] sm:$0xff]
      %v3748 = vld [vmem:[%s6 + $0x108] sm:$0xff]
      %v3749 = vld [vmem:[%s6 + $0x110] sm:$0xff]
      %v3750 = vld [vmem:[%s6 + $0x118] sm:$0xff]
      %v3751 = vld [vmem:[%s6 + $0x120] sm:$0xff]
      %v3752 = vld [vmem:[%s6 + $0x128] sm:$0xff]
      %v3753 = vld [vmem:[%s6 + $0x130] sm:$0xff]
      %v3754 = vld [vmem:[%s6 + $0x138] sm:$0xff]
      %v3755 = vld [vmem:[%s6 + $0x140] sm:$0xff]
      %v3756 = vld [vmem:[%s6 + $0x148] sm:$0xff]
      %v3757 = vld [vmem:[%s6 + $0x150] sm:$0xff]
      %v3758 = vld [vmem:[%s6 + $0x158] sm:$0xff]
      %v3759 = vld [vmem:[%s6 + $0x160] sm:$0xff]
      %v3760 = vld [vmem:[%s6 + $0x168] sm:$0xff]
      %v3761 = vld [vmem:[%s6 + $0x170] sm:$0xff]
      %v3762 = vld [vmem:[%s6 + $0x178] sm:$0xff]
      %v3763 = vld [vmem:[%s6 + $0x180] sm:$0xff]
      %v3764 = vld [vmem:[%s6 + $0x188] sm:$0xff]
      %v3765 = vld [vmem:[%s6 + $0x190] sm:$0xff]
      %v3766 = vld [vmem:[%s6 + $0x198] sm:$0xff]
      %v3767 = vld [vmem:[%s6 + $0x1a0] sm:$0xff]
      %v3768 = vld [vmem:[%s6 + $0x1a8] sm:$0xff]
      %v3769 = vld [vmem:[%s6 + $0x1b0] sm:$0xff]
      %v3770 = vld [vmem:[%s6 + $0x1b8] sm:$0xff]
      %v3771 = vld [vmem:[%s6 + $0x1c0] sm:$0xff]
      %v3772 = vld [vmem:[%s6 + $0x1c8] sm:$0xff]
      %v3773 = vld [vmem:[%s6 + $0x1d0] sm:$0xff]
      %v3774 = vld [vmem:[%s6 + $0x1d8] sm:$0xff]
      %v3775 = vld [vmem:[%s6 + $0x1e0] sm:$0xff]
      %v3776 = vld [vmem:[%s6 + $0x1e8] sm:$0xff]
      %v3777 = vld [vmem:[%s6 + $0x1f0] sm:$0xff]
      %v3778 = vld [vmem:[%s6 + $0x1f8] sm:$0xff]
      %v3779 = vld [vmem:[%s6 + $0x200] sm:$0xff]
      %v3780 = vld [vmem:[%s6 + $0x208] sm:$0xff]
      %v3781 = vld [vmem:[%s6 + $0x210] sm:$0xff]
      %v3782 = vld [vmem:[%s6 + $0x218] sm:$0xff]
      %v3783 = vld [vmem:[%s6 + $0x220] sm:$0xff]
      %v3784 = vld [vmem:[%s6 + $0x228] sm:$0xff]
      %v3785 = vld [vmem:[%s6 + $0x230] sm:$0xff]
      %v3786 = vld [vmem:[%s6 + $0x238] sm:$0xff]
      %v3787 = vld [vmem:[%s6 + $0x240] sm:$0xff]
      %v3788 = vld [vmem:[%s6 + $0x248] sm:$0xff]
      %v3789 = vld [vmem:[%s6 + $0x250] sm:$0xff]
      %v3790 = vld [vmem:[%s6 + $0x258] sm:$0xff]
      %v3791 = vld [vmem:[%s6 + $0x260] sm:$0xff]
      %v3792 = vld [vmem:[%s6 + $0x268] sm:$0xff]
      %v3793 = vld [vmem:[%s6 + $0x270] sm:$0xff]
      %v3794 = vld [vmem:[%s6 + $0x278] sm:$0xff]
      %v3795 = vld [vmem:[%s6 + $0x280] sm:$0xff]
      %v3796 = vld [vmem:[%s6 + $0x288] sm:$0xff]
      %v3797 = vld [vmem:[%s6 + $0x290] sm:$0xff]
      %v3798 = vld [vmem:[%s6 + $0x298] sm:$0xff]
      %v3799 = vld [vmem:[%s6 + $0x2a0] sm:$0xff]
      %v3800 = vld [vmem:[%s6 + $0x2a8] sm:$0xff]
      %v3801 = vld [vmem:[%s6 + $0x2b0] sm:$0xff]
      %v3802 = vld [vmem:[%s6 + $0x2b8] sm:$0xff]
      %v3803 = vld [vmem:[%s6 + $0x2c0] sm:$0xff]
      %v3804 = vld [vmem:[%s6 + $0x2c8] sm:$0xff]
      %v3805 = vld [vmem:[%s6 + $0x2d0] sm:$0xff]
      %v3806 = vld [vmem:[%s6 + $0x2d8] sm:$0xff]
      %v3807 = vld [vmem:[%s6 + $0x2e0] sm:$0xff]
      %v3808 = vld [vmem:[%s6 + $0x2e8] sm:$0xff]
      %v3809 = vld [vmem:[%s6 + $0x2f0] sm:$0xff]
      %v3810 = vld [vmem:[%s6 + $0x2f8] sm:$0xff]
      %v3811 = vld [vmem:[%s6 + $0x300] sm:$0xff]
      %v3812 = vld [vmem:[%s6 + $0x308] sm:$0xff]
      %v3813 = vld [vmem:[%s6 + $0x310] sm:$0xff]
      %v3814 = vld [vmem:[%s6 + $0x318] sm:$0xff]
      %v3815 = vld [vmem:[%s6 + $0x320] sm:$0xff]
      %v3816 = vld [vmem:[%s6 + $0x328] sm:$0xff]
      %v3817 = vld [vmem:[%s6 + $0x330] sm:$0xff]
      %v3818 = vld [vmem:[%s6 + $0x338] sm:$0xff]
      %v3819 = vld [vmem:[%s6 + $0x340] sm:$0xff]
      %v3820 = vld [vmem:[%s6 + $0x348] sm:$0xff]
      %v3821 = vld [vmem:[%s6 + $0x350] sm:$0xff]
      %v3822 = vld [vmem:[%s6 + $0x358] sm:$0xff]
      %v3823 = vld [vmem:[%s6 + $0x360] sm:$0xff]
      %v3824 = vld [vmem:[%s6 + $0x368] sm:$0xff]
      %v3825 = vld [vmem:[%s6 + $0x370] sm:$0xff]
      %v3826 = vld [vmem:[%s6 + $0x378] sm:$0xff]
      %v3827 = vld [vmem:[%s6 + $0x380] sm:$0xff]
      %v3828 = vld [vmem:[%s6 + $0x388] sm:$0xff]
      %v3829 = vld [vmem:[%s6 + $0x390] sm:$0xff]
      %v3830 = vld [vmem:[%s6 + $0x398] sm:$0xff]
      %v3831 = vld [vmem:[%s6 + $0x3a0] sm:$0xff]
      %v3832 = vld [vmem:[%s6 + $0x3a8] sm:$0xff]
      %v3833 = vld [vmem:[%s6 + $0x3b0] sm:$0xff]
      %v3834 = vld [vmem:[%s6 + $0x3b8] sm:$0xff]
      %v3835 = vld [vmem:[%s6 + $0x3c0] sm:$0xff]
      %v3836 = vld [vmem:[%s6 + $0x3c8] sm:$0xff]
      %v3837 = vld [vmem:[%s6 + $0x3d0] sm:$0xff]
      %v3838 = vld [vmem:[%s6 + $0x3d8] sm:$0xff]
      %v3839 = vld [vmem:[%s6 + $0x3e0] sm:$0xff]
      %v3840 = vld [vmem:[%s6 + $0x3e8] sm:$0xff]
      %v3841 = vld [vmem:[%s6 + $0x3f0] sm:$0xff]
      %v3842 = vld [vmem:[%s6 + $0x3f8] sm:$0xff]
      %v3843 = vld [vmem:[%s6 + $0x400] sm:$0xff]
      %v3844 = vld [vmem:[%s6 + $0x408] sm:$0xff]
      %v3845 = vld [vmem:[%s6 + $0x410] sm:$0xff]
      %v3846 = vld [vmem:[%s6 + $0x418] sm:$0xff]
      %v3847 = vld [vmem:[%s6 + $0x420] sm:$0xff]
      %v3848 = vld [vmem:[%s6 + $0x428] sm:$0xff]
      %v3849 = vld [vmem:[%s6 + $0x430] sm:$0xff]
      %v3850 = vld [vmem:[%s6 + $0x438] sm:$0xff]
      %v3851 = vld [vmem:[%s6 + $0x440] sm:$0xff]
      %v3852 = vld [vmem:[%s6 + $0x448] sm:$0xff]
      %v3853 = vld [vmem:[%s6 + $0x450] sm:$0xff]
      %v3854 = vld [vmem:[%s6 + $0x458] sm:$0xff]
      %v3855 = vld [vmem:[%s6 + $0x460] sm:$0xff]
      %v3856 = vld [vmem:[%s6 + $0x468] sm:$0xff]
      %v3857 = vld [vmem:[%s6 + $0x470] sm:$0xff]
      %v3858 = vld [vmem:[%s6 + $0x478] sm:$0xff]
      %v3859 = vld [vmem:[%s6 + $0x480] sm:$0xff]
      %v3860 = vld [vmem:[%s6 + $0x488] sm:$0xff]
      %v3861 = vld [vmem:[%s6 + $0x490] sm:$0xff]
      %v3862 = vld [vmem:[%s6 + $0x498] sm:$0xff]
      %v3863 = vld [vmem:[%s6 + $0x4a0] sm:$0xff]
      %v3864 = vld [vmem:[%s6 + $0x4a8] sm:$0xff]
      %v3865 = vld [vmem:[%s6 + $0x4b0] sm:$0xff]
      %v3866 = vld [vmem:[%s6 + $0x4b8] sm:$0xff]
      %v3867 = vld [vmem:[%s6 + $0x4c0] sm:$0xff]
      %v3868 = vld [vmem:[%s6 + $0x4c8] sm:$0xff]
      %v3869 = vld [vmem:[%s6 + $0x4d0] sm:$0xff]
      %v3870 = vld [vmem:[%s6 + $0x4d8] sm:$0xff]
      %v3871 = vld [vmem:[%s6 + $0x4e0] sm:$0xff]
      %v3872 = vld [vmem:[%s6 + $0x4e8] sm:$0xff]
      %v3873 = vld [vmem:[%s6 + $0x4f0] sm:$0xff]
      %v3874 = vld [vmem:[%s6 + $0x4f8] sm:$0xff]
      %v3875 = vld [vmem:[%s6 + $0x500] sm:$0xff]
      %v3876 = vld [vmem:[%s6 + $0x508] sm:$0xff]
      %v3877 = vld [vmem:[%s6 + $0x510] sm:$0xff]
      %v3878 = vld [vmem:[%s6 + $0x518] sm:$0xff]
      %v3879 = vld [vmem:[%s6 + $0x520] sm:$0xff]
      %v3880 = vld [vmem:[%s6 + $0x528] sm:$0xff]
      %v3881 = vld [vmem:[%s6 + $0x530] sm:$0xff]
      %v3882 = vld [vmem:[%s6 + $0x538] sm:$0xff]
      %v3883 = vld [vmem:[%s6 + $0x540] sm:$0xff]
      %v3884 = vld [vmem:[%s6 + $0x548] sm:$0xff]
      %v3885 = vld [vmem:[%s6 + $0x550] sm:$0xff]
      %v3886 = vld [vmem:[%s6 + $0x558] sm:$0xff]
      %v3887 = vld [vmem:[%s6 + $0x560] sm:$0xff]
      %v3888 = vld [vmem:[%s6 + $0x568] sm:$0xff]
      %v3889 = vld [vmem:[%s6 + $0x570] sm:$0xff]
      %v3890 = vld [vmem:[%s6 + $0x578] sm:$0xff]
      %v3891 = vld [vmem:[%s6 + $0x580] sm:$0xff]
      %v3892 = vld [vmem:[%s6 + $0x588] sm:$0xff]
      %v3893 = vld [vmem:[%s6 + $0x590] sm:$0xff]
      %v3894 = vld [vmem:[%s6 + $0x598] sm:$0xff]
      %v3895 = vld [vmem:[%s6 + $0x5a0] sm:$0xff]
      %v3896 = vld [vmem:[%s6 + $0x5a8] sm:$0xff]
      %v3897 = vld [vmem:[%s6 + $0x5b0] sm:$0xff]
      %v3898 = vld [vmem:[%s6 + $0x5b8] sm:$0xff]
      %v3899 = vld [vmem:[%s6 + $0x5c0] sm:$0xff]
      %v3900 = vld [vmem:[%s6 + $0x5c8] sm:$0xff]
      %v3901 = vld [vmem:[%s6 + $0x5d0] sm:$0xff]
      %v3902 = vld [vmem:[%s6 + $0x5d8] sm:$0xff]
      %v3903 = vld [vmem:[%s6 + $0x5e0] sm:$0xff]
      %v3904 = vld [vmem:[%s6 + $0x5e8] sm:$0xff]
      %v3905 = vld [vmem:[%s6 + $0x5f0] sm:$0xff]
      %v3906 = vld [vmem:[%s6 + $0x5f8] sm:$0xff]
      %v3907 = vld [vmem:[%s6 + $0x600] sm:$0xff]
      %v3908 = vld [vmem:[%s6 + $0x608] sm:$0xff]
      %v3909 = vld [vmem:[%s6 + $0x610] sm:$0xff]
      %v3910 = vld [vmem:[%s6 + $0x618] sm:$0xff]
      %v3911 = vld [vmem:[%s6 + $0x620] sm:$0xff]
      %v3912 = vld [vmem:[%s6 + $0x628] sm:$0xff]
      %v3913 = vld [vmem:[%s6 + $0x630] sm:$0xff]
      %v3914 = vld [vmem:[%s6 + $0x638] sm:$0xff]
      %v3915 = vld [vmem:[%s6 + $0x640] sm:$0xff]
      %v3916 = vld [vmem:[%s6 + $0x648] sm:$0xff]
      %v3917 = vld [vmem:[%s6 + $0x650] sm:$0xff]
      %v3918 = vld [vmem:[%s6 + $0x658] sm:$0xff]
      %v3919 = vld [vmem:[%s6 + $0x660] sm:$0xff]
      %v3920 = vld [vmem:[%s6 + $0x668] sm:$0xff]
      %v3921 = vld [vmem:[%s6 + $0x670] sm:$0xff]
      %v3922 = vld [vmem:[%s6 + $0x678] sm:$0xff]
      %v3923 = vld [vmem:[%s6 + $0x680] sm:$0xff]
      %v3924 = vld [vmem:[%s6 + $0x688] sm:$0xff]
      %v3925 = vld [vmem:[%s6 + $0x690] sm:$0xff]
      %v3926 = vld [vmem:[%s6 + $0x698] sm:$0xff]
      %v3927 = vld [vmem:[%s6 + $0x6a0] sm:$0xff]
      %v3928 = vld [vmem:[%s6 + $0x6a8] sm:$0xff]
      %v3929 = vld [vmem:[%s6 + $0x6b0] sm:$0xff]
      %v3930 = vld [vmem:[%s6 + $0x6b8] sm:$0xff]
      %v3931 = vld [vmem:[%s6 + $0x6c0] sm:$0xff]
      %v3932 = vld [vmem:[%s6 + $0x6c8] sm:$0xff]
      %v3933 = vld [vmem:[%s6 + $0x6d0] sm:$0xff]
      %v3934 = vld [vmem:[%s6 + $0x6d8] sm:$0xff]
      %v3935 = vld [vmem:[%s6 + $0x6e0] sm:$0xff]
      %v3936 = vld [vmem:[%s6 + $0x6e8] sm:$0xff]
      %v3937 = vld [vmem:[%s6 + $0x6f0] sm:$0xff]
      %v3938 = vld [vmem:[%s6 + $0x6f8] sm:$0xff]
      %v3939 = vld [vmem:[%s6 + $0x700] sm:$0xff]
      %v3940 = vld [vmem:[%s6 + $0x708] sm:$0xff]
      %v3941 = vld [vmem:[%s6 + $0x710] sm:$0xff]
      %v3942 = vld [vmem:[%s6 + $0x718] sm:$0xff]
      %v3943 = vld [vmem:[%s6 + $0x720] sm:$0xff]
      %v3944 = vld [vmem:[%s6 + $0x728] sm:$0xff]
      %v3945 = vld [vmem:[%s6 + $0x730] sm:$0xff]
      %v3946 = vld [vmem:[%s6 + $0x738] sm:$0xff]
      %v3947 = vld [vmem:[%s6 + $0x740] sm:$0xff]
      %v3948 = vld [vmem:[%s6 + $0x748] sm:$0xff]
      %v3949 = vld [vmem:[%s6 + $0x750] sm:$0xff]
      %v3950 = vld [vmem:[%s6 + $0x758] sm:$0xff]
      %v3951 = vld [vmem:[%s6 + $0x760] sm:$0xff]
      %v3952 = vld [vmem:[%s6 + $0x768] sm:$0xff]
      %v3953 = vld [vmem:[%s6 + $0x770] sm:$0xff]
      %v3954 = vld [vmem:[%s6 + $0x778] sm:$0xff]
      %v3955 = vld [vmem:[%s6 + $0x780] sm:$0xff]
      %v3956 = vld [vmem:[%s6 + $0x788] sm:$0xff]
      %v3957 = vld [vmem:[%s6 + $0x790] sm:$0xff]
      %v3958 = vld [vmem:[%s6 + $0x798] sm:$0xff]
      %v3959 = vld [vmem:[%s6 + $0x7a0] sm:$0xff]
      %v3960 = vld [vmem:[%s6 + $0x7a8] sm:$0xff]
      %v3961 = vld [vmem:[%s6 + $0x7b0] sm:$0xff]
      %v3962 = vld [vmem:[%s6 + $0x7b8] sm:$0xff]
      %v3963 = vld [vmem:[%s6 + $0x7c0] sm:$0xff]
      %v3964 = vld [vmem:[%s6 + $0x7c8] sm:$0xff]
      %v3965 = vld [vmem:[%s6 + $0x7d0] sm:$0xff]
      %v3966 = vld [vmem:[%s6 + $0x7d8] sm:$0xff]
      %v3967 = vld [vmem:[%s6 + $0x7e0] sm:$0xff]
      %v3968 = vld [vmem:[%s6 + $0x7e8] sm:$0xff]
      %v3969 = vld [vmem:[%s6 + $0x7f0] sm:$0xff]
      %v3970 = vld [vmem:[%s6 + $0x7f8] sm:$0xff]
      %v3971 = vld [vmem:[%s6 + $0x800] sm:$0xff]
      %v3972 = vld [vmem:[%s6 + $0x808] sm:$0xff]
      %v3973 = vld [vmem:[%s6 + $0x810] sm:$0xff]
      %v3974 = vld [vmem:[%s6 + $0x818] sm:$0xff]
      %v3975 = vld [vmem:[%s6 + $0x820] sm:$0xff]
      %v3976 = vld [vmem:[%s6 + $0x828] sm:$0xff]
      %v3977 = vld [vmem:[%s6 + $0x830] sm:$0xff]
      %v3978 = vld [vmem:[%s6 + $0x838] sm:$0xff]
      %v3979 = vld [vmem:[%s6 + $0x840] sm:$0xff]
      %v3980 = vld [vmem:[%s6 + $0x848] sm:$0xff]
      %v3981 = vld [vmem:[%s6 + $0x850] sm:$0xff]
      %v3982 = vld [vmem:[%s6 + $0x858] sm:$0xff]
      %v3983 = vld [vmem:[%s6 + $0x860] sm:$0xff]
      %v3984 = vld [vmem:[%s6 + $0x868] sm:$0xff]
      %v3985 = vld [vmem:[%s6 + $0x870] sm:$0xff]
      %v3986 = vld [vmem:[%s6 + $0x878] sm:$0xff]
      %v3987 = vld [vmem:[%s6 + $0x880] sm:$0xff]
      %v3988 = vld [vmem:[%s6 + $0x888] sm:$0xff]
      %v3989 = vld [vmem:[%s6 + $0x890] sm:$0xff]
      %v3990 = vld [vmem:[%s6 + $0x898] sm:$0xff]
      %v3991 = vld [vmem:[%s6 + $0x8a0] sm:$0xff]
      %v3992 = vld [vmem:[%s6 + $0x8a8] sm:$0xff]
      %v3993 = vld [vmem:[%s6 + $0x8b0] sm:$0xff]
      %v3994 = vld [vmem:[%s6 + $0x8b8] sm:$0xff]
      %v3995 = vld [vmem:[%s6 + $0x8c0] sm:$0xff]
      %v3996 = vld [vmem:[%s6 + $0x8c8] sm:$0xff]
      %v3997 = vld [vmem:[%s6 + $0x8d0] sm:$0xff]
      %v3998 = vld [vmem:[%s6 + $0x8d8] sm:$0xff]
      %v3999 = vld [vmem:[%s6 + $0x8e0] sm:$0xff]
      %v4000 = vld [vmem:[%s6 + $0x8e8] sm:$0xff]
      %v4001 = vld [vmem:[%s6 + $0x8f0] sm:$0xff]
      %v4002 = vld [vmem:[%s6 + $0x8f8] sm:$0xff]
      %v4291 = vunpack.c.l.b16 %v3715
      %v4292 = vunpack.c.h.b16 %v3715
      %v4293 = vunpack.c.l.b16 %v3716
      %v4294 = vunpack.c.h.b16 %v3716
      %v4295 = vunpack.c.l.b16 %v3717
      %v4296 = vunpack.c.h.b16 %v3717
      %v4297 = vunpack.c.l.b16 %v3718
      %v4298 = vunpack.c.h.b16 %v3718
      %v4299 = vunpack.c.l.b16 %v3719
      %v4300 = vunpack.c.h.b16 %v3719
      %v4301 = vunpack.c.l.b16 %v3720
      %v4302 = vunpack.c.h.b16 %v3720
      %v4303 = vunpack.c.l.b16 %v3721
      %v4304 = vunpack.c.h.b16 %v3721
      %v4305 = vunpack.c.l.b16 %v3722
      %v4306 = vunpack.c.h.b16 %v3722
      %v4307 = vunpack.c.l.b16 %v3723
      %v4308 = vunpack.c.h.b16 %v3723
      %v4309 = vunpack.c.l.b16 %v3724
      %v4310 = vunpack.c.h.b16 %v3724
      %v4311 = vunpack.c.l.b16 %v3725
      %v4312 = vunpack.c.h.b16 %v3725
      %v4313 = vunpack.c.l.b16 %v3726
      %v4314 = vunpack.c.h.b16 %v3726
      %v4315 = vunpack.c.l.b16 %v3727
      %v4316 = vunpack.c.h.b16 %v3727
      %v4317 = vunpack.c.l.b16 %v3728
      %v4318 = vunpack.c.h.b16 %v3728
      %v4319 = vunpack.c.l.b16 %v3729
      %v4320 = vunpack.c.h.b16 %v3729
      %v4321 = vunpack.c.l.b16 %v3730
      %v4322 = vunpack.c.h.b16 %v3730
      %v4323 = vunpack.c.l.b16 %v3731
      %v4324 = vunpack.c.h.b16 %v3731
      %v4325 = vunpack.c.l.b16 %v3732
      %v4326 = vunpack.c.h.b16 %v3732
      %v4327 = vunpack.c.l.b16 %v3733
      %v4328 = vunpack.c.h.b16 %v3733
      %v4329 = vunpack.c.l.b16 %v3734
      %v4330 = vunpack.c.h.b16 %v3734
      %v4331 = vunpack.c.l.b16 %v3735
      %v4332 = vunpack.c.h.b16 %v3735
      %v4333 = vunpack.c.l.b16 %v3736
      %v4334 = vunpack.c.h.b16 %v3736
      %v4335 = vunpack.c.l.b16 %v3737
      %v4336 = vunpack.c.h.b16 %v3737
      %v4337 = vunpack.c.l.b16 %v3738
      %v4338 = vunpack.c.h.b16 %v3738
      %v4339 = vunpack.c.l.b16 %v3739
      %v4340 = vunpack.c.h.b16 %v3739
      %v4341 = vunpack.c.l.b16 %v3740
      %v4342 = vunpack.c.h.b16 %v3740
      %v4343 = vunpack.c.l.b16 %v3741
      %v4344 = vunpack.c.h.b16 %v3741
      %v4345 = vunpack.c.l.b16 %v3742
      %v4346 = vunpack.c.h.b16 %v3742
      %v4347 = vunpack.c.l.b16 %v3743
      %v4348 = vunpack.c.h.b16 %v3743
      %v4349 = vunpack.c.l.b16 %v3744
      %v4350 = vunpack.c.h.b16 %v3744
      %v4351 = vunpack.c.l.b16 %v3745
      %v4352 = vunpack.c.h.b16 %v3745
      %v4353 = vunpack.c.l.b16 %v3746
      %v4354 = vunpack.c.h.b16 %v3746
      %v4355 = vunpack.c.l.b16 %v3747
      %v4356 = vunpack.c.h.b16 %v3747
      %v4357 = vunpack.c.l.b16 %v3748
      %v4358 = vunpack.c.h.b16 %v3748
      %v4359 = vunpack.c.l.b16 %v3749
      %v4360 = vunpack.c.h.b16 %v3749
      %v4361 = vunpack.c.l.b16 %v3750
      %v4362 = vunpack.c.h.b16 %v3750
      %v4363 = vunpack.c.l.b16 %v3751
      %v4364 = vunpack.c.h.b16 %v3751
      %v4365 = vunpack.c.l.b16 %v3752
      %v4366 = vunpack.c.h.b16 %v3752
      %v4367 = vunpack.c.l.b16 %v3753
      %v4368 = vunpack.c.h.b16 %v3753
      %v4369 = vunpack.c.l.b16 %v3754
      %v4370 = vunpack.c.h.b16 %v3754
      %v4371 = vunpack.c.l.b16 %v3755
      %v4372 = vunpack.c.h.b16 %v3755
      %v4373 = vunpack.c.l.b16 %v3756
      %v4374 = vunpack.c.h.b16 %v3756
      %v4375 = vunpack.c.l.b16 %v3757
      %v4376 = vunpack.c.h.b16 %v3757
      %v4377 = vunpack.c.l.b16 %v3758
      %v4378 = vunpack.c.h.b16 %v3758
      %v4379 = vunpack.c.l.b16 %v3759
      %v4380 = vunpack.c.h.b16 %v3759
      %v4381 = vunpack.c.l.b16 %v3760
      %v4382 = vunpack.c.h.b16 %v3760
      %v4383 = vunpack.c.l.b16 %v3761
      %v4384 = vunpack.c.h.b16 %v3761
      %v4385 = vunpack.c.l.b16 %v3762
      %v4386 = vunpack.c.h.b16 %v3762
      %v4387 = vunpack.c.l.b16 %v3763
      %v4388 = vunpack.c.h.b16 %v3763
      %v4389 = vunpack.c.l.b16 %v3764
      %v4390 = vunpack.c.h.b16 %v3764
      %v4391 = vunpack.c.l.b16 %v3765
      %v4392 = vunpack.c.h.b16 %v3765
      %v4393 = vunpack.c.l.b16 %v3766
      %v4394 = vunpack.c.h.b16 %v3766
      %v4395 = vunpack.c.l.b16 %v3767
      %v4396 = vunpack.c.h.b16 %v3767
      %v4397 = vunpack.c.l.b16 %v3768
      %v4398 = vunpack.c.h.b16 %v3768
      %v4399 = vunpack.c.l.b16 %v3769
      %v4400 = vunpack.c.h.b16 %v3769
      %v4401 = vunpack.c.l.b16 %v3770
      %v4402 = vunpack.c.h.b16 %v3770
      %v4403 = vunpack.c.l.b16 %v3771
      %v4404 = vunpack.c.h.b16 %v3771
      %v4405 = vunpack.c.l.b16 %v3772
      %v4406 = vunpack.c.h.b16 %v3772
      %v4407 = vunpack.c.l.b16 %v3773
      %v4408 = vunpack.c.h.b16 %v3773
      %v4409 = vunpack.c.l.b16 %v3774
      %v4410 = vunpack.c.h.b16 %v3774
      %v4411 = vunpack.c.l.b16 %v3775
      %v4412 = vunpack.c.h.b16 %v3775
      %v4413 = vunpack.c.l.b16 %v3776
      %v4414 = vunpack.c.h.b16 %v3776
      %v4415 = vunpack.c.l.b16 %v3777
      %v4416 = vunpack.c.h.b16 %v3777
      %v4417 = vunpack.c.l.b16 %v3778
      %v4418 = vunpack.c.h.b16 %v3778
      %v4419 = vunpack.c.l.b16 %v3779
      %v4420 = vunpack.c.h.b16 %v3779
      %v4421 = vunpack.c.l.b16 %v3780
      %v4422 = vunpack.c.h.b16 %v3780
      %v4423 = vunpack.c.l.b16 %v3781
      %v4424 = vunpack.c.h.b16 %v3781
      %v4425 = vunpack.c.l.b16 %v3782
      %v4426 = vunpack.c.h.b16 %v3782
      %v4427 = vunpack.c.l.b16 %v3783
      %v4428 = vunpack.c.h.b16 %v3783
      %v4429 = vunpack.c.l.b16 %v3784
      %v4430 = vunpack.c.h.b16 %v3784
      %v4431 = vunpack.c.l.b16 %v3785
      %v4432 = vunpack.c.h.b16 %v3785
      %v4433 = vunpack.c.l.b16 %v3786
      %v4434 = vunpack.c.h.b16 %v3786
      %v4435 = vunpack.c.l.b16 %v3787
      %v4436 = vunpack.c.h.b16 %v3787
      %v4437 = vunpack.c.l.b16 %v3788
      %v4438 = vunpack.c.h.b16 %v3788
      %v4439 = vunpack.c.l.b16 %v3789
      %v4440 = vunpack.c.h.b16 %v3789
      %v4441 = vunpack.c.l.b16 %v3790
      %v4442 = vunpack.c.h.b16 %v3790
      %v4443 = vunpack.c.l.b16 %v3791
      %v4444 = vunpack.c.h.b16 %v3791
      %v4445 = vunpack.c.l.b16 %v3792
      %v4446 = vunpack.c.h.b16 %v3792
      %v4447 = vunpack.c.l.b16 %v3793
      %v4448 = vunpack.c.h.b16 %v3793
      %v4449 = vunpack.c.l.b16 %v3794
      %v4450 = vunpack.c.h.b16 %v3794
      %v4451 = vunpack.c.l.b16 %v3795
      %v4452 = vunpack.c.h.b16 %v3795
      %v4453 = vunpack.c.l.b16 %v3796
      %v4454 = vunpack.c.h.b16 %v3796
      %v4455 = vunpack.c.l.b16 %v3797
      %v4456 = vunpack.c.h.b16 %v3797
      %v4457 = vunpack.c.l.b16 %v3798
      %v4458 = vunpack.c.h.b16 %v3798
      %v4459 = vunpack.c.l.b16 %v3799
      %v4460 = vunpack.c.h.b16 %v3799
      %v4461 = vunpack.c.l.b16 %v3800
      %v4462 = vunpack.c.h.b16 %v3800
      %v4463 = vunpack.c.l.b16 %v3801
      %v4464 = vunpack.c.h.b16 %v3801
      %v4465 = vunpack.c.l.b16 %v3802
      %v4466 = vunpack.c.h.b16 %v3802
      %v4467 = vunpack.c.l.b16 %v3803
      %v4468 = vunpack.c.h.b16 %v3803
      %v4469 = vunpack.c.l.b16 %v3804
      %v4470 = vunpack.c.h.b16 %v3804
      %v4471 = vunpack.c.l.b16 %v3805
      %v4472 = vunpack.c.h.b16 %v3805
      %v4473 = vunpack.c.l.b16 %v3806
      %v4474 = vunpack.c.h.b16 %v3806
      %v4475 = vunpack.c.l.b16 %v3807
      %v4476 = vunpack.c.h.b16 %v3807
      %v4477 = vunpack.c.l.b16 %v3808
      %v4478 = vunpack.c.h.b16 %v3808
      %v4479 = vunpack.c.l.b16 %v3809
      %v4480 = vunpack.c.h.b16 %v3809
      %v4481 = vunpack.c.l.b16 %v3810
      %v4482 = vunpack.c.h.b16 %v3810
      %v4483 = vunpack.c.l.b16 %v3811
      %v4484 = vunpack.c.h.b16 %v3811
      %v4485 = vunpack.c.l.b16 %v3812
      %v4486 = vunpack.c.h.b16 %v3812
      %v4487 = vunpack.c.l.b16 %v3813
      %v4488 = vunpack.c.h.b16 %v3813
      %v4489 = vunpack.c.l.b16 %v3814
      %v4490 = vunpack.c.h.b16 %v3814
      %v4491 = vunpack.c.l.b16 %v3815
      %v4492 = vunpack.c.h.b16 %v3815
      %v4493 = vunpack.c.l.b16 %v3816
      %v4494 = vunpack.c.h.b16 %v3816
      %v4495 = vunpack.c.l.b16 %v3817
      %v4496 = vunpack.c.h.b16 %v3817
      %v4497 = vunpack.c.l.b16 %v3818
      %v4498 = vunpack.c.h.b16 %v3818
      %v4499 = vunpack.c.l.b16 %v3819
      %v4500 = vunpack.c.h.b16 %v3819
      %v4501 = vunpack.c.l.b16 %v3820
      %v4502 = vunpack.c.h.b16 %v3820
      %v4503 = vunpack.c.l.b16 %v3821
      %v4504 = vunpack.c.h.b16 %v3821
      %v4505 = vunpack.c.l.b16 %v3822
      %v4506 = vunpack.c.h.b16 %v3822
      %v4507 = vunpack.c.l.b16 %v3823
      %v4508 = vunpack.c.h.b16 %v3823
      %v4509 = vunpack.c.l.b16 %v3824
      %v4510 = vunpack.c.h.b16 %v3824
      %v4511 = vunpack.c.l.b16 %v3825
      %v4512 = vunpack.c.h.b16 %v3825
      %v4513 = vunpack.c.l.b16 %v3826
      %v4514 = vunpack.c.h.b16 %v3826
      %v4515 = vunpack.c.l.b16 %v3827
      %v4516 = vunpack.c.h.b16 %v3827
      %v4517 = vunpack.c.l.b16 %v3828
      %v4518 = vunpack.c.h.b16 %v3828
      %v4519 = vunpack.c.l.b16 %v3829
      %v4520 = vunpack.c.h.b16 %v3829
      %v4521 = vunpack.c.l.b16 %v3830
      %v4522 = vunpack.c.h.b16 %v3830
      %v4523 = vunpack.c.l.b16 %v3831
      %v4524 = vunpack.c.h.b16 %v3831
      %v4525 = vunpack.c.l.b16 %v3832
      %v4526 = vunpack.c.h.b16 %v3832
      %v4527 = vunpack.c.l.b16 %v3833
      %v4528 = vunpack.c.h.b16 %v3833
      %v4529 = vunpack.c.l.b16 %v3834
      %v4530 = vunpack.c.h.b16 %v3834
      %v4531 = vunpack.c.l.b16 %v3835
      %v4532 = vunpack.c.h.b16 %v3835
      %v4533 = vunpack.c.l.b16 %v3836
      %v4534 = vunpack.c.h.b16 %v3836
      %v4535 = vunpack.c.l.b16 %v3837
      %v4536 = vunpack.c.h.b16 %v3837
      %v4537 = vunpack.c.l.b16 %v3838
      %v4538 = vunpack.c.h.b16 %v3838
      %v4539 = vunpack.c.l.b16 %v3839
      %v4540 = vunpack.c.h.b16 %v3839
      %v4541 = vunpack.c.l.b16 %v3840
      %v4542 = vunpack.c.h.b16 %v3840
      %v4543 = vunpack.c.l.b16 %v3841
      %v4544 = vunpack.c.h.b16 %v3841
      %v4545 = vunpack.c.l.b16 %v3842
      %v4546 = vunpack.c.h.b16 %v3842
      %v4547 = vunpack.c.l.b16 %v3843
      %v4548 = vunpack.c.h.b16 %v3843
      %v4549 = vunpack.c.l.b16 %v3844
      %v4550 = vunpack.c.h.b16 %v3844
      %v4551 = vunpack.c.l.b16 %v3845
      %v4552 = vunpack.c.h.b16 %v3845
      %v4553 = vunpack.c.l.b16 %v3846
      %v4554 = vunpack.c.h.b16 %v3846
      %v4555 = vunpack.c.l.b16 %v3847
      %v4556 = vunpack.c.h.b16 %v3847
      %v4557 = vunpack.c.l.b16 %v3848
      %v4558 = vunpack.c.h.b16 %v3848
      %v4559 = vunpack.c.l.b16 %v3849
      %v4560 = vunpack.c.h.b16 %v3849
      %v4561 = vunpack.c.l.b16 %v3850
      %v4562 = vunpack.c.h.b16 %v3850
      %v4563 = vunpack.c.l.b16 %v3851
      %v4564 = vunpack.c.h.b16 %v3851
      %v4565 = vunpack.c.l.b16 %v3852
      %v4566 = vunpack.c.h.b16 %v3852
      %v4567 = vunpack.c.l.b16 %v3853
      %v4568 = vunpack.c.h.b16 %v3853
      %v4569 = vunpack.c.l.b16 %v3854
      %v4570 = vunpack.c.h.b16 %v3854
      %v4571 = vunpack.c.l.b16 %v3855
      %v4572 = vunpack.c.h.b16 %v3855
      %v4573 = vunpack.c.l.b16 %v3856
      %v4574 = vunpack.c.h.b16 %v3856
      %v4575 = vunpack.c.l.b16 %v3857
      %v4576 = vunpack.c.h.b16 %v3857
      %v4577 = vunpack.c.l.b16 %v3858
      %v4578 = vunpack.c.h.b16 %v3858
      %v4579 = vunpack.c.l.b16 %v3859
      %v4580 = vunpack.c.h.b16 %v3859
      %v4581 = vunpack.c.l.b16 %v3860
      %v4582 = vunpack.c.h.b16 %v3860
      %v4583 = vunpack.c.l.b16 %v3861
      %v4584 = vunpack.c.h.b16 %v3861
      %v4585 = vunpack.c.l.b16 %v3862
      %v4586 = vunpack.c.h.b16 %v3862
      %v4587 = vunpack.c.l.b16 %v3863
      %v4588 = vunpack.c.h.b16 %v3863
      %v4589 = vunpack.c.l.b16 %v3864
      %v4590 = vunpack.c.h.b16 %v3864
      %v4591 = vunpack.c.l.b16 %v3865
      %v4592 = vunpack.c.h.b16 %v3865
      %v4593 = vunpack.c.l.b16 %v3866
      %v4594 = vunpack.c.h.b16 %v3866
      %v4595 = vunpack.c.l.b16 %v3867
      %v4596 = vunpack.c.h.b16 %v3867
      %v4597 = vunpack.c.l.b16 %v3868
      %v4598 = vunpack.c.h.b16 %v3868
      %v4599 = vunpack.c.l.b16 %v3869
      %v4600 = vunpack.c.h.b16 %v3869
      %v4601 = vunpack.c.l.b16 %v3870
      %v4602 = vunpack.c.h.b16 %v3870
      %v4603 = vunpack.c.l.b16 %v3871
      %v4604 = vunpack.c.h.b16 %v3871
      %v4605 = vunpack.c.l.b16 %v3872
      %v4606 = vunpack.c.h.b16 %v3872
      %v4607 = vunpack.c.l.b16 %v3873
      %v4608 = vunpack.c.h.b16 %v3873
      %v4609 = vunpack.c.l.b16 %v3874
      %v4610 = vunpack.c.h.b16 %v3874
      %v4611 = vunpack.c.l.b16 %v3875
      %v4612 = vunpack.c.h.b16 %v3875
      %v4613 = vunpack.c.l.b16 %v3876
      %v4614 = vunpack.c.h.b16 %v3876
      %v4615 = vunpack.c.l.b16 %v3877
      %v4616 = vunpack.c.h.b16 %v3877
      %v4617 = vunpack.c.l.b16 %v3878
      %v4618 = vunpack.c.h.b16 %v3878
      %v4619 = vunpack.c.l.b16 %v3879
      %v4620 = vunpack.c.h.b16 %v3879
      %v4621 = vunpack.c.l.b16 %v3880
      %v4622 = vunpack.c.h.b16 %v3880
      %v4623 = vunpack.c.l.b16 %v3881
      %v4624 = vunpack.c.h.b16 %v3881
      %v4625 = vunpack.c.l.b16 %v3882
      %v4626 = vunpack.c.h.b16 %v3882
      %v4627 = vunpack.c.l.b16 %v3883
      %v4628 = vunpack.c.h.b16 %v3883
      %v4629 = vunpack.c.l.b16 %v3884
      %v4630 = vunpack.c.h.b16 %v3884
      %v4631 = vunpack.c.l.b16 %v3885
      %v4632 = vunpack.c.h.b16 %v3885
      %v4633 = vunpack.c.l.b16 %v3886
      %v4634 = vunpack.c.h.b16 %v3886
      %v4635 = vunpack.c.l.b16 %v3887
      %v4636 = vunpack.c.h.b16 %v3887
      %v4637 = vunpack.c.l.b16 %v3888
      %v4638 = vunpack.c.h.b16 %v3888
      %v4639 = vunpack.c.l.b16 %v3889
      %v4640 = vunpack.c.h.b16 %v3889
      %v4641 = vunpack.c.l.b16 %v3890
      %v4642 = vunpack.c.h.b16 %v3890
      %v4643 = vunpack.c.l.b16 %v3891
      %v4644 = vunpack.c.h.b16 %v3891
      %v4645 = vunpack.c.l.b16 %v3892
      %v4646 = vunpack.c.h.b16 %v3892
      %v4647 = vunpack.c.l.b16 %v3893
      %v4648 = vunpack.c.h.b16 %v3893
      %v4649 = vunpack.c.l.b16 %v3894
      %v4650 = vunpack.c.h.b16 %v3894
      %v4651 = vunpack.c.l.b16 %v3895
      %v4652 = vunpack.c.h.b16 %v3895
      %v4653 = vunpack.c.l.b16 %v3896
      %v4654 = vunpack.c.h.b16 %v3896
      %v4655 = vunpack.c.l.b16 %v3897
      %v4656 = vunpack.c.h.b16 %v3897
      %v4657 = vunpack.c.l.b16 %v3898
      %v4658 = vunpack.c.h.b16 %v3898
      %v4659 = vunpack.c.l.b16 %v3899
      %v4660 = vunpack.c.h.b16 %v3899
      %v4661 = vunpack.c.l.b16 %v3900
      %v4662 = vunpack.c.h.b16 %v3900
      %v4663 = vunpack.c.l.b16 %v3901
      %v4664 = vunpack.c.h.b16 %v3901
      %v4665 = vunpack.c.l.b16 %v3902
      %v4666 = vunpack.c.h.b16 %v3902
      %v4667 = vunpack.c.l.b16 %v3903
      %v4668 = vunpack.c.h.b16 %v3903
      %v4669 = vunpack.c.l.b16 %v3904
      %v4670 = vunpack.c.h.b16 %v3904
      %v4671 = vunpack.c.l.b16 %v3905
      %v4672 = vunpack.c.h.b16 %v3905
      %v4673 = vunpack.c.l.b16 %v3906
      %v4674 = vunpack.c.h.b16 %v3906
      %v4675 = vunpack.c.l.b16 %v3907
      %v4676 = vunpack.c.h.b16 %v3907
      %v4677 = vunpack.c.l.b16 %v3908
      %v4678 = vunpack.c.h.b16 %v3908
      %v4679 = vunpack.c.l.b16 %v3909
      %v4680 = vunpack.c.h.b16 %v3909
      %v4681 = vunpack.c.l.b16 %v3910
      %v4682 = vunpack.c.h.b16 %v3910
      %v4683 = vunpack.c.l.b16 %v3911
      %v4684 = vunpack.c.h.b16 %v3911
      %v4685 = vunpack.c.l.b16 %v3912
      %v4686 = vunpack.c.h.b16 %v3912
      %v4687 = vunpack.c.l.b16 %v3913
      %v4688 = vunpack.c.h.b16 %v3913
      %v4689 = vunpack.c.l.b16 %v3914
      %v4690 = vunpack.c.h.b16 %v3914
      %v4691 = vunpack.c.l.b16 %v3915
      %v4692 = vunpack.c.h.b16 %v3915
      %v4693 = vunpack.c.l.b16 %v3916
      %v4694 = vunpack.c.h.b16 %v3916
      %v4695 = vunpack.c.l.b16 %v3917
      %v4696 = vunpack.c.h.b16 %v3917
      %v4697 = vunpack.c.l.b16 %v3918
      %v4698 = vunpack.c.h.b16 %v3918
      %v4699 = vunpack.c.l.b16 %v3919
      %v4700 = vunpack.c.h.b16 %v3919
      %v4701 = vunpack.c.l.b16 %v3920
      %v4702 = vunpack.c.h.b16 %v3920
      %v4703 = vunpack.c.l.b16 %v3921
      %v4704 = vunpack.c.h.b16 %v3921
      %v4705 = vunpack.c.l.b16 %v3922
      %v4706 = vunpack.c.h.b16 %v3922
      %v4707 = vunpack.c.l.b16 %v3923
      %v4708 = vunpack.c.h.b16 %v3923
      %v4709 = vunpack.c.l.b16 %v3924
      %v4710 = vunpack.c.h.b16 %v3924
      %v4711 = vunpack.c.l.b16 %v3925
      %v4712 = vunpack.c.h.b16 %v3925
      %v4713 = vunpack.c.l.b16 %v3926
      %v4714 = vunpack.c.h.b16 %v3926
      %v4715 = vunpack.c.l.b16 %v3927
      %v4716 = vunpack.c.h.b16 %v3927
      %v4717 = vunpack.c.l.b16 %v3928
      %v4718 = vunpack.c.h.b16 %v3928
      %v4719 = vunpack.c.l.b16 %v3929
      %v4720 = vunpack.c.h.b16 %v3929
      %v4721 = vunpack.c.l.b16 %v3930
      %v4722 = vunpack.c.h.b16 %v3930
      %v4723 = vunpack.c.l.b16 %v3931
      %v4724 = vunpack.c.h.b16 %v3931
      %v4725 = vunpack.c.l.b16 %v3932
      %v4726 = vunpack.c.h.b16 %v3932
      %v4727 = vunpack.c.l.b16 %v3933
      %v4728 = vunpack.c.h.b16 %v3933
      %v4729 = vunpack.c.l.b16 %v3934
      %v4730 = vunpack.c.h.b16 %v3934
      %v4731 = vunpack.c.l.b16 %v3935
      %v4732 = vunpack.c.h.b16 %v3935
      %v4733 = vunpack.c.l.b16 %v3936
      %v4734 = vunpack.c.h.b16 %v3936
      %v4735 = vunpack.c.l.b16 %v3937
      %v4736 = vunpack.c.h.b16 %v3937
      %v4737 = vunpack.c.l.b16 %v3938
      %v4738 = vunpack.c.h.b16 %v3938
      %v4739 = vunpack.c.l.b16 %v3939
      %v4740 = vunpack.c.h.b16 %v3939
      %v4741 = vunpack.c.l.b16 %v3940
      %v4742 = vunpack.c.h.b16 %v3940
      %v4743 = vunpack.c.l.b16 %v3941
      %v4744 = vunpack.c.h.b16 %v3941
      %v4745 = vunpack.c.l.b16 %v3942
      %v4746 = vunpack.c.h.b16 %v3942
      %v4747 = vunpack.c.l.b16 %v3943
      %v4748 = vunpack.c.h.b16 %v3943
      %v4749 = vunpack.c.l.b16 %v3944
      %v4750 = vunpack.c.h.b16 %v3944
      %v4751 = vunpack.c.l.b16 %v3945
      %v4752 = vunpack.c.h.b16 %v3945
      %v4753 = vunpack.c.l.b16 %v3946
      %v4754 = vunpack.c.h.b16 %v3946
      %v4755 = vunpack.c.l.b16 %v3947
      %v4756 = vunpack.c.h.b16 %v3947
      %v4757 = vunpack.c.l.b16 %v3948
      %v4758 = vunpack.c.h.b16 %v3948
      %v4759 = vunpack.c.l.b16 %v3949
      %v4760 = vunpack.c.h.b16 %v3949
      %v4761 = vunpack.c.l.b16 %v3950
      %v4762 = vunpack.c.h.b16 %v3950
      %v4763 = vunpack.c.l.b16 %v3951
      %v4764 = vunpack.c.h.b16 %v3951
      %v4765 = vunpack.c.l.b16 %v3952
      %v4766 = vunpack.c.h.b16 %v3952
      %v4767 = vunpack.c.l.b16 %v3953
      %v4768 = vunpack.c.h.b16 %v3953
      %v4769 = vunpack.c.l.b16 %v3954
      %v4770 = vunpack.c.h.b16 %v3954
      %v4771 = vunpack.c.l.b16 %v3955
      %v4772 = vunpack.c.h.b16 %v3955
      %v4773 = vunpack.c.l.b16 %v3956
      %v4774 = vunpack.c.h.b16 %v3956
      %v4775 = vunpack.c.l.b16 %v3957
      %v4776 = vunpack.c.h.b16 %v3957
      %v4777 = vunpack.c.l.b16 %v3958
      %v4778 = vunpack.c.h.b16 %v3958
      %v4779 = vunpack.c.l.b16 %v3959
      %v4780 = vunpack.c.h.b16 %v3959
      %v4781 = vunpack.c.l.b16 %v3960
      %v4782 = vunpack.c.h.b16 %v3960
      %v4783 = vunpack.c.l.b16 %v3961
      %v4784 = vunpack.c.h.b16 %v3961
      %v4785 = vunpack.c.l.b16 %v3962
      %v4786 = vunpack.c.h.b16 %v3962
      %v4787 = vunpack.c.l.b16 %v3963
      %v4788 = vunpack.c.h.b16 %v3963
      %v4789 = vunpack.c.l.b16 %v3964
      %v4790 = vunpack.c.h.b16 %v3964
      %v4791 = vunpack.c.l.b16 %v3965
      %v4792 = vunpack.c.h.b16 %v3965
      %v4793 = vunpack.c.l.b16 %v3966
      %v4794 = vunpack.c.h.b16 %v3966
      %v4795 = vunpack.c.l.b16 %v3967
      %v4796 = vunpack.c.h.b16 %v3967
      %v4797 = vunpack.c.l.b16 %v3968
      %v4798 = vunpack.c.h.b16 %v3968
      %v4799 = vunpack.c.l.b16 %v3969
      %v4800 = vunpack.c.h.b16 %v3969
      %v4801 = vunpack.c.l.b16 %v3970
      %v4802 = vunpack.c.h.b16 %v3970
      %v4803 = vunpack.c.l.b16 %v3971
      %v4804 = vunpack.c.h.b16 %v3971
      %v4805 = vunpack.c.l.b16 %v3972
      %v4806 = vunpack.c.h.b16 %v3972
      %v4807 = vunpack.c.l.b16 %v3973
      %v4808 = vunpack.c.h.b16 %v3973
      %v4809 = vunpack.c.l.b16 %v3974
      %v4810 = vunpack.c.h.b16 %v3974
      %v4811 = vunpack.c.l.b16 %v3975
      %v4812 = vunpack.c.h.b16 %v3975
      %v4813 = vunpack.c.l.b16 %v3976
      %v4814 = vunpack.c.h.b16 %v3976
      %v4815 = vunpack.c.l.b16 %v3977
      %v4816 = vunpack.c.h.b16 %v3977
      %v4817 = vunpack.c.l.b16 %v3978
      %v4818 = vunpack.c.h.b16 %v3978
      %v4819 = vunpack.c.l.b16 %v3979
      %v4820 = vunpack.c.h.b16 %v3979
      %v4821 = vunpack.c.l.b16 %v3980
      %v4822 = vunpack.c.h.b16 %v3980
      %v4823 = vunpack.c.l.b16 %v3981
      %v4824 = vunpack.c.h.b16 %v3981
      %v4825 = vunpack.c.l.b16 %v3982
      %v4826 = vunpack.c.h.b16 %v3982
      %v4827 = vunpack.c.l.b16 %v3983
      %v4828 = vunpack.c.h.b16 %v3983
      %v4829 = vunpack.c.l.b16 %v3984
      %v4830 = vunpack.c.h.b16 %v3984
      %v4831 = vunpack.c.l.b16 %v3985
      %v4832 = vunpack.c.h.b16 %v3985
      %v4833 = vunpack.c.l.b16 %v3986
      %v4834 = vunpack.c.h.b16 %v3986
      %v4835 = vunpack.c.l.b16 %v3987
      %v4836 = vunpack.c.h.b16 %v3987
      %v4837 = vunpack.c.l.b16 %v3988
      %v4838 = vunpack.c.h.b16 %v3988
      %v4839 = vunpack.c.l.b16 %v3989
      %v4840 = vunpack.c.h.b16 %v3989
      %v4841 = vunpack.c.l.b16 %v3990
      %v4842 = vunpack.c.h.b16 %v3990
      %v4843 = vunpack.c.l.b16 %v3991
      %v4844 = vunpack.c.h.b16 %v3991
      %v4845 = vunpack.c.l.b16 %v3992
      %v4846 = vunpack.c.h.b16 %v3992
      %v4847 = vunpack.c.l.b16 %v3993
      %v4848 = vunpack.c.h.b16 %v3993
      %v4849 = vunpack.c.l.b16 %v3994
      %v4850 = vunpack.c.h.b16 %v3994
      %v4851 = vunpack.c.l.b16 %v3995
      %v4852 = vunpack.c.h.b16 %v3995
      %v4853 = vunpack.c.l.b16 %v3996
      %v4854 = vunpack.c.h.b16 %v3996
      %v4855 = vunpack.c.l.b16 %v3997
      %v4856 = vunpack.c.h.b16 %v3997
      %v4857 = vunpack.c.l.b16 %v3998
      %v4858 = vunpack.c.h.b16 %v3998
      %v4859 = vunpack.c.l.b16 %v3999
      %v4860 = vunpack.c.h.b16 %v3999
      %v4861 = vunpack.c.l.b16 %v4000
      %v4862 = vunpack.c.h.b16 %v4000
      %v4863 = vunpack.c.l.b16 %v4001
      %v4864 = vunpack.c.h.b16 %v4001
      %v4865 = vunpack.c.l.b16 %v4002
      %v4866 = vunpack.c.h.b16 %v4002
      %v4867 = vpack.c.b16 %v4293, %v4291
      %v4868 = vpack.c.b16 %v4294, %v4292
      %v4869 = vpack.c.b16 %v4297, %v4295
      %v4870 = vpack.c.b16 %v4298, %v4296
      %v4871 = vpack.c.b16 %v4301, %v4299
      %v4872 = vpack.c.b16 %v4302, %v4300
      %v4873 = vpack.c.b16 %v4305, %v4303
      %v4874 = vpack.c.b16 %v4306, %v4304
      %v4875 = vpack.c.b16 %v4309, %v4307
      %v4876 = vpack.c.b16 %v4310, %v4308
      %v4877 = vpack.c.b16 %v4313, %v4311
      %v4878 = vpack.c.b16 %v4314, %v4312
      %v4879 = vpack.c.b16 %v4317, %v4315
      %v4880 = vpack.c.b16 %v4318, %v4316
      %v4881 = vpack.c.b16 %v4321, %v4319
      %v4882 = vpack.c.b16 %v4322, %v4320
      %v4883 = vpack.c.b16 %v4325, %v4323
      %v4884 = vpack.c.b16 %v4326, %v4324
      %v4885 = vpack.c.b16 %v4329, %v4327
      %v4886 = vpack.c.b16 %v4330, %v4328
      %v4887 = vpack.c.b16 %v4333, %v4331
      %v4888 = vpack.c.b16 %v4334, %v4332
      %v4889 = vpack.c.b16 %v4337, %v4335
      %v4890 = vpack.c.b16 %v4338, %v4336
      %v4891 = vpack.c.b16 %v4341, %v4339
      %v4892 = vpack.c.b16 %v4342, %v4340
      %v4893 = vpack.c.b16 %v4345, %v4343
      %v4894 = vpack.c.b16 %v4346, %v4344
      %v4895 = vpack.c.b16 %v4349, %v4347
      %v4896 = vpack.c.b16 %v4350, %v4348
      %v4897 = vpack.c.b16 %v4353, %v4351
      %v4898 = vpack.c.b16 %v4354, %v4352
      %v4899 = vpack.c.b16 %v4357, %v4355
      %v4900 = vpack.c.b16 %v4358, %v4356
      %v4901 = vpack.c.b16 %v4361, %v4359
      %v4902 = vpack.c.b16 %v4362, %v4360
      %v4903 = vpack.c.b16 %v4365, %v4363
      %v4904 = vpack.c.b16 %v4366, %v4364
      %v4905 = vpack.c.b16 %v4369, %v4367
      %v4906 = vpack.c.b16 %v4370, %v4368
      %v4907 = vpack.c.b16 %v4373, %v4371
      %v4908 = vpack.c.b16 %v4374, %v4372
      %v4909 = vpack.c.b16 %v4377, %v4375
      %v4910 = vpack.c.b16 %v4378, %v4376
      %v4911 = vpack.c.b16 %v4381, %v4379
      %v4912 = vpack.c.b16 %v4382, %v4380
      %v4913 = vpack.c.b16 %v4385, %v4383
      %v4914 = vpack.c.b16 %v4386, %v4384
      %v4915 = vpack.c.b16 %v4389, %v4387
      %v4916 = vpack.c.b16 %v4390, %v4388
      %v4917 = vpack.c.b16 %v4393, %v4391
      %v4918 = vpack.c.b16 %v4394, %v4392
      %v4919 = vpack.c.b16 %v4397, %v4395
      %v4920 = vpack.c.b16 %v4398, %v4396
      %v4921 = vpack.c.b16 %v4401, %v4399
      %v4922 = vpack.c.b16 %v4402, %v4400
      %v4923 = vpack.c.b16 %v4405, %v4403
      %v4924 = vpack.c.b16 %v4406, %v4404
      %v4925 = vpack.c.b16 %v4409, %v4407
      %v4926 = vpack.c.b16 %v4410, %v4408
      %v4927 = vpack.c.b16 %v4413, %v4411
      %v4928 = vpack.c.b16 %v4414, %v4412
      %v4929 = vpack.c.b16 %v4417, %v4415
      %v4930 = vpack.c.b16 %v4418, %v4416
      %v4931 = vpack.c.b16 %v4421, %v4419
      %v4932 = vpack.c.b16 %v4422, %v4420
      %v4933 = vpack.c.b16 %v4425, %v4423
      %v4934 = vpack.c.b16 %v4426, %v4424
      %v4935 = vpack.c.b16 %v4429, %v4427
      %v4936 = vpack.c.b16 %v4430, %v4428
      %v4937 = vpack.c.b16 %v4433, %v4431
      %v4938 = vpack.c.b16 %v4434, %v4432
      %v4939 = vpack.c.b16 %v4437, %v4435
      %v4940 = vpack.c.b16 %v4438, %v4436
      %v4941 = vpack.c.b16 %v4441, %v4439
      %v4942 = vpack.c.b16 %v4442, %v4440
      %v4943 = vpack.c.b16 %v4445, %v4443
      %v4944 = vpack.c.b16 %v4446, %v4444
      %v4945 = vpack.c.b16 %v4449, %v4447
      %v4946 = vpack.c.b16 %v4450, %v4448
      %v4947 = vpack.c.b16 %v4453, %v4451
      %v4948 = vpack.c.b16 %v4454, %v4452
      %v4949 = vpack.c.b16 %v4457, %v4455
      %v4950 = vpack.c.b16 %v4458, %v4456
      %v4951 = vpack.c.b16 %v4461, %v4459
      %v4952 = vpack.c.b16 %v4462, %v4460
      %v4953 = vpack.c.b16 %v4465, %v4463
      %v4954 = vpack.c.b16 %v4466, %v4464
      %v4955 = vpack.c.b16 %v4469, %v4467
      %v4956 = vpack.c.b16 %v4470, %v4468
      %v4957 = vpack.c.b16 %v4473, %v4471
      %v4958 = vpack.c.b16 %v4474, %v4472
      %v4959 = vpack.c.b16 %v4477, %v4475
      %v4960 = vpack.c.b16 %v4478, %v4476
      %v4961 = vpack.c.b16 %v4481, %v4479
      %v4962 = vpack.c.b16 %v4482, %v4480
      %v4963 = vpack.c.b16 %v4485, %v4483
      %v4964 = vpack.c.b16 %v4486, %v4484
      %v4965 = vpack.c.b16 %v4489, %v4487
      %v4966 = vpack.c.b16 %v4490, %v4488
      %v4967 = vpack.c.b16 %v4493, %v4491
      %v4968 = vpack.c.b16 %v4494, %v4492
      %v4969 = vpack.c.b16 %v4497, %v4495
      %v4970 = vpack.c.b16 %v4498, %v4496
      %v4971 = vpack.c.b16 %v4501, %v4499
      %v4972 = vpack.c.b16 %v4502, %v4500
      %v4973 = vpack.c.b16 %v4505, %v4503
      %v4974 = vpack.c.b16 %v4506, %v4504
      %v4975 = vpack.c.b16 %v4509, %v4507
      %v4976 = vpack.c.b16 %v4510, %v4508
      %v4977 = vpack.c.b16 %v4513, %v4511
      %v4978 = vpack.c.b16 %v4514, %v4512
      %v4979 = vpack.c.b16 %v4517, %v4515
      %v4980 = vpack.c.b16 %v4518, %v4516
      %v4981 = vpack.c.b16 %v4521, %v4519
      %v4982 = vpack.c.b16 %v4522, %v4520
      %v4983 = vpack.c.b16 %v4525, %v4523
      %v4984 = vpack.c.b16 %v4526, %v4524
      %v4985 = vpack.c.b16 %v4529, %v4527
      %v4986 = vpack.c.b16 %v4530, %v4528
      %v4987 = vpack.c.b16 %v4533, %v4531
      %v4988 = vpack.c.b16 %v4534, %v4532
      %v4989 = vpack.c.b16 %v4537, %v4535
      %v4990 = vpack.c.b16 %v4538, %v4536
      %v4991 = vpack.c.b16 %v4541, %v4539
      %v4992 = vpack.c.b16 %v4542, %v4540
      %v4993 = vpack.c.b16 %v4545, %v4543
      %v4994 = vpack.c.b16 %v4546, %v4544
      %v4995 = vpack.c.b16 %v4549, %v4547
      %v4996 = vpack.c.b16 %v4550, %v4548
      %v4997 = vpack.c.b16 %v4553, %v4551
      %v4998 = vpack.c.b16 %v4554, %v4552
      %v4999 = vpack.c.b16 %v4557, %v4555
      %v5000 = vpack.c.b16 %v4558, %v4556
      %v5001 = vpack.c.b16 %v4561, %v4559
      %v5002 = vpack.c.b16 %v4562, %v4560
      %v5003 = vpack.c.b16 %v4565, %v4563
      %v5004 = vpack.c.b16 %v4566, %v4564
      %v5005 = vpack.c.b16 %v4569, %v4567
      %v5006 = vpack.c.b16 %v4570, %v4568
      %v5007 = vpack.c.b16 %v4573, %v4571
      %v5008 = vpack.c.b16 %v4574, %v4572
      %v5009 = vpack.c.b16 %v4577, %v4575
      %v5010 = vpack.c.b16 %v4578, %v4576
      %v5011 = vpack.c.b16 %v4581, %v4579
      %v5012 = vpack.c.b16 %v4582, %v4580
      %v5013 = vpack.c.b16 %v4585, %v4583
      %v5014 = vpack.c.b16 %v4586, %v4584
      %v5015 = vpack.c.b16 %v4589, %v4587
      %v5016 = vpack.c.b16 %v4590, %v4588
      %v5017 = vpack.c.b16 %v4593, %v4591
      %v5018 = vpack.c.b16 %v4594, %v4592
      %v5019 = vpack.c.b16 %v4597, %v4595
      %v5020 = vpack.c.b16 %v4598, %v4596
      %v5021 = vpack.c.b16 %v4601, %v4599
      %v5022 = vpack.c.b16 %v4602, %v4600
      %v5023 = vpack.c.b16 %v4605, %v4603
      %v5024 = vpack.c.b16 %v4606, %v4604
      %v5025 = vpack.c.b16 %v4609, %v4607
      %v5026 = vpack.c.b16 %v4610, %v4608
      %v5027 = vpack.c.b16 %v4613, %v4611
      %v5028 = vpack.c.b16 %v4614, %v4612
      %v5029 = vpack.c.b16 %v4617, %v4615
      %v5030 = vpack.c.b16 %v4618, %v4616
      %v5031 = vpack.c.b16 %v4621, %v4619
      %v5032 = vpack.c.b16 %v4622, %v4620
      %v5033 = vpack.c.b16 %v4625, %v4623
      %v5034 = vpack.c.b16 %v4626, %v4624
      %v5035 = vpack.c.b16 %v4629, %v4627
      %v5036 = vpack.c.b16 %v4630, %v4628
      %v5037 = vpack.c.b16 %v4633, %v4631
      %v5038 = vpack.c.b16 %v4634, %v4632
      %v5039 = vpack.c.b16 %v4637, %v4635
      %v5040 = vpack.c.b16 %v4638, %v4636
      %v5041 = vpack.c.b16 %v4641, %v4639
      %v5042 = vpack.c.b16 %v4642, %v4640
      %v5043 = vpack.c.b16 %v4645, %v4643
      %v5044 = vpack.c.b16 %v4646, %v4644
      %v5045 = vpack.c.b16 %v4649, %v4647
      %v5046 = vpack.c.b16 %v4650, %v4648
      %v5047 = vpack.c.b16 %v4653, %v4651
      %v5048 = vpack.c.b16 %v4654, %v4652
      %v5049 = vpack.c.b16 %v4657, %v4655
      %v5050 = vpack.c.b16 %v4658, %v4656
      %v5051 = vpack.c.b16 %v4661, %v4659
      %v5052 = vpack.c.b16 %v4662, %v4660
      %v5053 = vpack.c.b16 %v4665, %v4663
      %v5054 = vpack.c.b16 %v4666, %v4664
      %v5055 = vpack.c.b16 %v4669, %v4667
      %v5056 = vpack.c.b16 %v4670, %v4668
      %v5057 = vpack.c.b16 %v4673, %v4671
      %v5058 = vpack.c.b16 %v4674, %v4672
      %v5059 = vpack.c.b16 %v4677, %v4675
      %v5060 = vpack.c.b16 %v4678, %v4676
      %v5061 = vpack.c.b16 %v4681, %v4679
      %v5062 = vpack.c.b16 %v4682, %v4680
      %v5063 = vpack.c.b16 %v4685, %v4683
      %v5064 = vpack.c.b16 %v4686, %v4684
      %v5065 = vpack.c.b16 %v4689, %v4687
      %v5066 = vpack.c.b16 %v4690, %v4688
      %v5067 = vpack.c.b16 %v4693, %v4691
      %v5068 = vpack.c.b16 %v4694, %v4692
      %v5069 = vpack.c.b16 %v4697, %v4695
      %v5070 = vpack.c.b16 %v4698, %v4696
      %v5071 = vpack.c.b16 %v4701, %v4699
      %v5072 = vpack.c.b16 %v4702, %v4700
      %v5073 = vpack.c.b16 %v4705, %v4703
      %v5074 = vpack.c.b16 %v4706, %v4704
      %v5075 = vpack.c.b16 %v4709, %v4707
      %v5076 = vpack.c.b16 %v4710, %v4708
      %v5077 = vpack.c.b16 %v4713, %v4711
      %v5078 = vpack.c.b16 %v4714, %v4712
      %v5079 = vpack.c.b16 %v4717, %v4715
      %v5080 = vpack.c.b16 %v4718, %v4716
      %v5081 = vpack.c.b16 %v4721, %v4719
      %v5082 = vpack.c.b16 %v4722, %v4720
      %v5083 = vpack.c.b16 %v4725, %v4723
      %v5084 = vpack.c.b16 %v4726, %v4724
      %v5085 = vpack.c.b16 %v4729, %v4727
      %v5086 = vpack.c.b16 %v4730, %v4728
      %v5087 = vpack.c.b16 %v4733, %v4731
      %v5088 = vpack.c.b16 %v4734, %v4732
      %v5089 = vpack.c.b16 %v4737, %v4735
      %v5090 = vpack.c.b16 %v4738, %v4736
      %v5091 = vpack.c.b16 %v4741, %v4739
      %v5092 = vpack.c.b16 %v4742, %v4740
      %v5093 = vpack.c.b16 %v4745, %v4743
      %v5094 = vpack.c.b16 %v4746, %v4744
      %v5095 = vpack.c.b16 %v4749, %v4747
      %v5096 = vpack.c.b16 %v4750, %v4748
      %v5097 = vpack.c.b16 %v4753, %v4751
      %v5098 = vpack.c.b16 %v4754, %v4752
      %v5099 = vpack.c.b16 %v4757, %v4755
      %v5100 = vpack.c.b16 %v4758, %v4756
      %v5101 = vpack.c.b16 %v4761, %v4759
      %v5102 = vpack.c.b16 %v4762, %v4760
      %v5103 = vpack.c.b16 %v4765, %v4763
      %v5104 = vpack.c.b16 %v4766, %v4764
      %v5105 = vpack.c.b16 %v4769, %v4767
      %v5106 = vpack.c.b16 %v4770, %v4768
      %v5107 = vpack.c.b16 %v4773, %v4771
      %v5108 = vpack.c.b16 %v4774, %v4772
      %v5109 = vpack.c.b16 %v4777, %v4775
      %v5110 = vpack.c.b16 %v4778, %v4776
      %v5111 = vpack.c.b16 %v4781, %v4779
      %v5112 = vpack.c.b16 %v4782, %v4780
      %v5113 = vpack.c.b16 %v4785, %v4783
      %v5114 = vpack.c.b16 %v4786, %v4784
      %v5115 = vpack.c.b16 %v4789, %v4787
      %v5116 = vpack.c.b16 %v4790, %v4788
      %v5117 = vpack.c.b16 %v4793, %v4791
      %v5118 = vpack.c.b16 %v4794, %v4792
      %v5119 = vpack.c.b16 %v4797, %v4795
      %v5120 = vpack.c.b16 %v4798, %v4796
      %v5121 = vpack.c.b16 %v4801, %v4799
      %v5122 = vpack.c.b16 %v4802, %v4800
      %v5123 = vpack.c.b16 %v4805, %v4803
      %v5124 = vpack.c.b16 %v4806, %v4804
      %v5125 = vpack.c.b16 %v4809, %v4807
      %v5126 = vpack.c.b16 %v4810, %v4808
      %v5127 = vpack.c.b16 %v4813, %v4811
      %v5128 = vpack.c.b16 %v4814, %v4812
      %v5129 = vpack.c.b16 %v4817, %v4815
      %v5130 = vpack.c.b16 %v4818, %v4816
      %v5131 = vpack.c.b16 %v4821, %v4819
      %v5132 = vpack.c.b16 %v4822, %v4820
      %v5133 = vpack.c.b16 %v4825, %v4823
      %v5134 = vpack.c.b16 %v4826, %v4824
      %v5135 = vpack.c.b16 %v4829, %v4827
      %v5136 = vpack.c.b16 %v4830, %v4828
      %v5137 = vpack.c.b16 %v4833, %v4831
      %v5138 = vpack.c.b16 %v4834, %v4832
      %v5139 = vpack.c.b16 %v4837, %v4835
      %v5140 = vpack.c.b16 %v4838, %v4836
      %v5141 = vpack.c.b16 %v4841, %v4839
      %v5142 = vpack.c.b16 %v4842, %v4840
      %v5143 = vpack.c.b16 %v4845, %v4843
      %v5144 = vpack.c.b16 %v4846, %v4844
      %v5145 = vpack.c.b16 %v4849, %v4847
      %v5146 = vpack.c.b16 %v4850, %v4848
      %v5147 = vpack.c.b16 %v4853, %v4851
      %v5148 = vpack.c.b16 %v4854, %v4852
      %v5149 = vpack.c.b16 %v4857, %v4855
      %v5150 = vpack.c.b16 %v4858, %v4856
      %v5151 = vpack.c.b16 %v4861, %v4859
      %v5152 = vpack.c.b16 %v4862, %v4860
      %v5153 = vpack.c.b16 %v4865, %v4863
      %v5154 = vpack.c.b16 %v4866, %v4864
      %5443 = vmatprep.subr.bf16.mxu0 %v4868
      %5444 = vmatpush1.bf16.msra.mxu0 %v4867
      %5445 = vmatprep.subr.bf16.mxu0 %v4870
      %5446 = vmatpush1.bf16.msra.mxu0 %v4869
      %5447 = vmatprep.subr.bf16.mxu0 %v4872
      %5448 = vmatpush1.bf16.msra.mxu0 %v4871
      %5449 = vmatprep.subr.bf16.mxu0 %v4874
      %5450 = vmatpush1.bf16.msra.mxu0 %v4873
      %5451 = vmatprep.subr.bf16.mxu0 %v4876
      %5452 = vmatpush1.bf16.msra.mxu0 %v4875
      %5453 = vmatprep.subr.bf16.mxu0 %v4878
      %5454 = vmatpush1.bf16.msra.mxu0 %v4877
      %5455 = vmatprep.subr.bf16.mxu0 %v4880
      %5456 = vmatpush1.bf16.msra.mxu0 %v4879
      %5457 = vmatprep.subr.bf16.mxu0 %v4882
      %5458 = vmatpush1.bf16.msra.mxu0 %v4881
      %5459 = vmatprep.subr.bf16.mxu0 %v4884
      %5460 = vmatpush1.bf16.msra.mxu0 %v4883
      %5461 = vmatprep.subr.bf16.mxu0 %v4886
      %5462 = vmatpush1.bf16.msra.mxu0 %v4885
      %5463 = vmatprep.subr.bf16.mxu0 %v4888
      %5464 = vmatpush1.bf16.msra.mxu0 %v4887
      %5465 = vmatprep.subr.bf16.mxu0 %v4890
      %5466 = vmatpush1.bf16.msra.mxu0 %v4889
      %5467 = vmatprep.subr.bf16.mxu0 %v4892
      %5468 = vmatpush1.bf16.msra.mxu0 %v4891
      %5469 = vmatprep.subr.bf16.mxu0 %v4894
      %5470 = vmatpush1.bf16.msra.mxu0 %v4893
      %5471 = vmatprep.subr.bf16.mxu0 %v4896
      %5472 = vmatpush1.bf16.msra.mxu0 %v4895
      %5473 = vmatprep.subr.bf16.mxu0 %v4898
      %5474 = vmatpush1.bf16.msra.mxu0 %v4897
      %5475 = vmatprep.mubr.bf16.mxu0 %v3680
      %5476 = vmatmul.mubr.bf16.gmra.mrb[0].mxu0 %v3679
      %v5477 = vpop.f32.mrb[0].mxu0
      %v5478 = vadd.f32 0.0, %v5477
      %v5479 = vpop.f32.mrb[0].mxu0
      %v5480 = vadd.f32 0.0, %v5479
      %v5481 = vpop.f32.mrb[0].mxu0
      %v5482 = vadd.f32 0.0, %v5481
      %v5483 = vpop.f32.mrb[0].mxu0
      %v5484 = vadd.f32 0.0, %v5483
      %5485 = vmatprep.mubr.bf16.mxu0 %v3698
      %5486 = vmatmul.mubr.bf16.gmra.mrb[0].mxu0 %v3697
      %v5487 = vpop.f32.mrb[0].mxu0
      %v5488 = vadd.f32 0.0, %v5487
      %v5489 = vpop.f32.mrb[0].mxu0
      %v5490 = vadd.f32 0.0, %v5489
      %v5491 = vpop.f32.mrb[0].mxu0
      %v5492 = vadd.f32 0.0, %v5491
      %v5493 = vpop.f32.mrb[0].mxu0
      %v5494 = vadd.f32 0.0, %v5493
      %5495 = vdwg.mxu0
      %5496 = vmatprep.subr.bf16.mxu0 %v4900
      %5497 = vmatpush1.bf16.msra.mxu0 %v4899
      %5498 = vmatprep.subr.bf16.mxu0 %v4902
      %5499 = vmatpush1.bf16.msra.mxu0 %v4901
      %5500 = vmatprep.subr.bf16.mxu0 %v4904
      %5501 = vmatpush1.bf16.msra.mxu0 %v4903
      %5502 = vmatprep.subr.bf16.mxu0 %v4906
      %5503 = vmatpush1.bf16.msra.mxu0 %v4905
      %5504 = vmatprep.subr.bf16.mxu0 %v4908
      %5505 = vmatpush1.bf16.msra.mxu0 %v4907
      %5506 = vmatprep.subr.bf16.mxu0 %v4910
      %5507 = vmatpush1.bf16.msra.mxu0 %v4909
      %5508 = vmatprep.subr.bf16.mxu0 %v4912
      %5509 = vmatpush1.bf16.msra.mxu0 %v4911
      %5510 = vmatprep.subr.bf16.mxu0 %v4914
      %5511 = vmatpush1.bf16.msra.mxu0 %v4913
      %5512 = vmatprep.subr.bf16.mxu0 %v4916
      %5513 = vmatpush1.bf16.msra.mxu0 %v4915
      %5514 = vmatprep.subr.bf16.mxu0 %v4918
      %5515 = vmatpush1.bf16.msra.mxu0 %v4917
      %5516 = vmatprep.subr.bf16.mxu0 %v4920
      %5517 = vmatpush1.bf16.msra.mxu0 %v4919
      %5518 = vmatprep.subr.bf16.mxu0 %v4922
      %5519 = vmatpush1.bf16.msra.mxu0 %v4921
      %5520 = vmatprep.subr.bf16.mxu0 %v4924
      %5521 = vmatpush1.bf16.msra.mxu0 %v4923
      %5522 = vmatprep.subr.bf16.mxu0 %v4926
      %5523 = vmatpush1.bf16.msra.mxu0 %v4925
      %5524 = vmatprep.subr.bf16.mxu0 %v4928
      %5525 = vmatpush1.bf16.msra.mxu0 %v4927
      %5526 = vmatprep.subr.bf16.mxu0 %v4930
      %5527 = vmatpush1.bf16.msra.mxu0 %v4929
      %5528 = vmatprep.mubr.bf16.mxu0 %v3682
      %5529 = vmatmul.mubr.bf16.gmra.mrb[0].mxu0 %v3681
      %v5530 = vpop.f32.mrb[0].mxu0
      %v5531 = vadd.f32 %v5478, %v5530
      %v5532 = vpop.f32.mrb[0].mxu0
      %v5533 = vadd.f32 %v5480, %v5532
      %v5534 = vpop.f32.mrb[0].mxu0
      %v5535 = vadd.f32 %v5482, %v5534
      %v5536 = vpop.f32.mrb[0].mxu0
      %v5537 = vadd.f32 %v5484, %v5536
      %5538 = vmatprep.mubr.bf16.mxu0 %v3700
      %5539 = vmatmul.mubr.bf16.gmra.mrb[0].mxu0 %v3699
      %v5540 = vpop.f32.mrb[0].mxu0
      %v5541 = vadd.f32 %v5488, %v5540
      %v5542 = vpop.f32.mrb[0].mxu0
      %v5543 = vadd.f32 %v5490, %v5542
      %v5544 = vpop.f32.mrb[0].mxu0
      %v5545 = vadd.f32 %v5492, %v5544
      %v5546 = vpop.f32.mrb[0].mxu0
      %v5547 = vadd.f32 %v5494, %v5546
      %5548 = vdwg.mxu0
      %5549 = vmatprep.subr.bf16.mxu0 %v4932
      %5550 = vmatpush1.bf16.msra.mxu0 %v4931
      %5551 = vmatprep.subr.bf16.mxu0 %v4934
      %5552 = vmatpush1.bf16.msra.mxu0 %v4933
      %5553 = vmatprep.subr.bf16.mxu0 %v4936
      %5554 = vmatpush1.bf16.msra.mxu0 %v4935
      %5555 = vmatprep.subr.bf16.mxu0 %v4938
      %5556 = vmatpush1.bf16.msra.mxu0 %v4937
      %5557 = vmatprep.subr.bf16.mxu0 %v4940
      %5558 = vmatpush1.bf16.msra.mxu0 %v4939
      %5559 = vmatprep.subr.bf16.mxu0 %v4942
      %5560 = vmatpush1.bf16.msra.mxu0 %v4941
      %5561 = vmatprep.subr.bf16.mxu0 %v4944
      %5562 = vmatpush1.bf16.msra.mxu0 %v4943
      %5563 = vmatprep.subr.bf16.mxu0 %v4946
      %5564 = vmatpush1.bf16.msra.mxu0 %v4945
      %5565 = vmatprep.subr.bf16.mxu0 %v4948
      %5566 = vmatpush1.bf16.msra.mxu0 %v4947
      %5567 = vmatprep.subr.bf16.mxu0 %v4950
      %5568 = vmatpush1.bf16.msra.mxu0 %v4949
      %5569 = vmatprep.subr.bf16.mxu0 %v4952
      %5570 = vmatpush1.bf16.msra.mxu0 %v4951
      %5571 = vmatprep.subr.bf16.mxu0 %v4954
      %5572 = vmatpush1.bf16.msra.mxu0 %v4953
      %5573 = vmatprep.subr.bf16.mxu0 %v4956
      %5574 = vmatpush1.bf16.msra.mxu0 %v4955
      %5575 = vmatprep.subr.bf16.mxu0 %v4958
      %5576 = vmatpush1.bf16.msra.mxu0 %v4957
      %5577 = vmatprep.subr.bf16.mxu0 %v4960
      %5578 = vmatpush1.bf16.msra.mxu0 %v4959
      %5579 = vmatprep.subr.bf16.mxu0 %v4962
      %5580 = vmatpush1.bf16.msra.mxu0 %v4961
      %5581 = vmatprep.mubr.bf16.mxu0 %v3684
      %5582 = vmatmul.mubr.bf16.gmra.mrb[0].mxu0 %v3683
      %v5583 = vpop.f32.mrb[0].mxu0
      %v5584 = vadd.f32 %v5531, %v5583
      %v5585 = vpop.f32.mrb[0].mxu0
      %v5586 = vadd.f32 %v5533, %v5585
      %v5587 = vpop.f32.mrb[0].mxu0
      %v5588 = vadd.f32 %v5535, %v5587
      %v5589 = vpop.f32.mrb[0].mxu0
      %v5590 = vadd.f32 %v5537, %v5589
      %5591 = vmatprep.mubr.bf16.mxu0 %v3702
      %5592 = vmatmul.mubr.bf16.gmra.mrb[0].mxu0 %v3701
      %v5593 = vpop.f32.mrb[0].mxu0
      %v5594 = vadd.f32 %v5541, %v5593
      %v5595 = vpop.f32.mrb[0].mxu0
      %v5596 = vadd.f32 %v5543, %v5595
      %v5597 = vpop.f32.mrb[0].mxu0
      %v5598 = vadd.f32 %v5545, %v5597
      %v5599 = vpop.f32.mrb[0].mxu0
      %v5600 = vadd.f32 %v5547, %v5599
      %5601 = vdwg.mxu0
      %5602 = vmatprep.subr.bf16.mxu0 %v4964
      %5603 = vmatpush1.bf16.msra.mxu0 %v4963
      %5604 = vmatprep.subr.bf16.mxu0 %v4966
      %5605 = vmatpush1.bf16.msra.mxu0 %v4965
      %5606 = vmatprep.subr.bf16.mxu0 %v4968
      %5607 = vmatpush1.bf16.msra.mxu0 %v4967
      %5608 = vmatprep.subr.bf16.mxu0 %v4970
      %5609 = vmatpush1.bf16.msra.mxu0 %v4969
      %5610 = vmatprep.subr.bf16.mxu0 %v4972
      %5611 = vmatpush1.bf16.msra.mxu0 %v4971
      %5612 = vmatprep.subr.bf16.mxu0 %v4974
      %5613 = vmatpush1.bf16.msra.mxu0 %v4973
      %5614 = vmatprep.subr.bf16.mxu0 %v4976
      %5615 = vmatpush1.bf16.msra.mxu0 %v4975
      %5616 = vmatprep.subr.bf16.mxu0 %v4978
      %5617 = vmatpush1.bf16.msra.mxu0 %v4977
      %5618 = vmatprep.subr.bf16.mxu0 %v4980
      %5619 = vmatpush1.bf16.msra.mxu0 %v4979
      %5620 = vmatprep.subr.bf16.mxu0 %v4982
      %5621 = vmatpush1.bf16.msra.mxu0 %v4981
      %5622 = vmatprep.subr.bf16.mxu0 %v4984
      %5623 = vmatpush1.bf16.msra.mxu0 %v4983
      %5624 = vmatprep.subr.bf16.mxu0 %v4986
      %5625 = vmatpush1.bf16.msra.mxu0 %v4985
      %5626 = vmatprep.subr.bf16.mxu0 %v4988
      %5627 = vmatpush1.bf16.msra.mxu0 %v4987
      %5628 = vmatprep.subr.bf16.mxu0 %v4990
      %5629 = vmatpush1.bf16.msra.mxu0 %v4989
      %5630 = vmatprep.subr.bf16.mxu0 %v4992
      %5631 = vmatpush1.bf16.msra.mxu0 %v4991
      %5632 = vmatprep.subr.bf16.mxu0 %v4994
      %5633 = vmatpush1.bf16.msra.mxu0 %v4993
      %5634 = vmatprep.mubr.bf16.mxu0 %v3686
      %5635 = vmatmul.mubr.bf16.gmra.mrb[0].mxu0 %v3685
      %v5636 = vpop.f32.mrb[0].mxu0
      %v5637 = vadd.f32 %v5584, %v5636
      %v5638 = vpop.f32.mrb[0].mxu0
      %v5639 = vadd.f32 %v5586, %v5638
      %v5640 = vpop.f32.mrb[0].mxu0
      %v5641 = vadd.f32 %v5588, %v5640
      %v5642 = vpop.f32.mrb[0].mxu0
      %v5643 = vadd.f32 %v5590, %v5642
      %5644 = vmatprep.mubr.bf16.mxu0 %v3704
      %5645 = vmatmul.mubr.bf16.gmra.mrb[0].mxu0 %v3703
      %v5646 = vpop.f32.mrb[0].mxu0
      %v5647 = vadd.f32 %v5594, %v5646
      %v5648 = vpop.f32.mrb[0].mxu0
      %v5649 = vadd.f32 %v5596, %v5648
      %v5650 = vpop.f32.mrb[0].mxu0
      %v5651 = vadd.f32 %v5598, %v5650
      %v5652 = vpop.f32.mrb[0].mxu0
      %v5653 = vadd.f32 %v5600, %v5652
      %5654 = vdwg.mxu0
      %5655 = vmatprep.subr.bf16.mxu0 %v4996
      %5656 = vmatpush1.bf16.msra.mxu0 %v4995
      %5657 = vmatprep.subr.bf16.mxu0 %v4998
      %5658 = vmatpush1.bf16.msra.mxu0 %v4997
      %5659 = vmatprep.subr.bf16.mxu0 %v5000
      %5660 = vmatpush1.bf16.msra.mxu0 %v4999
      %5661 = vmatprep.subr.bf16.mxu0 %v5002
      %5662 = vmatpush1.bf16.msra.mxu0 %v5001
      %5663 = vmatprep.subr.bf16.mxu0 %v5004
      %5664 = vmatpush1.bf16.msra.mxu0 %v5003
      %5665 = vmatprep.subr.bf16.mxu0 %v5006
      %5666 = vmatpush1.bf16.msra.mxu0 %v5005
      %5667 = vmatprep.subr.bf16.mxu0 %v5008
      %5668 = vmatpush1.bf16.msra.mxu0 %v5007
      %5669 = vmatprep.subr.bf16.mxu0 %v5010
      %5670 = vmatpush1.bf16.msra.mxu0 %v5009
      %5671 = vmatprep.subr.bf16.mxu0 %v5012
      %5672 = vmatpush1.bf16.msra.mxu0 %v5011
      %5673 = vmatprep.subr.bf16.mxu0 %v5014
      %5674 = vmatpush1.bf16.msra.mxu0 %v5013
      %5675 = vmatprep.subr.bf16.mxu0 %v5016
      %5676 = vmatpush1.bf16.msra.mxu0 %v5015
      %5677 = vmatprep.subr.bf16.mxu0 %v5018
      %5678 = vmatpush1.bf16.msra.mxu0 %v5017
      %5679 = vmatprep.subr.bf16.mxu0 %v5020
      %5680 = vmatpush1.bf16.msra.mxu0 %v5019
      %5681 = vmatprep.subr.bf16.mxu0 %v5022
      %5682 = vmatpush1.bf16.msra.mxu0 %v5021
      %5683 = vmatprep.subr.bf16.mxu0 %v5024
      %5684 = vmatpush1.bf16.msra.mxu0 %v5023
      %5685 = vmatprep.subr.bf16.mxu0 %v5026
      %5686 = vmatpush1.bf16.msra.mxu0 %v5025
      %5687 = vmatprep.mubr.bf16.mxu0 %v3688
      %5688 = vmatmul.mubr.bf16.gmra.mrb[0].mxu0 %v3687
      %v5689 = vpop.f32.mrb[0].mxu0
      %v5690 = vadd.f32 %v5637, %v5689
      %v5691 = vpop.f32.mrb[0].mxu0
      %v5692 = vadd.f32 %v5639, %v5691
      %v5693 = vpop.f32.mrb[0].mxu0
      %v5694 = vadd.f32 %v5641, %v5693
      %v5695 = vpop.f32.mrb[0].mxu0
      %v5696 = vadd.f32 %v5643, %v5695
      %5697 = vmatprep.mubr.bf16.mxu0 %v3706
      %5698 = vmatmul.mubr.bf16.gmra.mrb[0].mxu0 %v3705
      %v5699 = vpop.f32.mrb[0].mxu0
      %v5700 = vadd.f32 %v5647, %v5699
      %v5701 = vpop.f32.mrb[0].mxu0
      %v5702 = vadd.f32 %v5649, %v5701
      %v5703 = vpop.f32.mrb[0].mxu0
      %v5704 = vadd.f32 %v5651, %v5703
      %v5705 = vpop.f32.mrb[0].mxu0
      %v5706 = vadd.f32 %v5653, %v5705
      %5707 = vdwg.mxu0
      %5708 = vmatprep.subr.bf16.mxu0 %v5028
      %5709 = vmatpush1.bf16.msra.mxu0 %v5027
      %5710 = vmatprep.subr.bf16.mxu0 %v5030
      %5711 = vmatpush1.bf16.msra.mxu0 %v5029
      %5712 = vmatprep.subr.bf16.mxu0 %v5032
      %5713 = vmatpush1.bf16.msra.mxu0 %v5031
      %5714 = vmatprep.subr.bf16.mxu0 %v5034
      %5715 = vmatpush1.bf16.msra.mxu0 %v5033
      %5716 = vmatprep.subr.bf16.mxu0 %v5036
      %5717 = vmatpush1.bf16.msra.mxu0 %v5035
      %5718 = vmatprep.subr.bf16.mxu0 %v5038
      %5719 = vmatpush1.bf16.msra.mxu0 %v5037
      %5720 = vmatprep.subr.bf16.mxu0 %v5040
      %5721 = vmatpush1.bf16.msra.mxu0 %v5039
      %5722 = vmatprep.subr.bf16.mxu0 %v5042
      %5723 = vmatpush1.bf16.msra.mxu0 %v5041
      %5724 = vmatprep.subr.bf16.mxu0 %v5044
      %5725 = vmatpush1.bf16.msra.mxu0 %v5043
      %5726 = vmatprep.subr.bf16.mxu0 %v5046
      %5727 = vmatpush1.bf16.msra.mxu0 %v5045
      %5728 = vmatprep.subr.bf16.mxu0 %v5048
      %5729 = vmatpush1.bf16.msra.mxu0 %v5047
      %5730 = vmatprep.subr.bf16.mxu0 %v5050
      %5731 = vmatpush1.bf16.msra.mxu0 %v5049
      %5732 = vmatprep.subr.bf16.mxu0 %v5052
      %5733 = vmatpush1.bf16.msra.mxu0 %v5051
      %5734 = vmatprep.subr.bf16.mxu0 %v5054
      %5735 = vmatpush1.bf16.msra.mxu0 %v5053
      %5736 = vmatprep.subr.bf16.mxu0 %v5056
      %5737 = vmatpush1.bf16.msra.mxu0 %v5055
      %5738 = vmatprep.subr.bf16.mxu0 %v5058
      %5739 = vmatpush1.bf16.msra.mxu0 %v5057
      %5740 = vmatprep.mubr.bf16.mxu0 %v3690
      %5741 = vmatmul.mubr.bf16.gmra.mrb[0].mxu0 %v3689
      %v5742 = vpop.f32.mrb[0].mxu0
      %v5743 = vadd.f32 %v5690, %v5742
      %v5744 = vpop.f32.mrb[0].mxu0
      %v5745 = vadd.f32 %v5692, %v5744
      %v5746 = vpop.f32.mrb[0].mxu0
      %v5747 = vadd.f32 %v5694, %v5746
      %v5748 = vpop.f32.mrb[0].mxu0
      %v5749 = vadd.f32 %v5696, %v5748
      %5750 = vmatprep.mubr.bf16.mxu0 %v3708
      %5751 = vmatmul.mubr.bf16.gmra.mrb[0].mxu0 %v3707
      %v5752 = vpop.f32.mrb[0].mxu0
      %v5753 = vadd.f32 %v5700, %v5752
      %v5754 = vpop.f32.mrb[0].mxu0
      %v5755 = vadd.f32 %v5702, %v5754
      %v5756 = vpop.f32.mrb[0].mxu0
      %v5757 = vadd.f32 %v5704, %v5756
      %v5758 = vpop.f32.mrb[0].mxu0
      %v5759 = vadd.f32 %v5706, %v5758
      %5760 = vdwg.mxu0
      %5761 = vmatprep.subr.bf16.mxu0 %v5060
      %5762 = vmatpush1.bf16.msra.mxu0 %v5059
      %5763 = vmatprep.subr.bf16.mxu0 %v5062
      %5764 = vmatpush1.bf16.msra.mxu0 %v5061
      %5765 = vmatprep.subr.bf16.mxu0 %v5064
      %5766 = vmatpush1.bf16.msra.mxu0 %v5063
      %5767 = vmatprep.subr.bf16.mxu0 %v5066
      %5768 = vmatpush1.bf16.msra.mxu0 %v5065
      %5769 = vmatprep.subr.bf16.mxu0 %v5068
      %5770 = vmatpush1.bf16.msra.mxu0 %v5067
      %5771 = vmatprep.subr.bf16.mxu0 %v5070
      %5772 = vmatpush1.bf16.msra.mxu0 %v5069
      %5773 = vmatprep.subr.bf16.mxu0 %v5072
      %5774 = vmatpush1.bf16.msra.mxu0 %v5071
      %5775 = vmatprep.subr.bf16.mxu0 %v5074
      %5776 = vmatpush1.bf16.msra.mxu0 %v5073
      %5777 = vmatprep.subr.bf16.mxu0 %v5076
      %5778 = vmatpush1.bf16.msra.mxu0 %v5075
      %5779 = vmatprep.subr.bf16.mxu0 %v5078
      %5780 = vmatpush1.bf16.msra.mxu0 %v5077
      %5781 = vmatprep.subr.bf16.mxu0 %v5080
      %5782 = vmatpush1.bf16.msra.mxu0 %v5079
      %5783 = vmatprep.subr.bf16.mxu0 %v5082
      %5784 = vmatpush1.bf16.msra.mxu0 %v5081
      %5785 = vmatprep.subr.bf16.mxu0 %v5084
      %5786 = vmatpush1.bf16.msra.mxu0 %v5083
      %5787 = vmatprep.subr.bf16.mxu0 %v5086
      %5788 = vmatpush1.bf16.msra.mxu0 %v5085
      %5789 = vmatprep.subr.bf16.mxu0 %v5088
      %5790 = vmatpush1.bf16.msra.mxu0 %v5087
      %5791 = vmatprep.subr.bf16.mxu0 %v5090
      %5792 = vmatpush1.bf16.msra.mxu0 %v5089
      %5793 = vmatprep.mubr.bf16.mxu0 %v3692
      %5794 = vmatmul.mubr.bf16.gmra.mrb[0].mxu0 %v3691
      %v5795 = vpop.f32.mrb[0].mxu0
      %v5796 = vadd.f32 %v5743, %v5795
      %v5797 = vpop.f32.mrb[0].mxu0
      %v5798 = vadd.f32 %v5745, %v5797
      %v5799 = vpop.f32.mrb[0].mxu0
      %v5800 = vadd.f32 %v5747, %v5799
      %v5801 = vpop.f32.mrb[0].mxu0
      %v5802 = vadd.f32 %v5749, %v5801
      %5803 = vmatprep.mubr.bf16.mxu0 %v3710
      %5804 = vmatmul.mubr.bf16.gmra.mrb[0].mxu0 %v3709
      %v5805 = vpop.f32.mrb[0].mxu0
      %v5806 = vadd.f32 %v5753, %v5805
      %v5807 = vpop.f32.mrb[0].mxu0
      %v5808 = vadd.f32 %v5755, %v5807
      %v5809 = vpop.f32.mrb[0].mxu0
      %v5810 = vadd.f32 %v5757, %v5809
      %v5811 = vpop.f32.mrb[0].mxu0
      %v5812 = vadd.f32 %v5759, %v5811
      %5813 = vdwg.mxu0
      %5814 = vmatprep.subr.bf16.mxu0 %v5092
      %5815 = vmatpush1.bf16.msra.mxu0 %v5091
      %5816 = vmatprep.subr.bf16.mxu0 %v5094
      %5817 = vmatpush1.bf16.msra.mxu0 %v5093
      %5818 = vmatprep.subr.bf16.mxu0 %v5096
      %5819 = vmatpush1.bf16.msra.mxu0 %v5095
      %5820 = vmatprep.subr.bf16.mxu0 %v5098
      %5821 = vmatpush1.bf16.msra.mxu0 %v5097
      %5822 = vmatprep.subr.bf16.mxu0 %v5100
      %5823 = vmatpush1.bf16.msra.mxu0 %v5099
      %5824 = vmatprep.subr.bf16.mxu0 %v5102
      %5825 = vmatpush1.bf16.msra.mxu0 %v5101
      %5826 = vmatprep.subr.bf16.mxu0 %v5104
      %5827 = vmatpush1.bf16.msra.mxu0 %v5103
      %5828 = vmatprep.subr.bf16.mxu0 %v5106
      %5829 = vmatpush1.bf16.msra.mxu0 %v5105
      %5830 = vmatprep.subr.bf16.mxu0 %v5108
      %5831 = vmatpush1.bf16.msra.mxu0 %v5107
      %5832 = vmatprep.subr.bf16.mxu0 %v5110
      %5833 = vmatpush1.bf16.msra.mxu0 %v5109
      %5834 = vmatprep.subr.bf16.mxu0 %v5112
      %5835 = vmatpush1.bf16.msra.mxu0 %v5111
      %5836 = vmatprep.subr.bf16.mxu0 %v5114
      %5837 = vmatpush1.bf16.msra.mxu0 %v5113
      %5838 = vmatprep.subr.bf16.mxu0 %v5116
      %5839 = vmatpush1.bf16.msra.mxu0 %v5115
      %5840 = vmatprep.subr.bf16.mxu0 %v5118
      %5841 = vmatpush1.bf16.msra.mxu0 %v5117
      %5842 = vmatprep.subr.bf16.mxu0 %v5120
      %5843 = vmatpush1.bf16.msra.mxu0 %v5119
      %5844 = vmatprep.subr.bf16.mxu0 %v5122
      %5845 = vmatpush1.bf16.msra.mxu0 %v5121
      %5846 = vmatprep.mubr.bf16.mxu0 %v3694
      %5847 = vmatmul.mubr.bf16.gmra.mrb[0].mxu0 %v3693
      %v5848 = vpop.f32.mrb[0].mxu0
      %v5849 = vadd.f32 %v5796, %v5848
      %v5850 = vpop.f32.mrb[0].mxu0
      %v5851 = vadd.f32 %v5798, %v5850
      %v5852 = vpop.f32.mrb[0].mxu0
      %v5853 = vadd.f32 %v5800, %v5852
      %v5854 = vpop.f32.mrb[0].mxu0
      %v5855 = vadd.f32 %v5802, %v5854
      %5856 = vmatprep.mubr.bf16.mxu0 %v3712
      %5857 = vmatmul.mubr.bf16.gmra.mrb[0].mxu0 %v3711
      %v5858 = vpop.f32.mrb[0].mxu0
      %v5859 = vadd.f32 %v5806, %v5858
      %v5860 = vpop.f32.mrb[0].mxu0
      %v5861 = vadd.f32 %v5808, %v5860
      %v5862 = vpop.f32.mrb[0].mxu0
      %v5863 = vadd.f32 %v5810, %v5862
      %v5864 = vpop.f32.mrb[0].mxu0
      %v5865 = vadd.f32 %v5812, %v5864
      %5866 = vdwg.mxu0
      %5867 = vmatprep.subr.bf16.mxu0 %v5124
      %5868 = vmatpush1.bf16.msra.mxu0 %v5123
      %5869 = vmatprep.subr.bf16.mxu0 %v5126
      %5870 = vmatpush1.bf16.msra.mxu0 %v5125
      %5871 = vmatprep.subr.bf16.mxu0 %v5128
      %5872 = vmatpush1.bf16.msra.mxu0 %v5127
      %5873 = vmatprep.subr.bf16.mxu0 %v5130
      %5874 = vmatpush1.bf16.msra.mxu0 %v5129
      %5875 = vmatprep.subr.bf16.mxu0 %v5132
      %5876 = vmatpush1.bf16.msra.mxu0 %v5131
      %5877 = vmatprep.subr.bf16.mxu0 %v5134
      %5878 = vmatpush1.bf16.msra.mxu0 %v5133
      %5879 = vmatprep.subr.bf16.mxu0 %v5136
      %5880 = vmatpush1.bf16.msra.mxu0 %v5135
      %5881 = vmatprep.subr.bf16.mxu0 %v5138
      %5882 = vmatpush1.bf16.msra.mxu0 %v5137
      %5883 = vmatprep.subr.bf16.mxu0 %v5140
      %5884 = vmatpush1.bf16.msra.mxu0 %v5139
      %5885 = vmatprep.subr.bf16.mxu0 %v5142
      %5886 = vmatpush1.bf16.msra.mxu0 %v5141
      %5887 = vmatprep.subr.bf16.mxu0 %v5144
      %5888 = vmatpush1.bf16.msra.mxu0 %v5143
      %5889 = vmatprep.subr.bf16.mxu0 %v5146
      %5890 = vmatpush1.bf16.msra.mxu0 %v5145
      %5891 = vmatprep.subr.bf16.mxu0 %v5148
      %5892 = vmatpush1.bf16.msra.mxu0 %v5147
      %5893 = vmatprep.subr.bf16.mxu0 %v5150
      %5894 = vmatpush1.bf16.msra.mxu0 %v5149
      %5895 = vmatprep.subr.bf16.mxu0 %v5152
      %5896 = vmatpush1.bf16.msra.mxu0 %v5151
      %5897 = vmatprep.subr.bf16.mxu0 %v5154
      %5898 = vmatpush1.bf16.msra.mxu0 %v5153
      %5899 = vmatprep.mubr.bf16.mxu0 %v3696
      %5900 = vmatmul.mubr.bf16.gmra.mrb[0].mxu0 %v3695
      %v5901 = vpop.f32.mrb[0].mxu0
      %v5902 = vadd.f32 %v5849, %v5901
      %v5903 = vpop.f32.mrb[0].mxu0
      %v5904 = vadd.f32 %v5851, %v5903
      %v5905 = vpop.f32.mrb[0].mxu0
      %v5906 = vadd.f32 %v5853, %v5905
      %v5907 = vpop.f32.mrb[0].mxu0
      %v5908 = vadd.f32 %v5855, %v5907
      %5909 = vmatprep.mubr.bf16.mxu0 %v3714
      %5910 = vmatmul.mubr.bf16.gmra.mrb[0].mxu0 %v3713
      %v5911 = vpop.f32.mrb[0].mxu0
      %v5912 = vadd.f32 %v5859, %v5911
      %v5913 = vpop.f32.mrb[0].mxu0
      %v5914 = vadd.f32 %v5861, %v5913
      %v5915 = vpop.f32.mrb[0].mxu0
      %v5916 = vadd.f32 %v5863, %v5915
      %v5917 = vpop.f32.mrb[0].mxu0
      %v5918 = vadd.f32 %v5865, %v5917
      %5919 = vdwg.mxu0
      %v5920 = vadd.f32 %v3203, %v5902
      %v5921 = vadd.f32 %v3204, %v5904
      %v5922 = vadd.f32 %v3205, %v5906
      %v5923 = vadd.f32 %v3206, %v5908
      %v5924 = vadd.f32 %v3207, %v5912
      %v5925 = vadd.f32 %v3208, %v5914
      %v5926 = vadd.f32 %v3209, %v5916
      %v5927 = vadd.f32 %v3210, %v5918
      %v5928 = vld [vmem:[%s5] sm:$0x3]
      %v5930 = vlaneseq
      %v5931 = vshrl.u32 %v5930, 7
      %v5932 = vsub.s32 0, %v5931
      %v5933 = vrot.slane %v5928, %v5932
      %v5934 = vlaneseq
      %v5935 = vshrl.u32 %v5934, 7
      %v5936 = vsub.s32 1, %v5935
      %v5937 = vrot.slane %v5928, %v5936
      %v5940 = vadd.f32 %v5920, %v5933
      %v5941 = vadd.f32 %v5921, %v5937
      %v5942 = vadd.f32 %v5922, %v5933
      %v5943 = vadd.f32 %v5923, %v5937
      %v5944 = vadd.f32 %v5924, %v5933
      %v5945 = vadd.f32 %v5925, %v5937
      %v5946 = vadd.f32 %v5926, %v5933
      %v5947 = vadd.f32 %v5927, %v5937
      %5948 = vst [vmem:[%s278] sm:$0xff] %v5940
      %5949 = vst [vmem:[%s278 + $0x8] sm:$0xff] %v5941
      %5950 = vst [vmem:[%s278 + $0x10] sm:$0xff] %v5942
      %5951 = vst [vmem:[%s278 + $0x18] sm:$0xff] %v5943
      %5952 = vst [vmem:[%s278 + $0x20] sm:$0xff] %v5944
      %5953 = vst [vmem:[%s278 + $0x28] sm:$0xff] %v5945
      %5954 = vst [vmem:[%s278 + $0x30] sm:$0xff] %v5946
      %5955 = vst [vmem:[%s278 + $0x38] sm:$0xff] %v5947
      %p5956 = scmp.lt.s32.totalorder %s18, 1
      %s5957 = scalar_select %p5956, %s18, 1
      %s5958 = smul.addr %s5957, 8
      %s5959 = smul.addr %s5958, 8
      %s5960 = scalar_lea.vmem %s7, %s5959
      // Predicated region
      $region49: #{ve_conv_h_pallas.1} parent=47 // pred_check
        %p5961 = pneg %p188
      $region50: #{ve_conv_h_pallas.1} parent=47 // pred_check_branch
        %5963 = sbr.rel (%p5961) target = $region52
      $region51: #{ve_conv_h_pallas.1} parent=47 // pred_region
        _
      $region52: #{ve_conv_h_pallas.1} parent=47 // pred_fallthru
        _
    $region48: #{ve_conv_h_pallas.1} parent=5 // pred_fallthru
      _
    %p5964 = scmp.le.s32.totalorder 2, %s13
    // Predicated region
    $region53: #{ve_conv_h_pallas.1} parent=5 // pred_check
      %p5965 = pneg %p5964
    $region54: #{ve_conv_h_pallas.1} parent=5 // pred_check_branch
      %5967 = sbr.rel (%p5965) target = $region56
    $region55: #{ve_conv_h_pallas.1} parent=5 // pred_region
      %s5968 = ssub.s32 %s13, 2
      // Predicated region
      $region57: #{ve_conv_h_pallas.1} parent=55 // pred_check
        %p5969 = pneg %p194
      $region58: #{ve_conv_h_pallas.1} parent=55 // pred_check_branch
        %5971 = sbr.rel (%p5969) target = $region60
      $region59: #{ve_conv_h_pallas.1} parent=55 // pred_region
        %p5972 = scmp.lt.s32.totalorder %s19, 1
        %s5973 = scalar_select %p5972, %s19, 1
        %s5974 = smul.addr %s5973, 8
        %s5975 = smul.addr %s5974, 8
        %s5976 = scalar_lea.vmem %s7, %s5975
      $region60: #{ve_conv_h_pallas.1} parent=55 // pred_fallthru
        _
    $region56: #{ve_conv_h_pallas.1} parent=5 // pred_fallthru
      _
  $region6: #{ve_conv_h_pallas.1} parent=0 // loop_footer
    %s17 = sadd.s32 1, %s13
  $region7: #{ve_conv_h_pallas.1} parent=0 // loop_footer_branch
    %12 = sbr.rel target = $region3
  $region8: #{ve_conv_h_pallas.1} parent=0 // loop_exit
    _

</llo_original>
